<compile_context>
chip_gen: v5e
topology: v5e:2x2
jax: 0.10.0
libtpu: 0.0.40
codegen_flags: <defaults>
</compile_context>

<pallas_src>
import functools

import jax
import jax.numpy as jnp
from jax.experimental import pallas as pl
from jax.experimental.pallas import tpu as pltpu


def _up_kernel(x_ref, wk_ref, s_ref, o_ref, *, hblk):
    """Blocks:
       x_ref:  (1, Cin, hblk, W)   NCHW input rows
       wk_ref: (4, C, Cin)         conv weights regrouped by shuffle phase k = 2*i + j
       s_ref:  (2, W, 2W)          width-dilation matrices S_j[w, 2w+j] = 1
       o_ref:  (1, C, hblk, 4W)    output rows in flattened-NCHW form
    """
    s0 = s_ref[0]
    s1 = s_ref[1]
    w0 = wk_ref[0]
    w1 = wk_ref[1]
    w2 = wk_ref[2]
    w3 = wk_ref[3]

    for h in range(hblk):                                # static unroll
        xh = x_ref[0, :, h, :]                           # (Cin, W)

        # 1x1 conv for the four pixel-shuffle phases (k = 2*i + j).
        t0 = jnp.dot(w0, xh, preferred_element_type=jnp.float32)  # (C, W)
        t1 = jnp.dot(w1, xh, preferred_element_type=jnp.float32)
        t2 = jnp.dot(w2, xh, preferred_element_type=jnp.float32)
        t3 = jnp.dot(w3, xh, preferred_element_type=jnp.float32)

        # Width (j) interleave via dilation matmuls: R_i[c, 2w+j] = T_{2i+j}[c, w].
        r0 = (jnp.dot(t0, s0, preferred_element_type=jnp.float32)
              + jnp.dot(t1, s1, preferred_element_type=jnp.float32))   # (C, 2W)
        r1 = (jnp.dot(t2, s0, preferred_element_type=jnp.float32)
              + jnp.dot(t3, s1, preferred_element_type=jnp.float32))   # (C, 2W)

        # Row-parity (i) interleave == lane concat in the flattened NCHW layout.
        o_ref[0, :, h, :] = jnp.concatenate([r0, r1], axis=-1)          # (C, 4W)


def _pick_hblk(H, Cin, C, W, vmem_budget_bytes=4 << 20, max_unroll=64):
    """Largest row-tile that (a) divides H, (b) keeps double-buffered blocks
    well under the scoped VMEM limit on all generations (incl. v7x), and
    (c) bounds the static unroll length."""
    per_h = 4 * (Cin * max(W, 128) + C * max(4 * W, 128))  # f32 bytes/row, lane-padded
    cap = max(1, min(max_unroll, vmem_budget_bytes // (2 * per_h)))
    if H <= cap:
        return H
    best = 0
    d = 8
    while d <= cap:
        if H % d == 0:
            best = d
        d += 8
    return best if best > 0 else H


def up_forward(x_nchw, weight):
    """x_nchw: (N, Cin, H, W) f32.  weight: (2*Cin, Cin) f32 (1x1 conv, no bias).
    Returns PixelShuffle(2)(conv1x1(x)) of shape (N, Cin//2, 2H, 2W)."""
    N, Cin, H, W = x_nchw.shape
    Cout = weight.shape[0]
    assert weight.shape == (Cout, Cin)
    assert Cout % 4 == 0, "PixelShuffle(2) requires Cout % 4 == 0"
    C = Cout // 4

    hblk = _pick_hblk(H, Cin, C, W)
    assert H % hblk == 0
    n_ht = H // hblk
    # Note: W is kept whole per block; for very large images W could be tiled
    # the same way (the dilation matrices then shrink to (wblk, 2*wblk)).

    # Regroup conv weights by shuffle phase: wk[k, c, :] = weight[4*c + k, :].
    wk = jnp.transpose(weight.reshape(C, 4, Cin), (1, 0, 2)).astype(jnp.float32)

    # Width-dilation matrices: S[j, w, v] = 1 iff v == 2*w + j.
    rows = jax.lax.broadcasted_iota(jnp.int32, (W, 2 * W), 0)
    cols = jax.lax.broadcasted_iota(jnp.int32, (W, 2 * W), 1)
    s0 = (cols == 2 * rows).astype(jnp.float32)
    s1 = (cols == 2 * rows + 1).astype(jnp.float32)
    smat = jnp.stack([s0, s1], axis=0)

    kernel = functools.partial(_up_kernel, hblk=hblk)

    out4 = pl.pallas_call(
        kernel,
        out_shape=jax.ShapeDtypeStruct((N, C, H, 4 * W), jnp.float32),
        grid_spec=pltpu.PrefetchScalarGridSpec(
            num_scalar_prefetch=0,
            grid=(N, n_ht),
            in_specs=[
                pl.BlockSpec((1, Cin, hblk, W), lambda n, t: (n, 0, t, 0)),
                pl.BlockSpec((4, C, Cin), lambda n, t: (0, 0, 0)),
                pl.BlockSpec((2, W, 2 * W), lambda n, t: (0, 0, 0)),
            ],
            out_specs=pl.BlockSpec((1, C, hblk, 4 * W), lambda n, t: (n, 0, t, 0)),
        ),
        compiler_params=pltpu.CompilerParams(
            dimension_semantics=("parallel", "parallel")),
    )(x_nchw.astype(jnp.float32), wk, smat)

    # Free reshape: (N, C, H, 4W) and (N, C, 2H, 2W) share the same row-major layout.
    return out4.reshape(N, C, 2 * H, 2 * W)


if __name__ == "__main__":
    # Shapes consistent with Up(n_feat=4): N=2, Cin=4, Cout=8, H=W=16.
    N, n_feat, H, W = 2, 4, 16, 16
    Cin, Cout = n_feat, 2 * n_feat

    key = jax.random.PRNGKey(0)
    kx, kw = jax.random.split(key, 2)
    x = jax.random.normal(kx, (N, Cin, H, W), dtype=jnp.float32)

    # Conv2d-like deterministic init (bias=False in the module).
    bound = 1.0 / (Cin ** 0.5)
    weight = jax.random.uniform(kw, (Cout, Cin), jnp.float32, -bound, bound)

    out = up_forward(x, weight)
    out = jax.block_until_ready(out)

    # Pure-JAX reference: 1x1 conv (no bias) + PixelShuffle(2).
    y = jnp.einsum("nchw,oc->nohw", x, weight)
    C = Cout // 4
    ref = (y.reshape(N, C, 2, 2, H, W)
            .transpose(0, 1, 4, 2, 5, 3)
            .reshape(N, C, 2 * H, 2 * W))

    assert out.shape == ref.shape
    assert jnp.allclose(out, ref, atol=1e-5, rtol=1e-5), "mismatch vs reference"
    print("KERNEL_OK")
</pallas_src>

<mosaic_0001>
module attributes {stable_mosaic.version = 11 : i64} {
  func.func @_up_kernel(%arg0: i32, %arg1: i32, %arg2: memref<1x4x16x16xf32, #tpu.memory_space<vmem>>, %arg3: memref<4x2x4xf32, #tpu.memory_space<vmem>>, %arg4: memref<2x16x32xf32, #tpu.memory_space<vmem>>, %arg5: memref<1x2x16x64xf32, #tpu.memory_space<vmem>>) attributes {dimension_semantics = [#tpu.dimension_semantics<parallel>, #tpu.dimension_semantics<parallel>], iteration_bounds = array<i64: 2, 1>, scalar_prefetch = 0 : i64, scratch_operands = 0 : i64, tpu.core_type = #tpu.core_type<tc>, window_params = [{transform_indices = @transform_0, window_bounds = array<i64: 1, 4, 16, 16>}, {pipeline_mode = #tpu.pipeline_mode<synchronous>, transform_indices = @transform_1, window_bounds = array<i64: 4, 2, 4>}, {pipeline_mode = #tpu.pipeline_mode<synchronous>, transform_indices = @transform_2, window_bounds = array<i64: 2, 16, 32>}, {transform_indices = @transform_3, window_bounds = array<i64: 1, 2, 16, 64>}]} {
    %c0 = arith.constant 0 : index
    %c0_0 = arith.constant 0 : index
    %c0_1 = arith.constant 0 : index
    %0 = vector.load %arg4[%c0, %c0_0, %c0_1] : memref<2x16x32xf32, #tpu.memory_space<vmem>>, vector<1x16x32xf32>
    %1 = vector.shape_cast %0 : vector<1x16x32xf32> to vector<16x32xf32>
    %c1 = arith.constant 1 : index
    %c0_2 = arith.constant 0 : index
    %c0_3 = arith.constant 0 : index
    %2 = vector.load %arg4[%c1, %c0_2, %c0_3] : memref<2x16x32xf32, #tpu.memory_space<vmem>>, vector<1x16x32xf32>
    %3 = vector.shape_cast %2 : vector<1x16x32xf32> to vector<16x32xf32>
    %c0_4 = arith.constant 0 : index
    %c0_5 = arith.constant 0 : index
    %c0_6 = arith.constant 0 : index
    %4 = vector.load %arg3[%c0_4, %c0_5, %c0_6] : memref<4x2x4xf32, #tpu.memory_space<vmem>>, vector<1x2x4xf32>
    %5 = vector.shape_cast %4 : vector<1x2x4xf32> to vector<2x4xf32>
    %c1_7 = arith.constant 1 : index
    %c0_8 = arith.constant 0 : index
    %c0_9 = arith.constant 0 : index
    %6 = vector.load %arg3[%c1_7, %c0_8, %c0_9] : memref<4x2x4xf32, #tpu.memory_space<vmem>>, vector<1x2x4xf32>
    %7 = vector.shape_cast %6 : vector<1x2x4xf32> to vector<2x4xf32>
    %c2 = arith.constant 2 : index
    %c0_10 = arith.constant 0 : index
    %c0_11 = arith.constant 0 : index
    %8 = vector.load %arg3[%c2, %c0_10, %c0_11] : memref<4x2x4xf32, #tpu.memory_space<vmem>>, vector<1x2x4xf32>
    %9 = vector.shape_cast %8 : vector<1x2x4xf32> to vector<2x4xf32>
    %c3 = arith.constant 3 : index
    %c0_12 = arith.constant 0 : index
    %c0_13 = arith.constant 0 : index
    %10 = vector.load %arg3[%c3, %c0_12, %c0_13] : memref<4x2x4xf32, #tpu.memory_space<vmem>>, vector<1x2x4xf32>
    %11 = vector.shape_cast %10 : vector<1x2x4xf32> to vector<2x4xf32>
    %c0_14 = arith.constant 0 : index
    %c0_15 = arith.constant 0 : index
    %c0_16 = arith.constant 0 : index
    %c0_17 = arith.constant 0 : index
    %12 = vector.load %arg2[%c0_14, %c0_15, %c0_16, %c0_17] : memref<1x4x16x16xf32, #tpu.memory_space<vmem>>, vector<1x4x1x16xf32>
    %13 = vector.shape_cast %12 : vector<1x4x1x16xf32> to vector<4x16xf32>
    %cst = arith.constant dense<0.000000e+00> : vector<2x16xf32>
    %14 = tpu.matmul %5, %13, %cst {dimension_numbers = #tpu.dot_dimension_numbers<[1], [0], [0], [1], [0, 0, 1, 1], [], []>} : vector<2x4xf32>, vector<4x16xf32>, vector<2x16xf32> -> vector<2x16xf32>
    %cst_18 = arith.constant dense<0.000000e+00> : vector<2x16xf32>
    %15 = tpu.matmul %7, %13, %cst_18 {dimension_numbers = #tpu.dot_dimension_numbers<[1], [0], [0], [1], [0, 0, 1, 1], [], []>} : vector<2x4xf32>, vector<4x16xf32>, vector<2x16xf32> -> vector<2x16xf32>
    %cst_19 = arith.constant dense<0.000000e+00> : vector<2x16xf32>
    %16 = tpu.matmul %9, %13, %cst_19 {dimension_numbers = #tpu.dot_dimension_numbers<[1], [0], [0], [1], [0, 0, 1, 1], [], []>} : vector<2x4xf32>, vector<4x16xf32>, vector<2x16xf32> -> vector<2x16xf32>
    %cst_20 = arith.constant dense<0.000000e+00> : vector<2x16xf32>
    %17 = tpu.matmul %11, %13, %cst_20 {dimension_numbers = #tpu.dot_dimension_numbers<[1], [0], [0], [1], [0, 0, 1, 1], [], []>} : vector<2x4xf32>, vector<4x16xf32>, vector<2x16xf32> -> vector<2x16xf32>
    %cst_21 = arith.constant dense<0.000000e+00> : vector<2x32xf32>
    %18 = tpu.matmul %14, %1, %cst_21 {dimension_numbers = #tpu.dot_dimension_numbers<[1], [0], [0], [1], [0, 0, 1, 1], [], []>} : vector<2x16xf32>, vector<16x32xf32>, vector<2x32xf32> -> vector<2x32xf32>
    %cst_22 = arith.constant dense<0.000000e+00> : vector<2x32xf32>
    %19 = tpu.matmul %15, %3, %cst_22 {dimension_numbers = #tpu.dot_dimension_numbers<[1], [0], [0], [1], [0, 0, 1, 1], [], []>} : vector<2x16xf32>, vector<16x32xf32>, vector<2x32xf32> -> vector<2x32xf32>
    %20 = arith.addf %18, %19 : vector<2x32xf32>
    %cst_23 = arith.constant dense<0.000000e+00> : vector<2x32xf32>
    %21 = tpu.matmul %16, %1, %cst_23 {dimension_numbers = #tpu.dot_dimension_numbers<[1], [0], [0], [1], [0, 0, 1, 1], [], []>} : vector<2x16xf32>, vector<16x32xf32>, vector<2x32xf32> -> vector<2x32xf32>
    %cst_24 = arith.constant dense<0.000000e+00> : vector<2x32xf32>
    %22 = tpu.matmul %17, %3, %cst_24 {dimension_numbers = #tpu.dot_dimension_numbers<[1], [0], [0], [1], [0, 0, 1, 1], [], []>} : vector<2x16xf32>, vector<16x32xf32>, vector<2x32xf32> -> vector<2x32xf32>
    %23 = arith.addf %21, %22 : vector<2x32xf32>
    %24 = tpu.concatenate %20, %23 in 1 : vector<2x32xf32>, vector<2x32xf32> -> vector<2x64xf32>
    %c0_25 = arith.constant 0 : index
    %c0_26 = arith.constant 0 : index
    %c0_27 = arith.constant 0 : index
    %c0_28 = arith.constant 0 : index
    %25 = vector.load %arg5[%c0_25, %c0_26, %c0_27, %c0_28] : memref<1x2x16x64xf32, #tpu.memory_space<vmem>>, vector<1x2x1x64xf32>
    %26 = vector.shape_cast %25 : vector<1x2x1x64xf32> to vector<2x64xf32>
    %27 = vector.shape_cast %24 : vector<2x64xf32> to vector<1x2x1x64xf32>
    tpu.vector_store %arg5[%c0_25, %c0_26, %c0_27, %c0_28], %27 {strides = array<i32>} : memref<1x2x16x64xf32, #tpu.memory_space<vmem>>, vector<1x2x1x64xf32>,
    %c0_29 = arith.constant 0 : index
    %c0_30 = arith.constant 0 : index
    %c1_31 = arith.constant 1 : index
    %c0_32 = arith.constant 0 : index
    %28 = vector.load %arg2[%c0_29, %c0_30, %c1_31, %c0_32] : memref<1x4x16x16xf32, #tpu.memory_space<vmem>>, vector<1x4x1x16xf32>
    %29 = vector.shape_cast %28 : vector<1x4x1x16xf32> to vector<4x16xf32>
    %cst_33 = arith.constant dense<0.000000e+00> : vector<2x16xf32>
    %30 = tpu.matmul %5, %29, %cst_33 {dimension_numbers = #tpu.dot_dimension_numbers<[1], [0], [0], [1], [0, 0, 1, 1], [], []>} : vector<2x4xf32>, vector<4x16xf32>, vector<2x16xf32> -> vector<2x16xf32>
    %cst_34 = arith.constant dense<0.000000e+00> : vector<2x16xf32>
    %31 = tpu.matmul %7, %29, %cst_34 {dimension_numbers = #tpu.dot_dimension_numbers<[1], [0], [0], [1], [0, 0, 1, 1], [], []>} : vector<2x4xf32>, vector<4x16xf32>, vector<2x16xf32> -> vector<2x16xf32>
    %cst_35 = arith.constant dense<0.000000e+00> : vector<2x16xf32>
    %32 = tpu.matmul %9, %29, %cst_35 {dimension_numbers = #tpu.dot_dimension_numbers<[1], [0], [0], [1], [0, 0, 1, 1], [], []>} : vector<2x4xf32>, vector<4x16xf32>, vector<2x16xf32> -> vector<2x16xf32>
    %cst_36 = arith.constant dense<0.000000e+00> : vector<2x16xf32>
    %33 = tpu.matmul %11, %29, %cst_36 {dimension_numbers = #tpu.dot_dimension_numbers<[1], [0], [0], [1], [0, 0, 1, 1], [], []>} : vector<2x4xf32>, vector<4x16xf32>, vector<2x16xf32> -> vector<2x16xf32>
    %cst_37 = arith.constant dense<0.000000e+00> : vector<2x32xf32>
    %34 = tpu.matmul %30, %1, %cst_37 {dimension_numbers = #tpu.dot_dimension_numbers<[1], [0], [0], [1], [0, 0, 1, 1], [], []>} : vector<2x16xf32>, vector<16x32xf32>, vector<2x32xf32> -> vector<2x32xf32>
    %cst_38 = arith.constant dense<0.000000e+00> : vector<2x32xf32>
    %35 = tpu.matmul %31, %3, %cst_38 {dimension_numbers = #tpu.dot_dimension_numbers<[1], [0], [0], [1], [0, 0, 1, 1], [], []>} : vector<2x16xf32>, vector<16x32xf32>, vector<2x32xf32> -> vector<2x32xf32>
    %36 = arith.addf %34, %35 : vector<2x32xf32>
    %cst_39 = arith.constant dense<0.000000e+00> : vector<2x32xf32>
    %37 = tpu.matmul %32, %1, %cst_39 {dimension_numbers = #tpu.dot_dimension_numbers<[1], [0], [0], [1], [0, 0, 1, 1], [], []>} : vector<2x16xf32>, vector<16x32xf32>, vector<2x32xf32> -> vector<2x32xf32>
    %cst_40 = arith.constant dense<0.000000e+00> : vector<2x32xf32>
    %38 = tpu.matmul %33, %3, %cst_40 {dimension_numbers = #tpu.dot_dimension_numbers<[1], [0], [0], [1], [0, 0, 1, 1], [], []>} : vector<2x16xf32>, vector<16x32xf32>, vector<2x32xf32> -> vector<2x32xf32>
    %39 = arith.addf %37, %38 : vector<2x32xf32>
    %40 = tpu.concatenate %36, %39 in 1 : vector<2x32xf32>, vector<2x32xf32> -> vector<2x64xf32>
    %c0_41 = arith.constant 0 : index
    %c0_42 = arith.constant 0 : index
    %c1_43 = arith.constant 1 : index
    %c0_44 = arith.constant 0 : index
    %41 = vector.load %arg5[%c0_41, %c0_42, %c1_43, %c0_44] : memref<1x2x16x64xf32, #tpu.memory_space<vmem>>, vector<1x2x1x64xf32>
    %42 = vector.shape_cast %41 : vector<1x2x1x64xf32> to vector<2x64xf32>
    %43 = vector.shape_cast %40 : vector<2x64xf32> to vector<1x2x1x64xf32>
    tpu.vector_store %arg5[%c0_41, %c0_42, %c1_43, %c0_44], %43 {strides = array<i32>} : memref<1x2x16x64xf32, #tpu.memory_space<vmem>>, vector<1x2x1x64xf32>,
    %c0_45 = arith.constant 0 : index
    %c0_46 = arith.constant 0 : index
    %c2_47 = arith.constant 2 : index
    %c0_48 = arith.constant 0 : index
    %44 = vector.load %arg2[%c0_45, %c0_46, %c2_47, %c0_48] : memref<1x4x16x16xf32, #tpu.memory_space<vmem>>, vector<1x4x1x16xf32>
    %45 = vector.shape_cast %44 : vector<1x4x1x16xf32> to vector<4x16xf32>
    %cst_49 = arith.constant dense<0.000000e+00> : vector<2x16xf32>
    %46 = tpu.matmul %5, %45, %cst_49 {dimension_numbers = #tpu.dot_dimension_numbers<[1], [0], [0], [1], [0, 0, 1, 1], [], []>} : vector<2x4xf32>, vector<4x16xf32>, vector<2x16xf32> -> vector<2x16xf32>
    %cst_50 = arith.constant dense<0.000000e+00> : vector<2x16xf32>
    %47 = tpu.matmul %7, %45, %cst_50 {dimension_numbers = #tpu.dot_dimension_numbers<[1], [0], [0], [1], [0, 0, 1, 1], [], []>} : vector<2x4xf32>, vector<4x16xf32>, vector<2x16xf32> -> vector<2x16xf32>
    %cst_51 = arith.constant dense<0.000000e+00> : vector<2x16xf32>
    %48 = tpu.matmul %9, %45, %cst_51 {dimension_numbers = #tpu.dot_dimension_numbers<[1], [0], [0], [1], [0, 0, 1, 1], [], []>} : vector<2x4xf32>, vector<4x16xf32>, vector<2x16xf32> -> vector<2x16xf32>
    %cst_52 = arith.constant dense<0.000000e+00> : vector<2x16xf32>
    %49 = tpu.matmul %11, %45, %cst_52 {dimension_numbers = #tpu.dot_dimension_numbers<[1], [0], [0], [1], [0, 0, 1, 1], [], []>} : vector<2x4xf32>, vector<4x16xf32>, vector<2x16xf32> -> vector<2x16xf32>
    %cst_53 = arith.constant dense<0.000000e+00> : vector<2x32xf32>
    %50 = tpu.matmul %46, %1, %cst_53 {dimension_numbers = #tpu.dot_dimension_numbers<[1], [0], [0], [1], [0, 0, 1, 1], [], []>} : vector<2x16xf32>, vector<16x32xf32>, vector<2x32xf32> -> vector<2x32xf32>
    %cst_54 = arith.constant dense<0.000000e+00> : vector<2x32xf32>
    %51 = tpu.matmul %47, %3, %cst_54 {dimension_numbers = #tpu.dot_dimension_numbers<[1], [0], [0], [1], [0, 0, 1, 1], [], []>} : vector<2x16xf32>, vector<16x32xf32>, vector<2x32xf32> -> vector<2x32xf32>
    %52 = arith.addf %50, %51 : vector<2x32xf32>
    %cst_55 = arith.constant dense<0.000000e+00> : vector<2x32xf32>
    %53 = tpu.matmul %48, %1, %cst_55 {dimension_numbers = #tpu.dot_dimension_numbers<[1], [0], [0], [1], [0, 0, 1, 1], [], []>} : vector<2x16xf32>, vector<16x32xf32>, vector<2x32xf32> -> vector<2x32xf32>
    %cst_56 = arith.constant dense<0.000000e+00> : vector<2x32xf32>
    %54 = tpu.matmul %49, %3, %cst_56 {dimension_numbers = #tpu.dot_dimension_numbers<[1], [0], [0], [1], [0, 0, 1, 1], [], []>} : vector<2x16xf32>, vector<16x32xf32>, vector<2x32xf32> -> vector<2x32xf32>
    %55 = arith.addf %53, %54 : vector<2x32xf32>
    %56 = tpu.concatenate %52, %55 in 1 : vector<2x32xf32>, vector<2x32xf32> -> vector<2x64xf32>
    %c0_57 = arith.constant 0 : index
    %c0_58 = arith.constant 0 : index
    %c2_59 = arith.constant 2 : index
    %c0_60 = arith.constant 0 : index
    %57 = vector.load %arg5[%c0_57, %c0_58, %c2_59, %c0_60] : memref<1x2x16x64xf32, #tpu.memory_space<vmem>>, vector<1x2x1x64xf32>
    %58 = vector.shape_cast %57 : vector<1x2x1x64xf32> to vector<2x64xf32>
    %59 = vector.shape_cast %56 : vector<2x64xf32> to vector<1x2x1x64xf32>
    tpu.vector_store %arg5[%c0_57, %c0_58, %c2_59, %c0_60], %59 {strides = array<i32>} : memref<1x2x16x64xf32, #tpu.memory_space<vmem>>, vector<1x2x1x64xf32>,
    %c0_61 = arith.constant 0 : index
    %c0_62 = arith.constant 0 : index
    %c3_63 = arith.constant 3 : index
    %c0_64 = arith.constant 0 : index
    %60 = vector.load %arg2[%c0_61, %c0_62, %c3_63, %c0_64] : memref<1x4x16x16xf32, #tpu.memory_space<vmem>>, vector<1x4x1x16xf32>
    %61 = vector.shape_cast %60 : vector<1x4x1x16xf32> to vector<4x16xf32>
    %cst_65 = arith.constant dense<0.000000e+00> : vector<2x16xf32>
    %62 = tpu.matmul %5, %61, %cst_65 {dimension_numbers = #tpu.dot_dimension_numbers<[1], [0], [0], [1], [0, 0, 1, 1], [], []>} : vector<2x4xf32>, vector<4x16xf32>, vector<2x16xf32> -> vector<2x16xf32>
    %cst_66 = arith.constant dense<0.000000e+00> : vector<2x16xf32>
    %63 = tpu.matmul %7, %61, %cst_66 {dimension_numbers = #tpu.dot_dimension_numbers<[1], [0], [0], [1], [0, 0, 1, 1], [], []>} : vector<2x4xf32>, vector<4x16xf32>, vector<2x16xf32> -> vector<2x16xf32>
    %cst_67 = arith.constant dense<0.000000e+00> : vector<2x16xf32>
    %64 = tpu.matmul %9, %61, %cst_67 {dimension_numbers = #tpu.dot_dimension_numbers<[1], [0], [0], [1], [0, 0, 1, 1], [], []>} : vector<2x4xf32>, vector<4x16xf32>, vector<2x16xf32> -> vector<2x16xf32>
    %cst_68 = arith.constant dense<0.000000e+00> : vector<2x16xf32>
    %65 = tpu.matmul %11, %61, %cst_68 {dimension_numbers = #tpu.dot_dimension_numbers<[1], [0], [0], [1], [0, 0, 1, 1], [], []>} : vector<2x4xf32>, vector<4x16xf32>, vector<2x16xf32> -> vector<2x16xf32>
    %cst_69 = arith.constant dense<0.000000e+00> : vector<2x32xf32>
    %66 = tpu.matmul %62, %1, %cst_69 {dimension_numbers = #tpu.dot_dimension_numbers<[1], [0], [0], [1], [0, 0, 1, 1], [], []>} : vector<2x16xf32>, vector<16x32xf32>, vector<2x32xf32> -> vector<2x32xf32>
    %cst_70 = arith.constant dense<0.000000e+00> : vector<2x32xf32>
    %67 = tpu.matmul %63, %3, %cst_70 {dimension_numbers = #tpu.dot_dimension_numbers<[1], [0], [0], [1], [0, 0, 1, 1], [], []>} : vector<2x16xf32>, vector<16x32xf32>, vector<2x32xf32> -> vector<2x32xf32>
    %68 = arith.addf %66, %67 : vector<2x32xf32>
    %cst_71 = arith.constant dense<0.000000e+00> : vector<2x32xf32>
    %69 = tpu.matmul %64, %1, %cst_71 {dimension_numbers = #tpu.dot_dimension_numbers<[1], [0], [0], [1], [0, 0, 1, 1], [], []>} : vector<2x16xf32>, vector<16x32xf32>, vector<2x32xf32> -> vector<2x32xf32>
    %cst_72 = arith.constant dense<0.000000e+00> : vector<2x32xf32>
    %70 = tpu.matmul %65, %3, %cst_72 {dimension_numbers = #tpu.dot_dimension_numbers<[1], [0], [0], [1], [0, 0, 1, 1], [], []>} : vector<2x16xf32>, vector<16x32xf32>, vector<2x32xf32> -> vector<2x32xf32>
    %71 = arith.addf %69, %70 : vector<2x32xf32>
    %72 = tpu.concatenate %68, %71 in 1 : vector<2x32xf32>, vector<2x32xf32> -> vector<2x64xf32>
    %c0_73 = arith.constant 0 : index
    %c0_74 = arith.constant 0 : index
    %c3_75 = arith.constant 3 : index
    %c0_76 = arith.constant 0 : index
    %73 = vector.load %arg5[%c0_73, %c0_74, %c3_75, %c0_76] : memref<1x2x16x64xf32, #tpu.memory_space<vmem>>, vector<1x2x1x64xf32>
    %74 = vector.shape_cast %73 : vector<1x2x1x64xf32> to vector<2x64xf32>
    %75 = vector.shape_cast %72 : vector<2x64xf32> to vector<1x2x1x64xf32>
    tpu.vector_store %arg5[%c0_73, %c0_74, %c3_75, %c0_76], %75 {strides = array<i32>} : memref<1x2x16x64xf32, #tpu.memory_space<vmem>>, vector<1x2x1x64xf32>,
    %c0_77 = arith.constant 0 : index
    %c0_78 = arith.constant 0 : index
    %c4 = arith.constant 4 : index
    %c0_79 = arith.constant 0 : index
    %76 = vector.load %arg2[%c0_77, %c0_78, %c4, %c0_79] : memref<1x4x16x16xf32, #tpu.memory_space<vmem>>, vector<1x4x1x16xf32>
    %77 = vector.shape_cast %76 : vector<1x4x1x16xf32> to vector<4x16xf32>
    %cst_80 = arith.constant dense<0.000000e+00> : vector<2x16xf32>
    %78 = tpu.matmul %5, %77, %cst_80 {dimension_numbers = #tpu.dot_dimension_numbers<[1], [0], [0], [1], [0, 0, 1, 1], [], []>} : vector<2x4xf32>, vector<4x16xf32>, vector<2x16xf32> -> vector<2x16xf32>
    %cst_81 = arith.constant dense<0.000000e+00> : vector<2x16xf32>
    %79 = tpu.matmul %7, %77, %cst_81 {dimension_numbers = #tpu.dot_dimension_numbers<[1], [0], [0], [1], [0, 0, 1, 1], [], []>} : vector<2x4xf32>, vector<4x16xf32>, vector<2x16xf32> -> vector<2x16xf32>
    %cst_82 = arith.constant dense<0.000000e+00> : vector<2x16xf32>
    %80 = tpu.matmul %9, %77, %cst_82 {dimension_numbers = #tpu.dot_dimension_numbers<[1], [0], [0], [1], [0, 0, 1, 1], [], []>} : vector<2x4xf32>, vector<4x16xf32>, vector<2x16xf32> -> vector<2x16xf32>
    %cst_83 = arith.constant dense<0.000000e+00> : vector<2x16xf32>
    %81 = tpu.matmul %11, %77, %cst_83 {dimension_numbers = #tpu.dot_dimension_numbers<[1], [0], [0], [1], [0, 0, 1, 1], [], []>} : vector<2x4xf32>, vector<4x16xf32>, vector<2x16xf32> -> vector<2x16xf32>
    %cst_84 = arith.constant dense<0.000000e+00> : vector<2x32xf32>
    %82 = tpu.matmul %78, %1, %cst_84 {dimension_numbers = #tpu.dot_dimension_numbers<[1], [0], [0], [1], [0, 0, 1, 1], [], []>} : vector<2x16xf32>, vector<16x32xf32>, vector<2x32xf32> -> vector<2x32xf32>
    %cst_85 = arith.constant dense<0.000000e+00> : vector<2x32xf32>
    %83 = tpu.matmul %79, %3, %cst_85 {dimension_numbers = #tpu.dot_dimension_numbers<[1], [0], [0], [1], [0, 0, 1, 1], [], []>} : vector<2x16xf32>, vector<16x32xf32>, vector<2x32xf32> -> vector<2x32xf32>
    %84 = arith.addf %82, %83 : vector<2x32xf32>
    %cst_86 = arith.constant dense<0.000000e+00> : vector<2x32xf32>
    %85 = tpu.matmul %80, %1, %cst_86 {dimension_numbers = #tpu.dot_dimension_numbers<[1], [0], [0], [1], [0, 0, 1, 1], [], []>} : vector<2x16xf32>, vector<16x32xf32>, vector<2x32xf32> -> vector<2x32xf32>
    %cst_87 = arith.constant dense<0.000000e+00> : vector<2x32xf32>
    %86 = tpu.matmul %81, %3, %cst_87 {dimension_numbers = #tpu.dot_dimension_numbers<[1], [0], [0], [1], [0, 0, 1, 1], [], []>} : vector<2x16xf32>, vector<16x32xf32>, vector<2x32xf32> -> vector<2x32xf32>
    %87 = arith.addf %85, %86 : vector<2x32xf32>
    %88 = tpu.concatenate %84, %87 in 1 : vector<2x32xf32>, vector<2x32xf32> -> vector<2x64xf32>
    %c0_88 = arith.constant 0 : index
    %c0_89 = arith.constant 0 : index
    %c4_90 = arith.constant 4 : index
    %c0_91 = arith.constant 0 : index
    %89 = vector.load %arg5[%c0_88, %c0_89, %c4_90, %c0_91] : memref<1x2x16x64xf32, #tpu.memory_space<vmem>>, vector<1x2x1x64xf32>
    %90 = vector.shape_cast %89 : vector<1x2x1x64xf32> to vector<2x64xf32>
    %91 = vector.shape_cast %88 : vector<2x64xf32> to vector<1x2x1x64xf32>
    tpu.vector_store %arg5[%c0_88, %c0_89, %c4_90, %c0_91], %91 {strides = array<i32>} : memref<1x2x16x64xf32, #tpu.memory_space<vmem>>, vector<1x2x1x64xf32>,
    %c0_92 = arith.constant 0 : index
    %c0_93 = arith.constant 0 : index
    %c5 = arith.constant 5 : index
    %c0_94 = arith.constant 0 : index
    %92 = vector.load %arg2[%c0_92, %c0_93, %c5, %c0_94] : memref<1x4x16x16xf32, #tpu.memory_space<vmem>>, vector<1x4x1x16xf32>
    %93 = vector.shape_cast %92 : vector<1x4x1x16xf32> to vector<4x16xf32>
    %cst_95 = arith.constant dense<0.000000e+00> : vector<2x16xf32>
    %94 = tpu.matmul %5, %93, %cst_95 {dimension_numbers = #tpu.dot_dimension_numbers<[1], [0], [0], [1], [0, 0, 1, 1], [], []>} : vector<2x4xf32>, vector<4x16xf32>, vector<2x16xf32> -> vector<2x16xf32>
    %cst_96 = arith.constant dense<0.000000e+00> : vector<2x16xf32>
    %95 = tpu.matmul %7, %93, %cst_96 {dimension_numbers = #tpu.dot_dimension_numbers<[1], [0], [0], [1], [0, 0, 1, 1], [], []>} : vector<2x4xf32>, vector<4x16xf32>, vector<2x16xf32> -> vector<2x16xf32>
    %cst_97 = arith.constant dense<0.000000e+00> : vector<2x16xf32>
    %96 = tpu.matmul %9, %93, %cst_97 {dimension_numbers = #tpu.dot_dimension_numbers<[1], [0], [0], [1], [0, 0, 1, 1], [], []>} : vector<2x4xf32>, vector<4x16xf32>, vector<2x16xf32> -> vector<2x16xf32>
    %cst_98 = arith.constant dense<0.000000e+00> : vector<2x16xf32>
    %97 = tpu.matmul %11, %93, %cst_98 {dimension_numbers = #tpu.dot_dimension_numbers<[1], [0], [0], [1], [0, 0, 1, 1], [], []>} : vector<2x4xf32>, vector<4x16xf32>, vector<2x16xf32> -> vector<2x16xf32>
    %cst_99 = arith.constant dense<0.000000e+00> : vector<2x32xf32>
    %98 = tpu.matmul %94, %1, %cst_99 {dimension_numbers = #tpu.dot_dimension_numbers<[1], [0], [0], [1], [0, 0, 1, 1], [], []>} : vector<2x16xf32>, vector<16x32xf32>, vector<2x32xf32> -> vector<2x32xf32>
    %cst_100 = arith.constant dense<0.000000e+00> : vector<2x32xf32>
    %99 = tpu.matmul %95, %3, %cst_100 {dimension_numbers = #tpu.dot_dimension_numbers<[1], [0], [0], [1], [0, 0, 1, 1], [], []>} : vector<2x16xf32>, vector<16x32xf32>, vector<2x32xf32> -> vector<2x32xf32>
    %100 = arith.addf %98, %99 : vector<2x32xf32>
    %cst_101 = arith.constant dense<0.000000e+00> : vector<2x32xf32>
    %101 = tpu.matmul %96, %1, %cst_101 {dimension_numbers = #tpu.dot_dimension_numbers<[1], [0], [0], [1], [0, 0, 1, 1], [], []>} : vector<2x16xf32>, vector<16x32xf32>, vector<2x32xf32> -> vector<2x32xf32>
    %cst_102 = arith.constant dense<0.000000e+00> : vector<2x32xf32>
    %102 = tpu.matmul %97, %3, %cst_102 {dimension_numbers = #tpu.dot_dimension_numbers<[1], [0], [0], [1], [0, 0, 1, 1], [], []>} : vector<2x16xf32>, vector<16x32xf32>, vector<2x32xf32> -> vector<2x32xf32>
    %103 = arith.addf %101, %102 : vector<2x32xf32>
    %104 = tpu.concatenate %100, %103 in 1 : vector<2x32xf32>, vector<2x32xf32> -> vector<2x64xf32>
    %c0_103 = arith.constant 0 : index
    %c0_104 = arith.constant 0 : index
    %c5_105 = arith.constant 5 : index
    %c0_106 = arith.constant 0 : index
    %105 = vector.load %arg5[%c0_103, %c0_104, %c5_105, %c0_106] : memref<1x2x16x64xf32, #tpu.memory_space<vmem>>, vector<1x2x1x64xf32>
    %106 = vector.shape_cast %105 : vector<1x2x1x64xf32> to vector<2x64xf32>
    %107 = vector.shape_cast %104 : vector<2x64xf32> to vector<1x2x1x64xf32>
    tpu.vector_store %arg5[%c0_103, %c0_104, %c5_105, %c0_106], %107 {strides = array<i32>} : memref<1x2x16x64xf32, #tpu.memory_space<vmem>>, vector<1x2x1x64xf32>,
    %c0_107 = arith.constant 0 : index
    %c0_108 = arith.constant 0 : index
    %c6 = arith.constant 6 : index
    %c0_109 = arith.constant 0 : index
    %108 = vector.load %arg2[%c0_107, %c0_108, %c6, %c0_109] : memref<1x4x16x16xf32, #tpu.memory_space<vmem>>, vector<1x4x1x16xf32>
    %109 = vector.shape_cast %108 : vector<1x4x1x16xf32> to vector<4x16xf32>
    %cst_110 = arith.constant dense<0.000000e+00> : vector<2x16xf32>
    %110 = tpu.matmul %5, %109, %cst_110 {dimension_numbers = #tpu.dot_dimension_numbers<[1], [0], [0], [1], [0, 0, 1, 1], [], []>} : vector<2x4xf32>, vector<4x16xf32>, vector<2x16xf32> -> vector<2x16xf32>
    %cst_111 = arith.constant dense<0.000000e+00> : vector<2x16xf32>
    %111 = tpu.matmul %7, %109, %cst_111 {dimension_numbers = #tpu.dot_dimension_numbers<[1], [0], [0], [1], [0, 0, 1, 1], [], []>} : vector<2x4xf32>, vector<4x16xf32>, vector<2x16xf32> -> vector<2x16xf32>
    %cst_112 = arith.constant dense<0.000000e+00> : vector<2x16xf32>
    %112 = tpu.matmul %9, %109, %cst_112 {dimension_numbers = #tpu.dot_dimension_numbers<[1], [0], [0], [1], [0, 0, 1, 1], [], []>} : vector<2x4xf32>, vector<4x16xf32>, vector<2x16xf32> -> vector<2x16xf32>
    %cst_113 = arith.constant dense<0.000000e+00> : vector<2x16xf32>
    %113 = tpu.matmul %11, %109, %cst_113 {dimension_numbers = #tpu.dot_dimension_numbers<[1], [0], [0], [1], [0, 0, 1, 1], [], []>} : vector<2x4xf32>, vector<4x16xf32>, vector<2x16xf32> -> vector<2x16xf32>
    %cst_114 = arith.constant dense<0.000000e+00> : vector<2x32xf32>
    %114 = tpu.matmul %110, %1, %cst_114 {dimension_numbers = #tpu.dot_dimension_numbers<[1], [0], [0], [1], [0, 0, 1, 1], [], []>} : vector<2x16xf32>, vector<16x32xf32>, vector<2x32xf32> -> vector<2x32xf32>
    %cst_115 = arith.constant dense<0.000000e+00> : vector<2x32xf32>
    %115 = tpu.matmul %111, %3, %cst_115 {dimension_numbers = #tpu.dot_dimension_numbers<[1], [0], [0], [1], [0, 0, 1, 1], [], []>} : vector<2x16xf32>, vector<16x32xf32>, vector<2x32xf32> -> vector<2x32xf32>
    %116 = arith.addf %114, %115 : vector<2x32xf32>
    %cst_116 = arith.constant dense<0.000000e+00> : vector<2x32xf32>
    %117 = tpu.matmul %112, %1, %cst_116 {dimension_numbers = #tpu.dot_dimension_numbers<[1], [0], [0], [1], [0, 0, 1, 1], [], []>} : vector<2x16xf32>, vector<16x32xf32>, vector<2x32xf32> -> vector<2x32xf32>
    %cst_117 = arith.constant dense<0.000000e+00> : vector<2x32xf32>
    %118 = tpu.matmul %113, %3, %cst_117 {dimension_numbers = #tpu.dot_dimension_numbers<[1], [0], [0], [1], [0, 0, 1, 1], [], []>} : vector<2x16xf32>, vector<16x32xf32>, vector<2x32xf32> -> vector<2x32xf32>
    %119 = arith.addf %117, %118 : vector<2x32xf32>
    %120 = tpu.concatenate %116, %119 in 1 : vector<2x32xf32>, vector<2x32xf32> -> vector<2x64xf32>
    %c0_118 = arith.constant 0 : index
    %c0_119 = arith.constant 0 : index
    %c6_120 = arith.constant 6 : index
    %c0_121 = arith.constant 0 : index
    %121 = vector.load %arg5[%c0_118, %c0_119, %c6_120, %c0_121] : memref<1x2x16x64xf32, #tpu.memory_space<vmem>>, vector<1x2x1x64xf32>
    %122 = vector.shape_cast %121 : vector<1x2x1x64xf32> to vector<2x64xf32>
    %123 = vector.shape_cast %120 : vector<2x64xf32> to vector<1x2x1x64xf32>
    tpu.vector_store %arg5[%c0_118, %c0_119, %c6_120, %c0_121], %123 {strides = array<i32>} : memref<1x2x16x64xf32, #tpu.memory_space<vmem>>, vector<1x2x1x64xf32>,
    %c0_122 = arith.constant 0 : index
    %c0_123 = arith.constant 0 : index
    %c7 = arith.constant 7 : index
    %c0_124 = arith.constant 0 : index
    %124 = vector.load %arg2[%c0_122, %c0_123, %c7, %c0_124] : memref<1x4x16x16xf32, #tpu.memory_space<vmem>>, vector<1x4x1x16xf32>
    %125 = vector.shape_cast %124 : vector<1x4x1x16xf32> to vector<4x16xf32>
    %cst_125 = arith.constant dense<0.000000e+00> : vector<2x16xf32>
    %126 = tpu.matmul %5, %125, %cst_125 {dimension_numbers = #tpu.dot_dimension_numbers<[1], [0], [0], [1], [0, 0, 1, 1], [], []>} : vector<2x4xf32>, vector<4x16xf32>, vector<2x16xf32> -> vector<2x16xf32>
    %cst_126 = arith.constant dense<0.000000e+00> : vector<2x16xf32>
    %127 = tpu.matmul %7, %125, %cst_126 {dimension_numbers = #tpu.dot_dimension_numbers<[1], [0], [0], [1], [0, 0, 1, 1], [], []>} : vector<2x4xf32>, vector<4x16xf32>, vector<2x16xf32> -> vector<2x16xf32>
    %cst_127 = arith.constant dense<0.000000e+00> : vector<2x16xf32>
    %128 = tpu.matmul %9, %125, %cst_127 {dimension_numbers = #tpu.dot_dimension_numbers<[1], [0], [0], [1], [0, 0, 1, 1], [], []>} : vector<2x4xf32>, vector<4x16xf32>, vector<2x16xf32> -> vector<2x16xf32>
    %cst_128 = arith.constant dense<0.000000e+00> : vector<2x16xf32>
    %129 = tpu.matmul %11, %125, %cst_128 {dimension_numbers = #tpu.dot_dimension_numbers<[1], [0], [0], [1], [0, 0, 1, 1], [], []>} : vector<2x4xf32>, vector<4x16xf32>, vector<2x16xf32> -> vector<2x16xf32>
    %cst_129 = arith.constant dense<0.000000e+00> : vector<2x32xf32>
    %130 = tpu.matmul %126, %1, %cst_129 {dimension_numbers = #tpu.dot_dimension_numbers<[1], [0], [0], [1], [0, 0, 1, 1], [], []>} : vector<2x16xf32>, vector<16x32xf32>, vector<2x32xf32> -> vector<2x32xf32>
    %cst_130 = arith.constant dense<0.000000e+00> : vector<2x32xf32>
    %131 = tpu.matmul %127, %3, %cst_130 {dimension_numbers = #tpu.dot_dimension_numbers<[1], [0], [0], [1], [0, 0, 1, 1], [], []>} : vector<2x16xf32>, vector<16x32xf32>, vector<2x32xf32> -> vector<2x32xf32>
    %132 = arith.addf %130, %131 : vector<2x32xf32>
    %cst_131 = arith.constant dense<0.000000e+00> : vector<2x32xf32>
    %133 = tpu.matmul %128, %1, %cst_131 {dimension_numbers = #tpu.dot_dimension_numbers<[1], [0], [0], [1], [0, 0, 1, 1], [], []>} : vector<2x16xf32>, vector<16x32xf32>, vector<2x32xf32> -> vector<2x32xf32>
    %cst_132 = arith.constant dense<0.000000e+00> : vector<2x32xf32>
    %134 = tpu.matmul %129, %3, %cst_132 {dimension_numbers = #tpu.dot_dimension_numbers<[1], [0], [0], [1], [0, 0, 1, 1], [], []>} : vector<2x16xf32>, vector<16x32xf32>, vector<2x32xf32> -> vector<2x32xf32>
    %135 = arith.addf %133, %134 : vector<2x32xf32>
    %136 = tpu.concatenate %132, %135 in 1 : vector<2x32xf32>, vector<2x32xf32> -> vector<2x64xf32>
    %c0_133 = arith.constant 0 : index
    %c0_134 = arith.constant 0 : index
    %c7_135 = arith.constant 7 : index
    %c0_136 = arith.constant 0 : index
    %137 = vector.load %arg5[%c0_133, %c0_134, %c7_135, %c0_136] : memref<1x2x16x64xf32, #tpu.memory_space<vmem>>, vector<1x2x1x64xf32>
    %138 = vector.shape_cast %137 : vector<1x2x1x64xf32> to vector<2x64xf32>
    %139 = vector.shape_cast %136 : vector<2x64xf32> to vector<1x2x1x64xf32>
    tpu.vector_store %arg5[%c0_133, %c0_134, %c7_135, %c0_136], %139 {strides = array<i32>} : memref<1x2x16x64xf32, #tpu.memory_space<vmem>>, vector<1x2x1x64xf32>,
    %c0_137 = arith.constant 0 : index
    %c0_138 = arith.constant 0 : index
    %c8 = arith.constant 8 : index
    %c0_139 = arith.constant 0 : index
    %140 = vector.load %arg2[%c0_137, %c0_138, %c8, %c0_139] : memref<1x4x16x16xf32, #tpu.memory_space<vmem>>, vector<1x4x1x16xf32>
    %141 = vector.shape_cast %140 : vector<1x4x1x16xf32> to vector<4x16xf32>
    %cst_140 = arith.constant dense<0.000000e+00> : vector<2x16xf32>
    %142 = tpu.matmul %5, %141, %cst_140 {dimension_numbers = #tpu.dot_dimension_numbers<[1], [0], [0], [1], [0, 0, 1, 1], [], []>} : vector<2x4xf32>, vector<4x16xf32>, vector<2x16xf32> -> vector<2x16xf32>
    %cst_141 = arith.constant dense<0.000000e+00> : vector<2x16xf32>
    %143 = tpu.matmul %7, %141, %cst_141 {dimension_numbers = #tpu.dot_dimension_numbers<[1], [0], [0], [1], [0, 0, 1, 1], [], []>} : vector<2x4xf32>, vector<4x16xf32>, vector<2x16xf32> -> vector<2x16xf32>
    %cst_142 = arith.constant dense<0.000000e+00> : vector<2x16xf32>
    %144 = tpu.matmul %9, %141, %cst_142 {dimension_numbers = #tpu.dot_dimension_numbers<[1], [0], [0], [1], [0, 0, 1, 1], [], []>} : vector<2x4xf32>, vector<4x16xf32>, vector<2x16xf32> -> vector<2x16xf32>
    %cst_143 = arith.constant dense<0.000000e+00> : vector<2x16xf32>
    %145 = tpu.matmul %11, %141, %cst_143 {dimension_numbers = #tpu.dot_dimension_numbers<[1], [0], [0], [1], [0, 0, 1, 1], [], []>} : vector<2x4xf32>, vector<4x16xf32>, vector<2x16xf32> -> vector<2x16xf32>
    %cst_144 = arith.constant dense<0.000000e+00> : vector<2x32xf32>
    %146 = tpu.matmul %142, %1, %cst_144 {dimension_numbers = #tpu.dot_dimension_numbers<[1], [0], [0], [1], [0, 0, 1, 1], [], []>} : vector<2x16xf32>, vector<16x32xf32>, vector<2x32xf32> -> vector<2x32xf32>
    %cst_145 = arith.constant dense<0.000000e+00> : vector<2x32xf32>
    %147 = tpu.matmul %143, %3, %cst_145 {dimension_numbers = #tpu.dot_dimension_numbers<[1], [0], [0], [1], [0, 0, 1, 1], [], []>} : vector<2x16xf32>, vector<16x32xf32>, vector<2x32xf32> -> vector<2x32xf32>
    %148 = arith.addf %146, %147 : vector<2x32xf32>
    %cst_146 = arith.constant dense<0.000000e+00> : vector<2x32xf32>
    %149 = tpu.matmul %144, %1, %cst_146 {dimension_numbers = #tpu.dot_dimension_numbers<[1], [0], [0], [1], [0, 0, 1, 1], [], []>} : vector<2x16xf32>, vector<16x32xf32>, vector<2x32xf32> -> vector<2x32xf32>
    %cst_147 = arith.constant dense<0.000000e+00> : vector<2x32xf32>
    %150 = tpu.matmul %145, %3, %cst_147 {dimension_numbers = #tpu.dot_dimension_numbers<[1], [0], [0], [1], [0, 0, 1, 1], [], []>} : vector<2x16xf32>, vector<16x32xf32>, vector<2x32xf32> -> vector<2x32xf32>
    %151 = arith.addf %149, %150 : vector<2x32xf32>
    %152 = tpu.concatenate %148, %151 in 1 : vector<2x32xf32>, vector<2x32xf32> -> vector<2x64xf32>
    %c0_148 = arith.constant 0 : index
    %c0_149 = arith.constant 0 : index
    %c8_150 = arith.constant 8 : index
    %c0_151 = arith.constant 0 : index
    %153 = vector.load %arg5[%c0_148, %c0_149, %c8_150, %c0_151] : memref<1x2x16x64xf32, #tpu.memory_space<vmem>>, vector<1x2x1x64xf32>
    %154 = vector.shape_cast %153 : vector<1x2x1x64xf32> to vector<2x64xf32>
    %155 = vector.shape_cast %152 : vector<2x64xf32> to vector<1x2x1x64xf32>
    tpu.vector_store %arg5[%c0_148, %c0_149, %c8_150, %c0_151], %155 {strides = array<i32>} : memref<1x2x16x64xf32, #tpu.memory_space<vmem>>, vector<1x2x1x64xf32>,
    %c0_152 = arith.constant 0 : index
    %c0_153 = arith.constant 0 : index
    %c9 = arith.constant 9 : index
    %c0_154 = arith.constant 0 : index
    %156 = vector.load %arg2[%c0_152, %c0_153, %c9, %c0_154] : memref<1x4x16x16xf32, #tpu.memory_space<vmem>>, vector<1x4x1x16xf32>
    %157 = vector.shape_cast %156 : vector<1x4x1x16xf32> to vector<4x16xf32>
    %cst_155 = arith.constant dense<0.000000e+00> : vector<2x16xf32>
    %158 = tpu.matmul %5, %157, %cst_155 {dimension_numbers = #tpu.dot_dimension_numbers<[1], [0], [0], [1], [0, 0, 1, 1], [], []>} : vector<2x4xf32>, vector<4x16xf32>, vector<2x16xf32> -> vector<2x16xf32>
    %cst_156 = arith.constant dense<0.000000e+00> : vector<2x16xf32>
    %159 = tpu.matmul %7, %157, %cst_156 {dimension_numbers = #tpu.dot_dimension_numbers<[1], [0], [0], [1], [0, 0, 1, 1], [], []>} : vector<2x4xf32>, vector<4x16xf32>, vector<2x16xf32> -> vector<2x16xf32>
    %cst_157 = arith.constant dense<0.000000e+00> : vector<2x16xf32>
    %160 = tpu.matmul %9, %157, %cst_157 {dimension_numbers = #tpu.dot_dimension_numbers<[1], [0], [0], [1], [0, 0, 1, 1], [], []>} : vector<2x4xf32>, vector<4x16xf32>, vector<2x16xf32> -> vector<2x16xf32>
    %cst_158 = arith.constant dense<0.000000e+00> : vector<2x16xf32>
    %161 = tpu.matmul %11, %157, %cst_158 {dimension_numbers = #tpu.dot_dimension_numbers<[1], [0], [0], [1], [0, 0, 1, 1], [], []>} : vector<2x4xf32>, vector<4x16xf32>, vector<2x16xf32> -> vector<2x16xf32>
    %cst_159 = arith.constant dense<0.000000e+00> : vector<2x32xf32>
    %162 = tpu.matmul %158, %1, %cst_159 {dimension_numbers = #tpu.dot_dimension_numbers<[1], [0], [0], [1], [0, 0, 1, 1], [], []>} : vector<2x16xf32>, vector<16x32xf32>, vector<2x32xf32> -> vector<2x32xf32>
    %cst_160 = arith.constant dense<0.000000e+00> : vector<2x32xf32>
    %163 = tpu.matmul %159, %3, %cst_160 {dimension_numbers = #tpu.dot_dimension_numbers<[1], [0], [0], [1], [0, 0, 1, 1], [], []>} : vector<2x16xf32>, vector<16x32xf32>, vector<2x32xf32> -> vector<2x32xf32>
    %164 = arith.addf %162, %163 : vector<2x32xf32>
    %cst_161 = arith.constant dense<0.000000e+00> : vector<2x32xf32>
    %165 = tpu.matmul %160, %1, %cst_161 {dimension_numbers = #tpu.dot_dimension_numbers<[1], [0], [0], [1], [0, 0, 1, 1], [], []>} : vector<2x16xf32>, vector<16x32xf32>, vector<2x32xf32> -> vector<2x32xf32>
    %cst_162 = arith.constant dense<0.000000e+00> : vector<2x32xf32>
    %166 = tpu.matmul %161, %3, %cst_162 {dimension_numbers = #tpu.dot_dimension_numbers<[1], [0], [0], [1], [0, 0, 1, 1], [], []>} : vector<2x16xf32>, vector<16x32xf32>, vector<2x32xf32> -> vector<2x32xf32>
    %167 = arith.addf %165, %166 : vector<2x32xf32>
    %168 = tpu.concatenate %164, %167 in 1 : vector<2x32xf32>, vector<2x32xf32> -> vector<2x64xf32>
    %c0_163 = arith.constant 0 : index
    %c0_164 = arith.constant 0 : index
    %c9_165 = arith.constant 9 : index
    %c0_166 = arith.constant 0 : index
    %169 = vector.load %arg5[%c0_163, %c0_164, %c9_165, %c0_166] : memref<1x2x16x64xf32, #tpu.memory_space<vmem>>, vector<1x2x1x64xf32>
    %170 = vector.shape_cast %169 : vector<1x2x1x64xf32> to vector<2x64xf32>
    %171 = vector.shape_cast %168 : vector<2x64xf32> to vector<1x2x1x64xf32>
    tpu.vector_store %arg5[%c0_163, %c0_164, %c9_165, %c0_166], %171 {strides = array<i32>} : memref<1x2x16x64xf32, #tpu.memory_space<vmem>>, vector<1x2x1x64xf32>,
    %c0_167 = arith.constant 0 : index
    %c0_168 = arith.constant 0 : index
    %c10 = arith.constant 10 : index
    %c0_169 = arith.constant 0 : index
    %172 = vector.load %arg2[%c0_167, %c0_168, %c10, %c0_169] : memref<1x4x16x16xf32, #tpu.memory_space<vmem>>, vector<1x4x1x16xf32>
    %173 = vector.shape_cast %172 : vector<1x4x1x16xf32> to vector<4x16xf32>
    %cst_170 = arith.constant dense<0.000000e+00> : vector<2x16xf32>
    %174 = tpu.matmul %5, %173, %cst_170 {dimension_numbers = #tpu.dot_dimension_numbers<[1], [0], [0], [1], [0, 0, 1, 1], [], []>} : vector<2x4xf32>, vector<4x16xf32>, vector<2x16xf32> -> vector<2x16xf32>
    %cst_171 = arith.constant dense<0.000000e+00> : vector<2x16xf32>
    %175 = tpu.matmul %7, %173, %cst_171 {dimension_numbers = #tpu.dot_dimension_numbers<[1], [0], [0], [1], [0, 0, 1, 1], [], []>} : vector<2x4xf32>, vector<4x16xf32>, vector<2x16xf32> -> vector<2x16xf32>
    %cst_172 = arith.constant dense<0.000000e+00> : vector<2x16xf32>
    %176 = tpu.matmul %9, %173, %cst_172 {dimension_numbers = #tpu.dot_dimension_numbers<[1], [0], [0], [1], [0, 0, 1, 1], [], []>} : vector<2x4xf32>, vector<4x16xf32>, vector<2x16xf32> -> vector<2x16xf32>
    %cst_173 = arith.constant dense<0.000000e+00> : vector<2x16xf32>
    %177 = tpu.matmul %11, %173, %cst_173 {dimension_numbers = #tpu.dot_dimension_numbers<[1], [0], [0], [1], [0, 0, 1, 1], [], []>} : vector<2x4xf32>, vector<4x16xf32>, vector<2x16xf32> -> vector<2x16xf32>
    %cst_174 = arith.constant dense<0.000000e+00> : vector<2x32xf32>
    %178 = tpu.matmul %174, %1, %cst_174 {dimension_numbers = #tpu.dot_dimension_numbers<[1], [0], [0], [1], [0, 0, 1, 1], [], []>} : vector<2x16xf32>, vector<16x32xf32>, vector<2x32xf32> -> vector<2x32xf32>
    %cst_175 = arith.constant dense<0.000000e+00> : vector<2x32xf32>
    %179 = tpu.matmul %175, %3, %cst_175 {dimension_numbers = #tpu.dot_dimension_numbers<[1], [0], [0], [1], [0, 0, 1, 1], [], []>} : vector<2x16xf32>, vector<16x32xf32>, vector<2x32xf32> -> vector<2x32xf32>
    %180 = arith.addf %178, %179 : vector<2x32xf32>
    %cst_176 = arith.constant dense<0.000000e+00> : vector<2x32xf32>
    %181 = tpu.matmul %176, %1, %cst_176 {dimension_numbers = #tpu.dot_dimension_numbers<[1], [0], [0], [1], [0, 0, 1, 1], [], []>} : vector<2x16xf32>, vector<16x32xf32>, vector<2x32xf32> -> vector<2x32xf32>
    %cst_177 = arith.constant dense<0.000000e+00> : vector<2x32xf32>
    %182 = tpu.matmul %177, %3, %cst_177 {dimension_numbers = #tpu.dot_dimension_numbers<[1], [0], [0], [1], [0, 0, 1, 1], [], []>} : vector<2x16xf32>, vector<16x32xf32>, vector<2x32xf32> -> vector<2x32xf32>
    %183 = arith.addf %181, %182 : vector<2x32xf32>
    %184 = tpu.concatenate %180, %183 in 1 : vector<2x32xf32>, vector<2x32xf32> -> vector<2x64xf32>
    %c0_178 = arith.constant 0 : index
    %c0_179 = arith.constant 0 : index
    %c10_180 = arith.constant 10 : index
    %c0_181 = arith.constant 0 : index
    %185 = vector.load %arg5[%c0_178, %c0_179, %c10_180, %c0_181] : memref<1x2x16x64xf32, #tpu.memory_space<vmem>>, vector<1x2x1x64xf32>
    %186 = vector.shape_cast %185 : vector<1x2x1x64xf32> to vector<2x64xf32>
    %187 = vector.shape_cast %184 : vector<2x64xf32> to vector<1x2x1x64xf32>
    tpu.vector_store %arg5[%c0_178, %c0_179, %c10_180, %c0_181], %187 {strides = array<i32>} : memref<1x2x16x64xf32, #tpu.memory_space<vmem>>, vector<1x2x1x64xf32>,
    %c0_182 = arith.constant 0 : index
    %c0_183 = arith.constant 0 : index
    %c11 = arith.constant 11 : index
    %c0_184 = arith.constant 0 : index
    %188 = vector.load %arg2[%c0_182, %c0_183, %c11, %c0_184] : memref<1x4x16x16xf32, #tpu.memory_space<vmem>>, vector<1x4x1x16xf32>
    %189 = vector.shape_cast %188 : vector<1x4x1x16xf32> to vector<4x16xf32>
    %cst_185 = arith.constant dense<0.000000e+00> : vector<2x16xf32>
    %190 = tpu.matmul %5, %189, %cst_185 {dimension_numbers = #tpu.dot_dimension_numbers<[1], [0], [0], [1], [0, 0, 1, 1], [], []>} : vector<2x4xf32>, vector<4x16xf32>, vector<2x16xf32> -> vector<2x16xf32>
    %cst_186 = arith.constant dense<0.000000e+00> : vector<2x16xf32>
    %191 = tpu.matmul %7, %189, %cst_186 {dimension_numbers = #tpu.dot_dimension_numbers<[1], [0], [0], [1], [0, 0, 1, 1], [], []>} : vector<2x4xf32>, vector<4x16xf32>, vector<2x16xf32> -> vector<2x16xf32>
    %cst_187 = arith.constant dense<0.000000e+00> : vector<2x16xf32>
    %192 = tpu.matmul %9, %189, %cst_187 {dimension_numbers = #tpu.dot_dimension_numbers<[1], [0], [0], [1], [0, 0, 1, 1], [], []>} : vector<2x4xf32>, vector<4x16xf32>, vector<2x16xf32> -> vector<2x16xf32>
    %cst_188 = arith.constant dense<0.000000e+00> : vector<2x16xf32>
    %193 = tpu.matmul %11, %189, %cst_188 {dimension_numbers = #tpu.dot_dimension_numbers<[1], [0], [0], [1], [0, 0, 1, 1], [], []>} : vector<2x4xf32>, vector<4x16xf32>, vector<2x16xf32> -> vector<2x16xf32>
    %cst_189 = arith.constant dense<0.000000e+00> : vector<2x32xf32>
    %194 = tpu.matmul %190, %1, %cst_189 {dimension_numbers = #tpu.dot_dimension_numbers<[1], [0], [0], [1], [0, 0, 1, 1], [], []>} : vector<2x16xf32>, vector<16x32xf32>, vector<2x32xf32> -> vector<2x32xf32>
    %cst_190 = arith.constant dense<0.000000e+00> : vector<2x32xf32>
    %195 = tpu.matmul %191, %3, %cst_190 {dimension_numbers = #tpu.dot_dimension_numbers<[1], [0], [0], [1], [0, 0, 1, 1], [], []>} : vector<2x16xf32>, vector<16x32xf32>, vector<2x32xf32> -> vector<2x32xf32>
    %196 = arith.addf %194, %195 : vector<2x32xf32>
    %cst_191 = arith.constant dense<0.000000e+00> : vector<2x32xf32>
    %197 = tpu.matmul %192, %1, %cst_191 {dimension_numbers = #tpu.dot_dimension_numbers<[1], [0], [0], [1], [0, 0, 1, 1], [], []>} : vector<2x16xf32>, vector<16x32xf32>, vector<2x32xf32> -> vector<2x32xf32>
    %cst_192 = arith.constant dense<0.000000e+00> : vector<2x32xf32>
    %198 = tpu.matmul %193, %3, %cst_192 {dimension_numbers = #tpu.dot_dimension_numbers<[1], [0], [0], [1], [0, 0, 1, 1], [], []>} : vector<2x16xf32>, vector<16x32xf32>, vector<2x32xf32> -> vector<2x32xf32>
    %199 = arith.addf %197, %198 : vector<2x32xf32>
    %200 = tpu.concatenate %196, %199 in 1 : vector<2x32xf32>, vector<2x32xf32> -> vector<2x64xf32>
    %c0_193 = arith.constant 0 : index
    %c0_194 = arith.constant 0 : index
    %c11_195 = arith.constant 11 : index
    %c0_196 = arith.constant 0 : index
    %201 = vector.load %arg5[%c0_193, %c0_194, %c11_195, %c0_196] : memref<1x2x16x64xf32, #tpu.memory_space<vmem>>, vector<1x2x1x64xf32>
    %202 = vector.shape_cast %201 : vector<1x2x1x64xf32> to vector<2x64xf32>
    %203 = vector.shape_cast %200 : vector<2x64xf32> to vector<1x2x1x64xf32>
    tpu.vector_store %arg5[%c0_193, %c0_194, %c11_195, %c0_196], %203 {strides = array<i32>} : memref<1x2x16x64xf32, #tpu.memory_space<vmem>>, vector<1x2x1x64xf32>,
    %c0_197 = arith.constant 0 : index
    %c0_198 = arith.constant 0 : index
    %c12 = arith.constant 12 : index
    %c0_199 = arith.constant 0 : index
    %204 = vector.load %arg2[%c0_197, %c0_198, %c12, %c0_199] : memref<1x4x16x16xf32, #tpu.memory_space<vmem>>, vector<1x4x1x16xf32>
    %205 = vector.shape_cast %204 : vector<1x4x1x16xf32> to vector<4x16xf32>
    %cst_200 = arith.constant dense<0.000000e+00> : vector<2x16xf32>
    %206 = tpu.matmul %5, %205, %cst_200 {dimension_numbers = #tpu.dot_dimension_numbers<[1], [0], [0], [1], [0, 0, 1, 1], [], []>} : vector<2x4xf32>, vector<4x16xf32>, vector<2x16xf32> -> vector<2x16xf32>
    %cst_201 = arith.constant dense<0.000000e+00> : vector<2x16xf32>
    %207 = tpu.matmul %7, %205, %cst_201 {dimension_numbers = #tpu.dot_dimension_numbers<[1], [0], [0], [1], [0, 0, 1, 1], [], []>} : vector<2x4xf32>, vector<4x16xf32>, vector<2x16xf32> -> vector<2x16xf32>
    %cst_202 = arith.constant dense<0.000000e+00> : vector<2x16xf32>
    %208 = tpu.matmul %9, %205, %cst_202 {dimension_numbers = #tpu.dot_dimension_numbers<[1], [0], [0], [1], [0, 0, 1, 1], [], []>} : vector<2x4xf32>, vector<4x16xf32>, vector<2x16xf32> -> vector<2x16xf32>
    %cst_203 = arith.constant dense<0.000000e+00> : vector<2x16xf32>
    %209 = tpu.matmul %11, %205, %cst_203 {dimension_numbers = #tpu.dot_dimension_numbers<[1], [0], [0], [1], [0, 0, 1, 1], [], []>} : vector<2x4xf32>, vector<4x16xf32>, vector<2x16xf32> -> vector<2x16xf32>
    %cst_204 = arith.constant dense<0.000000e+00> : vector<2x32xf32>
    %210 = tpu.matmul %206, %1, %cst_204 {dimension_numbers = #tpu.dot_dimension_numbers<[1], [0], [0], [1], [0, 0, 1, 1], [], []>} : vector<2x16xf32>, vector<16x32xf32>, vector<2x32xf32> -> vector<2x32xf32>
    %cst_205 = arith.constant dense<0.000000e+00> : vector<2x32xf32>
    %211 = tpu.matmul %207, %3, %cst_205 {dimension_numbers = #tpu.dot_dimension_numbers<[1], [0], [0], [1], [0, 0, 1, 1], [], []>} : vector<2x16xf32>, vector<16x32xf32>, vector<2x32xf32> -> vector<2x32xf32>
    %212 = arith.addf %210, %211 : vector<2x32xf32>
    %cst_206 = arith.constant dense<0.000000e+00> : vector<2x32xf32>
    %213 = tpu.matmul %208, %1, %cst_206 {dimension_numbers = #tpu.dot_dimension_numbers<[1], [0], [0], [1], [0, 0, 1, 1], [], []>} : vector<2x16xf32>, vector<16x32xf32>, vector<2x32xf32> -> vector<2x32xf32>
    %cst_207 = arith.constant dense<0.000000e+00> : vector<2x32xf32>
    %214 = tpu.matmul %209, %3, %cst_207 {dimension_numbers = #tpu.dot_dimension_numbers<[1], [0], [0], [1], [0, 0, 1, 1], [], []>} : vector<2x16xf32>, vector<16x32xf32>, vector<2x32xf32> -> vector<2x32xf32>
    %215 = arith.addf %213, %214 : vector<2x32xf32>
    %216 = tpu.concatenate %212, %215 in 1 : vector<2x32xf32>, vector<2x32xf32> -> vector<2x64xf32>
    %c0_208 = arith.constant 0 : index
    %c0_209 = arith.constant 0 : index
    %c12_210 = arith.constant 12 : index
    %c0_211 = arith.constant 0 : index
    %217 = vector.load %arg5[%c0_208, %c0_209, %c12_210, %c0_211] : memref<1x2x16x64xf32, #tpu.memory_space<vmem>>, vector<1x2x1x64xf32>
    %218 = vector.shape_cast %217 : vector<1x2x1x64xf32> to vector<2x64xf32>
    %219 = vector.shape_cast %216 : vector<2x64xf32> to vector<1x2x1x64xf32>
    tpu.vector_store %arg5[%c0_208, %c0_209, %c12_210, %c0_211], %219 {strides = array<i32>} : memref<1x2x16x64xf32, #tpu.memory_space<vmem>>, vector<1x2x1x64xf32>,
    %c0_212 = arith.constant 0 : index
    %c0_213 = arith.constant 0 : index
    %c13 = arith.constant 13 : index
    %c0_214 = arith.constant 0 : index
    %220 = vector.load %arg2[%c0_212, %c0_213, %c13, %c0_214] : memref<1x4x16x16xf32, #tpu.memory_space<vmem>>, vector<1x4x1x16xf32>
    %221 = vector.shape_cast %220 : vector<1x4x1x16xf32> to vector<4x16xf32>
    %cst_215 = arith.constant dense<0.000000e+00> : vector<2x16xf32>
    %222 = tpu.matmul %5, %221, %cst_215 {dimension_numbers = #tpu.dot_dimension_numbers<[1], [0], [0], [1], [0, 0, 1, 1], [], []>} : vector<2x4xf32>, vector<4x16xf32>, vector<2x16xf32> -> vector<2x16xf32>
    %cst_216 = arith.constant dense<0.000000e+00> : vector<2x16xf32>
    %223 = tpu.matmul %7, %221, %cst_216 {dimension_numbers = #tpu.dot_dimension_numbers<[1], [0], [0], [1], [0, 0, 1, 1], [], []>} : vector<2x4xf32>, vector<4x16xf32>, vector<2x16xf32> -> vector<2x16xf32>
    %cst_217 = arith.constant dense<0.000000e+00> : vector<2x16xf32>
    %224 = tpu.matmul %9, %221, %cst_217 {dimension_numbers = #tpu.dot_dimension_numbers<[1], [0], [0], [1], [0, 0, 1, 1], [], []>} : vector<2x4xf32>, vector<4x16xf32>, vector<2x16xf32> -> vector<2x16xf32>
    %cst_218 = arith.constant dense<0.000000e+00> : vector<2x16xf32>
    %225 = tpu.matmul %11, %221, %cst_218 {dimension_numbers = #tpu.dot_dimension_numbers<[1], [0], [0], [1], [0, 0, 1, 1], [], []>} : vector<2x4xf32>, vector<4x16xf32>, vector<2x16xf32> -> vector<2x16xf32>
    %cst_219 = arith.constant dense<0.000000e+00> : vector<2x32xf32>
    %226 = tpu.matmul %222, %1, %cst_219 {dimension_numbers = #tpu.dot_dimension_numbers<[1], [0], [0], [1], [0, 0, 1, 1], [], []>} : vector<2x16xf32>, vector<16x32xf32>, vector<2x32xf32> -> vector<2x32xf32>
    %cst_220 = arith.constant dense<0.000000e+00> : vector<2x32xf32>
    %227 = tpu.matmul %223, %3, %cst_220 {dimension_numbers = #tpu.dot_dimension_numbers<[1], [0], [0], [1], [0, 0, 1, 1], [], []>} : vector<2x16xf32>, vector<16x32xf32>, vector<2x32xf32> -> vector<2x32xf32>
    %228 = arith.addf %226, %227 : vector<2x32xf32>
    %cst_221 = arith.constant dense<0.000000e+00> : vector<2x32xf32>
    %229 = tpu.matmul %224, %1, %cst_221 {dimension_numbers = #tpu.dot_dimension_numbers<[1], [0], [0], [1], [0, 0, 1, 1], [], []>} : vector<2x16xf32>, vector<16x32xf32>, vector<2x32xf32> -> vector<2x32xf32>
    %cst_222 = arith.constant dense<0.000000e+00> : vector<2x32xf32>
    %230 = tpu.matmul %225, %3, %cst_222 {dimension_numbers = #tpu.dot_dimension_numbers<[1], [0], [0], [1], [0, 0, 1, 1], [], []>} : vector<2x16xf32>, vector<16x32xf32>, vector<2x32xf32> -> vector<2x32xf32>
    %231 = arith.addf %229, %230 : vector<2x32xf32>
    %232 = tpu.concatenate %228, %231 in 1 : vector<2x32xf32>, vector<2x32xf32> -> vector<2x64xf32>
    %c0_223 = arith.constant 0 : index
    %c0_224 = arith.constant 0 : index
    %c13_225 = arith.constant 13 : index
    %c0_226 = arith.constant 0 : index
    %233 = vector.load %arg5[%c0_223, %c0_224, %c13_225, %c0_226] : memref<1x2x16x64xf32, #tpu.memory_space<vmem>>, vector<1x2x1x64xf32>
    %234 = vector.shape_cast %233 : vector<1x2x1x64xf32> to vector<2x64xf32>
    %235 = vector.shape_cast %232 : vector<2x64xf32> to vector<1x2x1x64xf32>
    tpu.vector_store %arg5[%c0_223, %c0_224, %c13_225, %c0_226], %235 {strides = array<i32>} : memref<1x2x16x64xf32, #tpu.memory_space<vmem>>, vector<1x2x1x64xf32>,
    %c0_227 = arith.constant 0 : index
    %c0_228 = arith.constant 0 : index
    %c14 = arith.constant 14 : index
    %c0_229 = arith.constant 0 : index
    %236 = vector.load %arg2[%c0_227, %c0_228, %c14, %c0_229] : memref<1x4x16x16xf32, #tpu.memory_space<vmem>>, vector<1x4x1x16xf32>
    %237 = vector.shape_cast %236 : vector<1x4x1x16xf32> to vector<4x16xf32>
    %cst_230 = arith.constant dense<0.000000e+00> : vector<2x16xf32>
    %238 = tpu.matmul %5, %237, %cst_230 {dimension_numbers = #tpu.dot_dimension_numbers<[1], [0], [0], [1], [0, 0, 1, 1], [], []>} : vector<2x4xf32>, vector<4x16xf32>, vector<2x16xf32> -> vector<2x16xf32>
    %cst_231 = arith.constant dense<0.000000e+00> : vector<2x16xf32>
    %239 = tpu.matmul %7, %237, %cst_231 {dimension_numbers = #tpu.dot_dimension_numbers<[1], [0], [0], [1], [0, 0, 1, 1], [], []>} : vector<2x4xf32>, vector<4x16xf32>, vector<2x16xf32> -> vector<2x16xf32>
    %cst_232 = arith.constant dense<0.000000e+00> : vector<2x16xf32>
    %240 = tpu.matmul %9, %237, %cst_232 {dimension_numbers = #tpu.dot_dimension_numbers<[1], [0], [0], [1], [0, 0, 1, 1], [], []>} : vector<2x4xf32>, vector<4x16xf32>, vector<2x16xf32> -> vector<2x16xf32>
    %cst_233 = arith.constant dense<0.000000e+00> : vector<2x16xf32>
    %241 = tpu.matmul %11, %237, %cst_233 {dimension_numbers = #tpu.dot_dimension_numbers<[1], [0], [0], [1], [0, 0, 1, 1], [], []>} : vector<2x4xf32>, vector<4x16xf32>, vector<2x16xf32> -> vector<2x16xf32>
    %cst_234 = arith.constant dense<0.000000e+00> : vector<2x32xf32>
    %242 = tpu.matmul %238, %1, %cst_234 {dimension_numbers = #tpu.dot_dimension_numbers<[1], [0], [0], [1], [0, 0, 1, 1], [], []>} : vector<2x16xf32>, vector<16x32xf32>, vector<2x32xf32> -> vector<2x32xf32>
    %cst_235 = arith.constant dense<0.000000e+00> : vector<2x32xf32>
    %243 = tpu.matmul %239, %3, %cst_235 {dimension_numbers = #tpu.dot_dimension_numbers<[1], [0], [0], [1], [0, 0, 1, 1], [], []>} : vector<2x16xf32>, vector<16x32xf32>, vector<2x32xf32> -> vector<2x32xf32>
    %244 = arith.addf %242, %243 : vector<2x32xf32>
    %cst_236 = arith.constant dense<0.000000e+00> : vector<2x32xf32>
    %245 = tpu.matmul %240, %1, %cst_236 {dimension_numbers = #tpu.dot_dimension_numbers<[1], [0], [0], [1], [0, 0, 1, 1], [], []>} : vector<2x16xf32>, vector<16x32xf32>, vector<2x32xf32> -> vector<2x32xf32>
    %cst_237 = arith.constant dense<0.000000e+00> : vector<2x32xf32>
    %246 = tpu.matmul %241, %3, %cst_237 {dimension_numbers = #tpu.dot_dimension_numbers<[1], [0], [0], [1], [0, 0, 1, 1], [], []>} : vector<2x16xf32>, vector<16x32xf32>, vector<2x32xf32> -> vector<2x32xf32>
    %247 = arith.addf %245, %246 : vector<2x32xf32>
    %248 = tpu.concatenate %244, %247 in 1 : vector<2x32xf32>, vector<2x32xf32> -> vector<2x64xf32>
    %c0_238 = arith.constant 0 : index
    %c0_239 = arith.constant 0 : index
    %c14_240 = arith.constant 14 : index
    %c0_241 = arith.constant 0 : index
    %249 = vector.load %arg5[%c0_238, %c0_239, %c14_240, %c0_241] : memref<1x2x16x64xf32, #tpu.memory_space<vmem>>, vector<1x2x1x64xf32>
    %250 = vector.shape_cast %249 : vector<1x2x1x64xf32> to vector<2x64xf32>
    %251 = vector.shape_cast %248 : vector<2x64xf32> to vector<1x2x1x64xf32>
    tpu.vector_store %arg5[%c0_238, %c0_239, %c14_240, %c0_241], %251 {strides = array<i32>} : memref<1x2x16x64xf32, #tpu.memory_space<vmem>>, vector<1x2x1x64xf32>,
    %c0_242 = arith.constant 0 : index
    %c0_243 = arith.constant 0 : index
    %c15 = arith.constant 15 : index
    %c0_244 = arith.constant 0 : index
    %252 = vector.load %arg2[%c0_242, %c0_243, %c15, %c0_244] : memref<1x4x16x16xf32, #tpu.memory_space<vmem>>, vector<1x4x1x16xf32>
    %253 = vector.shape_cast %252 : vector<1x4x1x16xf32> to vector<4x16xf32>
    %cst_245 = arith.constant dense<0.000000e+00> : vector<2x16xf32>
    %254 = tpu.matmul %5, %253, %cst_245 {dimension_numbers = #tpu.dot_dimension_numbers<[1], [0], [0], [1], [0, 0, 1, 1], [], []>} : vector<2x4xf32>, vector<4x16xf32>, vector<2x16xf32> -> vector<2x16xf32>
    %cst_246 = arith.constant dense<0.000000e+00> : vector<2x16xf32>
    %255 = tpu.matmul %7, %253, %cst_246 {dimension_numbers = #tpu.dot_dimension_numbers<[1], [0], [0], [1], [0, 0, 1, 1], [], []>} : vector<2x4xf32>, vector<4x16xf32>, vector<2x16xf32> -> vector<2x16xf32>
    %cst_247 = arith.constant dense<0.000000e+00> : vector<2x16xf32>
    %256 = tpu.matmul %9, %253, %cst_247 {dimension_numbers = #tpu.dot_dimension_numbers<[1], [0], [0], [1], [0, 0, 1, 1], [], []>} : vector<2x4xf32>, vector<4x16xf32>, vector<2x16xf32> -> vector<2x16xf32>
    %cst_248 = arith.constant dense<0.000000e+00> : vector<2x16xf32>
    %257 = tpu.matmul %11, %253, %cst_248 {dimension_numbers = #tpu.dot_dimension_numbers<[1], [0], [0], [1], [0, 0, 1, 1], [], []>} : vector<2x4xf32>, vector<4x16xf32>, vector<2x16xf32> -> vector<2x16xf32>
    %cst_249 = arith.constant dense<0.000000e+00> : vector<2x32xf32>
    %258 = tpu.matmul %254, %1, %cst_249 {dimension_numbers = #tpu.dot_dimension_numbers<[1], [0], [0], [1], [0, 0, 1, 1], [], []>} : vector<2x16xf32>, vector<16x32xf32>, vector<2x32xf32> -> vector<2x32xf32>
    %cst_250 = arith.constant dense<0.000000e+00> : vector<2x32xf32>
    %259 = tpu.matmul %255, %3, %cst_250 {dimension_numbers = #tpu.dot_dimension_numbers<[1], [0], [0], [1], [0, 0, 1, 1], [], []>} : vector<2x16xf32>, vector<16x32xf32>, vector<2x32xf32> -> vector<2x32xf32>
    %260 = arith.addf %258, %259 : vector<2x32xf32>
    %cst_251 = arith.constant dense<0.000000e+00> : vector<2x32xf32>
    %261 = tpu.matmul %256, %1, %cst_251 {dimension_numbers = #tpu.dot_dimension_numbers<[1], [0], [0], [1], [0, 0, 1, 1], [], []>} : vector<2x16xf32>, vector<16x32xf32>, vector<2x32xf32> -> vector<2x32xf32>
    %cst_252 = arith.constant dense<0.000000e+00> : vector<2x32xf32>
    %262 = tpu.matmul %257, %3, %cst_252 {dimension_numbers = #tpu.dot_dimension_numbers<[1], [0], [0], [1], [0, 0, 1, 1], [], []>} : vector<2x16xf32>, vector<16x32xf32>, vector<2x32xf32> -> vector<2x32xf32>
    %263 = arith.addf %261, %262 : vector<2x32xf32>
    %264 = tpu.concatenate %260, %263 in 1 : vector<2x32xf32>, vector<2x32xf32> -> vector<2x64xf32>
    %c0_253 = arith.constant 0 : index
    %c0_254 = arith.constant 0 : index
    %c15_255 = arith.constant 15 : index
    %c0_256 = arith.constant 0 : index
    %265 = vector.load %arg5[%c0_253, %c0_254, %c15_255, %c0_256] : memref<1x2x16x64xf32, #tpu.memory_space<vmem>>, vector<1x2x1x64xf32>
    %266 = vector.shape_cast %265 : vector<1x2x1x64xf32> to vector<2x64xf32>
    %267 = vector.shape_cast %264 : vector<2x64xf32> to vector<1x2x1x64xf32>
    tpu.vector_store %arg5[%c0_253, %c0_254, %c15_255, %c0_256], %267 {strides = array<i32>} : memref<1x2x16x64xf32, #tpu.memory_space<vmem>>, vector<1x2x1x64xf32>,
    return
  }
  func.func @transform_0(%arg0: i32, %arg1: i32) -> (i32, i32, i32, i32) {
    %c0_i32 = arith.constant 0 : i32
    %c0_i32_0 = arith.constant 0 : i32
    %c0_i32_1 = arith.constant 0 : i32
    return %arg0, %c0_i32, %arg1, %c0_i32_0 : i32, i32, i32, i32
  }
  func.func @transform_1(%arg0: i32, %arg1: i32) -> (i32, i32, i32) {
    %c0_i32 = arith.constant 0 : i32
    %c0_i32_0 = arith.constant 0 : i32
    %c0_i32_1 = arith.constant 0 : i32
    %c0_i32_2 = arith.constant 0 : i32
    return %c0_i32, %c0_i32_0, %c0_i32_1 : i32, i32, i32
  }
  func.func @transform_2(%arg0: i32, %arg1: i32) -> (i32, i32, i32) {
    %c0_i32 = arith.constant 0 : i32
    %c0_i32_0 = arith.constant 0 : i32
    %c0_i32_1 = arith.constant 0 : i32
    %c0_i32_2 = arith.constant 0 : i32
    return %c0_i32, %c0_i32_0, %c0_i32_1 : i32, i32, i32
  }
  func.func @transform_3(%arg0: i32, %arg1: i32) -> (i32, i32, i32, i32) {
    %c0_i32 = arith.constant 0 : i32
    %c0_i32_0 = arith.constant 0 : i32
    %c0_i32_1 = arith.constant 0 : i32
    return %arg0, %c0_i32, %arg1, %c0_i32_0 : i32, i32, i32, i32
  }
}

</mosaic_0001>

<llo_original>
// kernel: tpu_custom_call.1
$region0: #{tpu_custom_call.1}
  #allocation0 [shape = 'u32[]', space=smem, size = 0x4, offset = 0x4, fixed_abs, tag = 'smem constant byte address 0x4 - core index']
  #allocation1 [shape = 'u32[72,128]{1,0:T(1,128)}', space=vmem, size = 0x9000, scoped, tag = 'internal scratch']
  %s0 = inlined_call_operand.hbm [shape: f32[2,4,16,16], index: 0, kind: input, shape index: {}]
  %s1 = inlined_call_operand.hbm [shape: f32[4,2,4], index: 1, kind: input, shape index: {}]
  %s2 = inlined_call_operand.hbm [shape: f32[2,16,32], index: 2, kind: input, shape index: {}]
  %s3 = inlined_call_operand.hbm [shape: f32[2,2,16,64], index: 3, kind: output, shape index: {}]
  %s4 = sld [smem:[#allocation0]]
  $region57: #{tpu_custom_call.1} parent=0
    _
  %s6 = ssub.s32 1, %s4
  %s7 = scalar_select 0, %s6, %s4
  $region1: #{tpu_custom_call.1} parent=0
    #allocation2 [shape = 'u8[65536]{0}', space=vmem, size = 0x10000, scoped, tag = 'input window, operand 0']
    #allocation3 [shape = 's32[2]{0}', space=sflag, size = 0x8, scoped, tag = 'scoped memory for tpu_custom_call.1']
    #allocation4 [shape = 's32[2]{0}', space=sflag, size = 0x8, scoped, tag = 'scoped memory for tpu_custom_call.1']
    #allocation5 [shape = 'u8[4096]{0}', space=vmem, size = 0x1000, scoped, tag = 'input window, operand 1, single buffered']
    #allocation6 [shape = 's32[1]{0}', space=sflag, size = 0x4, scoped, tag = 'scoped memory for tpu_custom_call.1']
    #allocation7 [shape = 'u8[16384]{0}', space=vmem, size = 0x4000, scoped, tag = 'input window, operand 2, single buffered']
    #allocation8 [shape = 'u8[32768]{0}', space=vmem, size = 0x8000, scoped, tag = 'output window, operand 0']
    %8 = vsyncpa [#allocation3], 0
    %s9 = scalar_lea.sflag [#allocation3], 1
    %10 = vsyncpa %s9, 0
    %11 = vsyncpa [#allocation6], 0
    %12 = vsyncpa [#allocation4], 0
    %s13 = scalar_lea.sflag [#allocation4], 1
    %14 = vsyncpa %s13, 0
    loop: start=0, step=1, limit=4
    $region2: #{tpu_custom_call.1} parent=1 // loop_pre_header
      _
    $region3: #{tpu_custom_call.1} parent=1 // loop_header
      %s16 = sphi 0, %s20
      %p17 = scmp.ge.s32.totalorder %s16, 4
      %s23 = sphi 0, %s35
      %s24 = sphi 0, %s31
      %s25 = sphi 0, %s23
      %s26 = sphi 0, %s24
      %s27 = sphi 0, %s25
      %s28 = sphi 0, %s26
      %s40 = sphi 0, %s42
      %s43 = sphi 0, %s40
      %s44 = sphi 0, %s43
      %s60 = sphi 0, %s44
      %s64 = sphi 0, %s64
      %s66 = sphi 0, %s64
      %s67 = sphi 0, %s66
      %s81 = sphi 0, %s67
      %s85 = sphi 0, %s85
      %s87 = sphi 0, %s85
      %s88 = sphi 0, %s87
      %s102 = sphi 0, %s88
      %s110 = sphi 0, %s112
      %s113 = sphi 0, %s110
      %s114 = sphi 0, %s113
      %s130 = sphi 0, %s114
    $region4: #{tpu_custom_call.1} parent=1 // loop_header_branch
      %19 = sbr.rel (%p17) target = $region8
    $region5: #{tpu_custom_call.1} parent=1 // loop_body
      %s21 = ssub.s32 %s16, 1
      %s22 = ssub.s32 %s16, 2
      %s29 = sadd.s32 1, %s24
      %p30 = scmp.ge.s32.totalorder %s29, 1
      %s31 = scalar_select %p30, 0, %s29
      %s32 = sadd.s32 1, %s23
      %s33 = scalar_select %p30, %s32, %s23
      %p34 = scmp.ge.s32.totalorder %s33, 2
      %s35 = scalar_select %p34, 0, %s33
      %s36 = ssub.s32 %s23, %s35
      %s37 = ssub.s32 %s24, %s31
      %s38 = sor.u32 %s36, %s37
      %p39 = scmp.eq.s32.totalorder %s38, 0
      %s41 = sadd.s32 %s40, 1
      %s42 = scalar_select %p39, %s40, %s41
      %p45 = pneg %p39
      %p46 = scmp.eq.s32.totalorder %s16, 1
      %p47 = por %p45, %p46
      %p48 = scmp.ne.s32.totalorder %s40, %s43
      %p49 = scmp.eq.s32.totalorder %s16, 0
      %p50 = por %p48, %p49
      %p51 = scmp.ne.s32.totalorder %s40, %s43
      %p52 = scmp.eq.s32.totalorder %s21, 1
      %p53 = por %p51, %p52
      %p54 = scmp.ne.s32.totalorder %s43, %s44
      %p55 = scmp.eq.s32.totalorder %s21, 0
      %p56 = por %p54, %p55
      %p57 = scmp.ne.s32.totalorder %s43, %s44
      %p58 = scmp.eq.s32.totalorder %s22, 1
      %p59 = por %p57, %p58
      %p61 = scmp.ne.s32.totalorder %s44, %s60
      %p62 = scmp.eq.s32.totalorder %s22, 0
      %p63 = por %p61, %p62
      %s65 = sadd.s32 %s64, 1
      %p68 = scmp.eq.s32.totalorder %s16, 1
      %p69 = scmp.ne.s32.totalorder %s64, %s66
      %p70 = scmp.eq.s32.totalorder %s16, 0
      %p71 = por %p69, %p70
      %p72 = scmp.ne.s32.totalorder %s64, %s66
      %p73 = scmp.eq.s32.totalorder %s21, 1
      %p74 = por %p72, %p73
      %p75 = scmp.ne.s32.totalorder %s66, %s67
      %p76 = scmp.eq.s32.totalorder %s21, 0
      %p77 = por %p75, %p76
      %p78 = scmp.ne.s32.totalorder %s66, %s67
      %p79 = scmp.eq.s32.totalorder %s22, 1
      %p80 = por %p78, %p79
      %p82 = scmp.ne.s32.totalorder %s67, %s81
      %p83 = scmp.eq.s32.totalorder %s22, 0
      %p84 = por %p82, %p83
      %s86 = sadd.s32 %s85, 1
      %p89 = scmp.eq.s32.totalorder %s16, 1
      %p90 = scmp.ne.s32.totalorder %s85, %s87
      %p91 = scmp.eq.s32.totalorder %s16, 0
      %p92 = por %p90, %p91
      %p93 = scmp.ne.s32.totalorder %s85, %s87
      %p94 = scmp.eq.s32.totalorder %s21, 1
      %p95 = por %p93, %p94
      %p96 = scmp.ne.s32.totalorder %s87, %s88
      %p97 = scmp.eq.s32.totalorder %s21, 0
      %p98 = por %p96, %p97
      %p99 = scmp.ne.s32.totalorder %s87, %s88
      %p100 = scmp.eq.s32.totalorder %s22, 1
      %p101 = por %p99, %p100
      %p103 = scmp.ne.s32.totalorder %s88, %s102
      %p104 = scmp.eq.s32.totalorder %s22, 0
      %p105 = por %p103, %p104
      %s106 = ssub.s32 %s23, %s35
      %s107 = ssub.s32 %s24, %s31
      %s108 = sor.u32 %s106, %s107
      %p109 = scmp.eq.s32.totalorder %s108, 0
      %s111 = sadd.s32 %s110, 1
      %s112 = scalar_select %p109, %s110, %s111
      %p115 = pneg %p109
      %p116 = scmp.eq.s32.totalorder %s16, 1
      %p117 = por %p115, %p116
      %p118 = scmp.ne.s32.totalorder %s110, %s113
      %p119 = scmp.eq.s32.totalorder %s16, 0
      %p120 = por %p118, %p119
      %p121 = scmp.ne.s32.totalorder %s110, %s113
      %p122 = scmp.eq.s32.totalorder %s21, 1
      %p123 = por %p121, %p122
      %p124 = scmp.ne.s32.totalorder %s113, %s114
      %p125 = scmp.eq.s32.totalorder %s21, 0
      %p126 = por %p124, %p125
      %p127 = scmp.ne.s32.totalorder %s113, %s114
      %p128 = scmp.eq.s32.totalorder %s22, 1
      %p129 = por %p127, %p128
      %p131 = scmp.ne.s32.totalorder %s114, %s130
      %p132 = scmp.eq.s32.totalorder %s22, 0
      %p133 = por %p131, %p132
      %p134 = scmp.le.s32.totalorder 1, %s16
      %p135 = scmp.lt.s32.totalorder %s16, 3
      %p136 = pnand %p134, %p135
      %p137 = pneg %p136
      // Predicated region
      $region9: #{tpu_custom_call.1} parent=5 // pred_check
        _
      $region10: #{tpu_custom_call.1} parent=5 // pred_check_branch
        %139 = sbr.rel (%p136) target = $region12
      $region11: #{tpu_custom_call.1} parent=5 // pred_region
        %s140 = ssub.s32 %s16, 1
        // Predicated region
        $region13: #{tpu_custom_call.1} parent=11 // pred_check
          %p141 = pneg %p77
        $region14: #{tpu_custom_call.1} parent=11 // pred_check_branch
          %143 = sbr.rel (%p141) target = $region16
        $region15: #{tpu_custom_call.1} parent=11 // pred_region
          %145 = vsyncadd [#allocation6], 0
          %s146 = sshll.u32 %s1, 4
          %s147 = int_to_ptr.hbm [resolvable:$true] %s146
          %s148 = sshll.u32 [#allocation5], 4
          %s149 = int_to_ptr.vmem [resolvable:$true] %s148
          %154 = dma.hbm_to_vmem [thread:$0]  %s147, 128, %s149, [#allocation6], 32, 32, 2
        $region16: #{tpu_custom_call.1} parent=11 // pred_fallthru
          _
        // Predicated region
        $region17: #{tpu_custom_call.1} parent=11 // pred_check
          %p155 = pneg %p98
        $region18: #{tpu_custom_call.1} parent=11 // pred_check_branch
          %157 = sbr.rel (%p155) target = $region20
        $region19: #{tpu_custom_call.1} parent=11 // pred_region
          %159 = vsyncadd [#allocation6], 0
          %s160 = sshll.u32 %s2, 4
          %s161 = int_to_ptr.hbm [resolvable:$true] %s160
          %s162 = sshll.u32 [#allocation7], 4
          %s163 = int_to_ptr.vmem [resolvable:$true] %s162
          %168 = dma.hbm_to_vmem [thread:$0]  %s161, 512, %s163, [#allocation6], 128, 128, 8
        $region20: #{tpu_custom_call.1} parent=11 // pred_fallthru
          _
      $region12: #{tpu_custom_call.1} parent=5 // pred_fallthru
        _
      %p169 = scmp.lt.s32.totalorder %s16, 2
      // Predicated region
      $region21: #{tpu_custom_call.1} parent=5 // pred_check
        %p170 = pneg %p169
      $region22: #{tpu_custom_call.1} parent=5 // pred_check_branch
        %172 = sbr.rel (%p170) target = $region24
      $region23: #{tpu_custom_call.1} parent=5 // pred_region
        // Predicated region
        $region25: #{tpu_custom_call.1} parent=23 // pred_check
          %p173 = pneg %p50
        $region26: #{tpu_custom_call.1} parent=23 // pred_check_branch
          %175 = sbr.rel (%p173) target = $region28
        $region27: #{tpu_custom_call.1} parent=23 // pred_region
          %s176 = sand.u32 %s40, 1
          %s177 = scalar_lea.sflag [#allocation3], %s176
          %s178 = sand.u32 %s40, 1
          %s179 = smul.addr %s178, 64
          %s180 = scalar_lea.vmem [#allocation2], %s179
          %s181 = smul.u32 2, %s24
          %183 = vsyncadd %s177, 0
          %s184 = smul.addr %s23, 8
          %s185 = sadd.s32 %s181, %s184
          %s186 = smul.addr %s185, 8
          %s187 = scalar_lea.hbm %s0, %s186
          %s188 = sshll.u32 %s187, 4
          %s189 = int_to_ptr.hbm [resolvable:$true] %s188
          %s190 = sshll.u32 %s180, 4
          %s191 = int_to_ptr.vmem [resolvable:$true] %s190
          %196 = dma.hbm_to_vmem [thread:$0]  %s189, 1024, %s191, %s177, 128, 128, 8
        $region28: #{tpu_custom_call.1} parent=23 // pred_fallthru
          _
      $region24: #{tpu_custom_call.1} parent=5 // pred_fallthru
        _
      %p197 = scmp.le.s32.totalorder 1, %s16
      %p198 = scmp.lt.s32.totalorder %s16, 3
      %p199 = pnand %p197, %p198
      %p200 = pneg %p199
      // Predicated region
      $region29: #{tpu_custom_call.1} parent=5 // pred_check
        _
      $region30: #{tpu_custom_call.1} parent=5 // pred_check_branch
        %202 = sbr.rel (%p199) target = $region32
      $region31: #{tpu_custom_call.1} parent=5 // pred_region
        %s203 = ssub.s32 %s16, 1
        %s204 = sand.u32 %s43, 1
        %s205 = scalar_lea.sflag [#allocation3], %s204
        %s206 = sand.u32 %s43, 1
        %s207 = smul.addr %s206, 64
        %s208 = scalar_lea.vmem [#allocation2], %s207
        // Predicated region
        $region33: #{tpu_custom_call.1} parent=31 // pred_check
          %p209 = pneg %p56
        $region34: #{tpu_custom_call.1} parent=31 // pred_check_branch
          %211 = sbr.rel (%p209) target = $region36
        $region35: #{tpu_custom_call.1} parent=31 // pred_region
          %213 = dma.done %s205, 1024
        $region36: #{tpu_custom_call.1} parent=31 // pred_fallthru
          _
        // Predicated region
        $region37: #{tpu_custom_call.1} parent=31 // pred_check
          %p214 = pneg %p77
        $region38: #{tpu_custom_call.1} parent=31 // pred_check_branch
          %216 = sbr.rel (%p214) target = $region40
        $region39: #{tpu_custom_call.1} parent=31 // pred_region
          %218 = dma.done [#allocation6], 128
        $region40: #{tpu_custom_call.1} parent=31 // pred_fallthru
          _
        // Predicated region
        $region41: #{tpu_custom_call.1} parent=31 // pred_check
          %p219 = pneg %p98
        $region42: #{tpu_custom_call.1} parent=31 // pred_check_branch
          %221 = sbr.rel (%p219) target = $region44
        $region43: #{tpu_custom_call.1} parent=31 // pred_region
          %223 = dma.done [#allocation6], 512
        $region44: #{tpu_custom_call.1} parent=31 // pred_fallthru
          _
        %s224 = sand.u32 %s43, 1
        %s225 = scalar_lea.sflag [#allocation3], %s224
        %s226 = sand.u32 %s43, 1
        %s227 = smul.addr %s226, 64
        %s228 = scalar_lea.vmem [#allocation2], %s227
        %p229 = pneg %p56
        %p230 = pneg %p53
        %p231 = pneg %p77
        %p232 = pneg %p74
        %p233 = pneg %p98
        %p234 = pneg %p95
        %p235 = pneg %p126
        %p236 = pneg %p123
        %s237 = sand.u32 %s113, 1
        %s238 = scalar_lea.sflag [#allocation4], %s237
        %s239 = sand.u32 %s113, 1
        %s240 = smul.addr %s239, 32
        %s241 = scalar_lea.vmem [#allocation8], %s240
        %s242 = smul.u32 2, %s26
        %s243 = smul.u32 2, %s26
        %v244 = vld [vmem:[#allocation7] sm:$0xff]
        %v245 = vld [vmem:[#allocation7 + $0x8] sm:$0xff]
        %s246 = scalar_lea.vmem [#allocation7], 16
        %v247 = vld [vmem:[%s246] sm:$0xff]
        %v248 = vld [vmem:[%s246 + $0x8] sm:$0xff]
        %v249 = vld [vmem:[#allocation5] sm:$0x3]
        %s250 = scalar_lea.vmem [#allocation5], 2
        %v251 = vld [vmem:[%s250] sm:$0x3]
        %s252 = scalar_lea.vmem [#allocation5], 4
        %v253 = vld [vmem:[%s252] sm:$0x3]
        %s254 = scalar_lea.vmem [#allocation5], 6
        %v255 = vld [vmem:[%s254] sm:$0x3]
        %v256 = vld [vmem:[%s208] sm:$0x1]
        %v257 = vld [vmem:[%s208 + $0x10] sm:$0x1]
        %v258 = vld [vmem:[%s208 + $0x20] sm:$0x1]
        %v259 = vld [vmem:[%s208 + $0x30] sm:$0x1]
        %v264 = vrot.slane %v257, 7
        %vm265 = vcmask 1041409
        %v266 = vsel %vm265, %v264, %v256
        %v267 = vrot.slane %v258, 6
        %vm268 = vcmask 1042434
        %v269 = vsel %vm268, %v267, %v266
        %v270 = vrot.slane %v259, 5
        %vm271 = vcmask 1043459
        %v272 = vsel %vm271, %v270, %v269
        %vm273 = vcmask 31744
        %v275 = vsel %vm273, %v249, 0
        %vm277 = vcmask 1043456
        %v278 = vsel %vm277, %v272, 0
        %280 = vmatpush.msra.mxu0 0.0
        %281 = vmatpush.msra.mxu0 0.0
        %282 = vmatpush.msra.mxu0 0.0
        %283 = vmatpush.msra.mxu0 0.0
        %284 = vmatpush.msra.mxu0 0.0
        %285 = vmatpush.msra.mxu0 0.0
        %286 = vmatpush.msra.mxu0 0.0
        %287 = vmatpush.msra.mxu0 0.0
        %288 = vmatpush.msra.mxu0 0.0
        %289 = vmatpush.msra.mxu0 0.0
        %290 = vmatpush.msra.mxu0 0.0
        %291 = vmatpush.msra.mxu0 0.0
        %292 = vmatpush.msra.mxu0 0.0
        %293 = vmatpush.msra.mxu0 0.0
        %294 = vmatpush.msra.mxu0 0.0
        %295 = vmatpush.msra.mxu0 %v278
        %296 = vmatmul.f32.gmra.mxu0 %v275
        %v297 = vpop.f32.mrf.mxu0
        %v298 = vadd.f32 0.0, %v297
        %299 = vdwg.mxu0
        %v301 = vsel %vm273, %v251, 0
        %303 = vmatpush.msra.mxu0 0.0
        %304 = vmatpush.msra.mxu0 0.0
        %305 = vmatpush.msra.mxu0 0.0
        %306 = vmatpush.msra.mxu0 0.0
        %307 = vmatpush.msra.mxu0 0.0
        %308 = vmatpush.msra.mxu0 0.0
        %309 = vmatpush.msra.mxu0 0.0
        %310 = vmatpush.msra.mxu0 0.0
        %311 = vmatpush.msra.mxu0 0.0
        %312 = vmatpush.msra.mxu0 0.0
        %313 = vmatpush.msra.mxu0 0.0
        %314 = vmatpush.msra.mxu0 0.0
        %315 = vmatpush.msra.mxu0 0.0
        %316 = vmatpush.msra.mxu0 0.0
        %317 = vmatpush.msra.mxu0 0.0
        %318 = vmatpush.msra.mxu0 %v278
        %319 = vmatmul.f32.gmra.mxu0 %v301
        %v320 = vpop.f32.mrf.mxu0
        %v321 = vadd.f32 0.0, %v320
        %322 = vdwg.mxu0
        %v324 = vsel %vm273, %v253, 0
        %326 = vmatpush.msra.mxu0 0.0
        %327 = vmatpush.msra.mxu0 0.0
        %328 = vmatpush.msra.mxu0 0.0
        %329 = vmatpush.msra.mxu0 0.0
        %330 = vmatpush.msra.mxu0 0.0
        %331 = vmatpush.msra.mxu0 0.0
        %332 = vmatpush.msra.mxu0 0.0
        %333 = vmatpush.msra.mxu0 0.0
        %334 = vmatpush.msra.mxu0 0.0
        %335 = vmatpush.msra.mxu0 0.0
        %336 = vmatpush.msra.mxu0 0.0
        %337 = vmatpush.msra.mxu0 0.0
        %338 = vmatpush.msra.mxu0 0.0
        %339 = vmatpush.msra.mxu0 0.0
        %340 = vmatpush.msra.mxu0 0.0
        %341 = vmatpush.msra.mxu0 %v278
        %342 = vmatmul.f32.gmra.mxu0 %v324
        %v343 = vpop.f32.mrf.mxu0
        %v344 = vadd.f32 0.0, %v343
        %345 = vdwg.mxu0
        %v347 = vsel %vm273, %v255, 0
        %349 = vmatpush.msra.mxu0 0.0
        %350 = vmatpush.msra.mxu0 0.0
        %351 = vmatpush.msra.mxu0 0.0
        %352 = vmatpush.msra.mxu0 0.0
        %353 = vmatpush.msra.mxu0 0.0
        %354 = vmatpush.msra.mxu0 0.0
        %355 = vmatpush.msra.mxu0 0.0
        %356 = vmatpush.msra.mxu0 0.0
        %357 = vmatpush.msra.mxu0 0.0
        %358 = vmatpush.msra.mxu0 0.0
        %359 = vmatpush.msra.mxu0 0.0
        %360 = vmatpush.msra.mxu0 0.0
        %361 = vmatpush.msra.mxu0 0.0
        %362 = vmatpush.msra.mxu0 0.0
        %363 = vmatpush.msra.mxu0 0.0
        %364 = vmatpush.msra.mxu0 %v278
        %365 = vmatmul.f32.gmra.mxu0 %v347
        %v366 = vpop.f32.mrf.mxu0
        %v367 = vadd.f32 0.0, %v366
        %368 = vdwg.mxu0
        %vm369 = vcmask 130048
        %v371 = vsel %vm369, %v321, 0
        %373 = vmatpush.msra.mxu0 0.0
        %374 = vmatpush.msra.mxu0 0.0
        %375 = vmatpush.msra.mxu0 0.0
        %376 = vmatpush.msra.mxu0 0.0
        %377 = vmatpush.msra.mxu0 0.0
        %378 = vmatpush.msra.mxu0 0.0
        %379 = vmatpush.msra.mxu0 0.0
        %380 = vmatpush.msra.mxu0 0.0
        %381 = vmatpush.msra.mxu0 0.0
        %382 = vmatpush.msra.mxu0 0.0
        %383 = vmatpush.msra.mxu0 0.0
        %384 = vmatpush.msra.mxu0 0.0
        %385 = vmatpush.msra.mxu0 0.0
        %386 = vmatpush.msra.mxu0 0.0
        %387 = vmatpush.msra.mxu0 %v248
        %388 = vmatpush.msra.mxu0 %v247
        %389 = vmatmul.f32.gmra.mxu0 %v371
        %v390 = vpop.f32.mrf.mxu0
        %v391 = vadd.f32 0.0, %v390
        %392 = vdwg.mxu0
        %v394 = vsel %vm369, %v298, 0
        %396 = vmatpush.msra.mxu0 0.0
        %397 = vmatpush.msra.mxu0 0.0
        %398 = vmatpush.msra.mxu0 0.0
        %399 = vmatpush.msra.mxu0 0.0
        %400 = vmatpush.msra.mxu0 0.0
        %401 = vmatpush.msra.mxu0 0.0
        %402 = vmatpush.msra.mxu0 0.0
        %403 = vmatpush.msra.mxu0 0.0
        %404 = vmatpush.msra.mxu0 0.0
        %405 = vmatpush.msra.mxu0 0.0
        %406 = vmatpush.msra.mxu0 0.0
        %407 = vmatpush.msra.mxu0 0.0
        %408 = vmatpush.msra.mxu0 0.0
        %409 = vmatpush.msra.mxu0 0.0
        %410 = vmatpush.msra.mxu0 %v245
        %411 = vmatpush.msra.mxu0 %v244
        %412 = vmatmul.f32.gmra.mxu0 %v394
        %v413 = vpop.f32.mrf.mxu0
        %v414 = vadd.f32 %v391, %v413
        %415 = vdwg.mxu0
        %v417 = vsel %vm369, %v367, 0
        %419 = vmatpush.msra.mxu0 0.0
        %420 = vmatpush.msra.mxu0 0.0
        %421 = vmatpush.msra.mxu0 0.0
        %422 = vmatpush.msra.mxu0 0.0
        %423 = vmatpush.msra.mxu0 0.0
        %424 = vmatpush.msra.mxu0 0.0
        %425 = vmatpush.msra.mxu0 0.0
        %426 = vmatpush.msra.mxu0 0.0
        %427 = vmatpush.msra.mxu0 0.0
        %428 = vmatpush.msra.mxu0 0.0
        %429 = vmatpush.msra.mxu0 0.0
        %430 = vmatpush.msra.mxu0 0.0
        %431 = vmatpush.msra.mxu0 0.0
        %432 = vmatpush.msra.mxu0 0.0
        %433 = vmatpush.msra.mxu0 %v248
        %434 = vmatpush.msra.mxu0 %v247
        %435 = vmatmul.f32.gmra.mxu0 %v417
        %v436 = vpop.f32.mrf.mxu0
        %v437 = vadd.f32 0.0, %v436
        %438 = vdwg.mxu0
        %v440 = vsel %vm369, %v344, 0
        %442 = vmatpush.msra.mxu0 0.0
        %443 = vmatpush.msra.mxu0 0.0
        %444 = vmatpush.msra.mxu0 0.0
        %445 = vmatpush.msra.mxu0 0.0
        %446 = vmatpush.msra.mxu0 0.0
        %447 = vmatpush.msra.mxu0 0.0
        %448 = vmatpush.msra.mxu0 0.0
        %449 = vmatpush.msra.mxu0 0.0
        %450 = vmatpush.msra.mxu0 0.0
        %451 = vmatpush.msra.mxu0 0.0
        %452 = vmatpush.msra.mxu0 0.0
        %453 = vmatpush.msra.mxu0 0.0
        %454 = vmatpush.msra.mxu0 0.0
        %455 = vmatpush.msra.mxu0 0.0
        %456 = vmatpush.msra.mxu0 %v245
        %457 = vmatpush.msra.mxu0 %v244
        %458 = vmatmul.f32.gmra.mxu0 %v440
        %v459 = vpop.f32.mrf.mxu0
        %v460 = vadd.f32 %v437, %v459
        %461 = vdwg.mxu0
        %463 = vrot.lane.b32.xlu0 %v460, 32
        %v464 = vpop.permute.xlu0 %463
        %vm466 = vcmask 261120
        %v467 = vsel %vm466, %v414, %v464
        %v469 = vrot.slane %v467, 1
        %vm471 = vcmask 516096
        %472 = vst.msk [vmem:[%s241] sm:$0x1] %vm471, %v467
        %473 = vst.msk [vmem:[%s241 + $0x10] sm:$0x1] %vm471, %v469
        %v474 = vld [vmem:[%s208 + $0x1] sm:$0x1]
        %v475 = vld [vmem:[%s208 + $0x11] sm:$0x1]
        %v476 = vld [vmem:[%s208 + $0x21] sm:$0x1]
        %v477 = vld [vmem:[%s208 + $0x31] sm:$0x1]
        %v482 = vrot.slane %v475, 7
        %v483 = vsel %vm265, %v482, %v474
        %v484 = vrot.slane %v476, 6
        %v485 = vsel %vm268, %v484, %v483
        %v486 = vrot.slane %v477, 5
        %v487 = vsel %vm271, %v486, %v485
        %v488 = vsel %vm277, %v487, 0
        %490 = vmatpush.msra.mxu0 0.0
        %491 = vmatpush.msra.mxu0 0.0
        %492 = vmatpush.msra.mxu0 0.0
        %493 = vmatpush.msra.mxu0 0.0
        %494 = vmatpush.msra.mxu0 0.0
        %495 = vmatpush.msra.mxu0 0.0
        %496 = vmatpush.msra.mxu0 0.0
        %497 = vmatpush.msra.mxu0 0.0
        %498 = vmatpush.msra.mxu0 0.0
        %499 = vmatpush.msra.mxu0 0.0
        %500 = vmatpush.msra.mxu0 0.0
        %501 = vmatpush.msra.mxu0 0.0
        %502 = vmatpush.msra.mxu0 0.0
        %503 = vmatpush.msra.mxu0 0.0
        %504 = vmatpush.msra.mxu0 0.0
        %505 = vmatpush.msra.mxu0 %v488
        %506 = vmatmul.f32.gmra.mxu0 %v275
        %v507 = vpop.f32.mrf.mxu0
        %v508 = vadd.f32 0.0, %v507
        %509 = vdwg.mxu0
        %510 = vmatpush.msra.mxu0 0.0
        %511 = vmatpush.msra.mxu0 0.0
        %512 = vmatpush.msra.mxu0 0.0
        %513 = vmatpush.msra.mxu0 0.0
        %514 = vmatpush.msra.mxu0 0.0
        %515 = vmatpush.msra.mxu0 0.0
        %516 = vmatpush.msra.mxu0 0.0
        %517 = vmatpush.msra.mxu0 0.0
        %518 = vmatpush.msra.mxu0 0.0
        %519 = vmatpush.msra.mxu0 0.0
        %520 = vmatpush.msra.mxu0 0.0
        %521 = vmatpush.msra.mxu0 0.0
        %522 = vmatpush.msra.mxu0 0.0
        %523 = vmatpush.msra.mxu0 0.0
        %524 = vmatpush.msra.mxu0 0.0
        %525 = vmatpush.msra.mxu0 %v488
        %526 = vmatmul.f32.gmra.mxu0 %v301
        %v527 = vpop.f32.mrf.mxu0
        %v528 = vadd.f32 0.0, %v527
        %529 = vdwg.mxu0
        %530 = vmatpush.msra.mxu0 0.0
        %531 = vmatpush.msra.mxu0 0.0
        %532 = vmatpush.msra.mxu0 0.0
        %533 = vmatpush.msra.mxu0 0.0
        %534 = vmatpush.msra.mxu0 0.0
        %535 = vmatpush.msra.mxu0 0.0
        %536 = vmatpush.msra.mxu0 0.0
        %537 = vmatpush.msra.mxu0 0.0
        %538 = vmatpush.msra.mxu0 0.0
        %539 = vmatpush.msra.mxu0 0.0
        %540 = vmatpush.msra.mxu0 0.0
        %541 = vmatpush.msra.mxu0 0.0
        %542 = vmatpush.msra.mxu0 0.0
        %543 = vmatpush.msra.mxu0 0.0
        %544 = vmatpush.msra.mxu0 0.0
        %545 = vmatpush.msra.mxu0 %v488
        %546 = vmatmul.f32.gmra.mxu0 %v324
        %v547 = vpop.f32.mrf.mxu0
        %v548 = vadd.f32 0.0, %v547
        %549 = vdwg.mxu0
        %550 = vmatpush.msra.mxu0 0.0
        %551 = vmatpush.msra.mxu0 0.0
        %552 = vmatpush.msra.mxu0 0.0
        %553 = vmatpush.msra.mxu0 0.0
        %554 = vmatpush.msra.mxu0 0.0
        %555 = vmatpush.msra.mxu0 0.0
        %556 = vmatpush.msra.mxu0 0.0
        %557 = vmatpush.msra.mxu0 0.0
        %558 = vmatpush.msra.mxu0 0.0
        %559 = vmatpush.msra.mxu0 0.0
        %560 = vmatpush.msra.mxu0 0.0
        %561 = vmatpush.msra.mxu0 0.0
        %562 = vmatpush.msra.mxu0 0.0
        %563 = vmatpush.msra.mxu0 0.0
        %564 = vmatpush.msra.mxu0 0.0
        %565 = vmatpush.msra.mxu0 %v488
        %566 = vmatmul.f32.gmra.mxu0 %v347
        %v567 = vpop.f32.mrf.mxu0
        %v568 = vadd.f32 0.0, %v567
        %569 = vdwg.mxu0
        %v571 = vsel %vm369, %v528, 0
        %573 = vmatpush.msra.mxu0 0.0
        %574 = vmatpush.msra.mxu0 0.0
        %575 = vmatpush.msra.mxu0 0.0
        %576 = vmatpush.msra.mxu0 0.0
        %577 = vmatpush.msra.mxu0 0.0
        %578 = vmatpush.msra.mxu0 0.0
        %579 = vmatpush.msra.mxu0 0.0
        %580 = vmatpush.msra.mxu0 0.0
        %581 = vmatpush.msra.mxu0 0.0
        %582 = vmatpush.msra.mxu0 0.0
        %583 = vmatpush.msra.mxu0 0.0
        %584 = vmatpush.msra.mxu0 0.0
        %585 = vmatpush.msra.mxu0 0.0
        %586 = vmatpush.msra.mxu0 0.0
        %587 = vmatpush.msra.mxu0 %v248
        %588 = vmatpush.msra.mxu0 %v247
        %589 = vmatmul.f32.gmra.mxu0 %v571
        %v590 = vpop.f32.mrf.mxu0
        %v591 = vadd.f32 0.0, %v590
        %592 = vdwg.mxu0
        %v594 = vsel %vm369, %v508, 0
        %596 = vmatpush.msra.mxu0 0.0
        %597 = vmatpush.msra.mxu0 0.0
        %598 = vmatpush.msra.mxu0 0.0
        %599 = vmatpush.msra.mxu0 0.0
        %600 = vmatpush.msra.mxu0 0.0
        %601 = vmatpush.msra.mxu0 0.0
        %602 = vmatpush.msra.mxu0 0.0
        %603 = vmatpush.msra.mxu0 0.0
        %604 = vmatpush.msra.mxu0 0.0
        %605 = vmatpush.msra.mxu0 0.0
        %606 = vmatpush.msra.mxu0 0.0
        %607 = vmatpush.msra.mxu0 0.0
        %608 = vmatpush.msra.mxu0 0.0
        %609 = vmatpush.msra.mxu0 0.0
        %610 = vmatpush.msra.mxu0 %v245
        %611 = vmatpush.msra.mxu0 %v244
        %612 = vmatmul.f32.gmra.mxu0 %v594
        %v613 = vpop.f32.mrf.mxu0
        %v614 = vadd.f32 %v591, %v613
        %615 = vdwg.mxu0
        %v617 = vsel %vm369, %v568, 0
        %619 = vmatpush.msra.mxu0 0.0
        %620 = vmatpush.msra.mxu0 0.0
        %621 = vmatpush.msra.mxu0 0.0
        %622 = vmatpush.msra.mxu0 0.0
        %623 = vmatpush.msra.mxu0 0.0
        %624 = vmatpush.msra.mxu0 0.0
        %625 = vmatpush.msra.mxu0 0.0
        %626 = vmatpush.msra.mxu0 0.0
        %627 = vmatpush.msra.mxu0 0.0
        %628 = vmatpush.msra.mxu0 0.0
        %629 = vmatpush.msra.mxu0 0.0
        %630 = vmatpush.msra.mxu0 0.0
        %631 = vmatpush.msra.mxu0 0.0
        %632 = vmatpush.msra.mxu0 0.0
        %633 = vmatpush.msra.mxu0 %v248
        %634 = vmatpush.msra.mxu0 %v247
        %635 = vmatmul.f32.gmra.mxu0 %v617
        %v636 = vpop.f32.mrf.mxu0
        %v637 = vadd.f32 0.0, %v636
        %638 = vdwg.mxu0
        %v640 = vsel %vm369, %v548, 0
        %642 = vmatpush.msra.mxu0 0.0
        %643 = vmatpush.msra.mxu0 0.0
        %644 = vmatpush.msra.mxu0 0.0
        %645 = vmatpush.msra.mxu0 0.0
        %646 = vmatpush.msra.mxu0 0.0
        %647 = vmatpush.msra.mxu0 0.0
        %648 = vmatpush.msra.mxu0 0.0
        %649 = vmatpush.msra.mxu0 0.0
        %650 = vmatpush.msra.mxu0 0.0
        %651 = vmatpush.msra.mxu0 0.0
        %652 = vmatpush.msra.mxu0 0.0
        %653 = vmatpush.msra.mxu0 0.0
        %654 = vmatpush.msra.mxu0 0.0
        %655 = vmatpush.msra.mxu0 0.0
        %656 = vmatpush.msra.mxu0 %v245
        %657 = vmatpush.msra.mxu0 %v244
        %658 = vmatmul.f32.gmra.mxu0 %v640
        %v659 = vpop.f32.mrf.mxu0
        %v660 = vadd.f32 %v637, %v659
        %661 = vdwg.mxu0
        %663 = vrot.lane.b32.xlu0 %v660, 32
        %v664 = vpop.permute.xlu0 %663
        %v666 = vsel %vm466, %v614, %v664
        %v668 = vrot.slane %v666, 1
        %670 = vst.msk [vmem:[%s241 + $0x1] sm:$0x1] %vm471, %v666
        %671 = vst.msk [vmem:[%s241 + $0x11] sm:$0x1] %vm471, %v668
        %v672 = vld [vmem:[%s208 + $0x2] sm:$0x1]
        %v673 = vld [vmem:[%s208 + $0x12] sm:$0x1]
        %v674 = vld [vmem:[%s208 + $0x22] sm:$0x1]
        %v675 = vld [vmem:[%s208 + $0x32] sm:$0x1]
        %v680 = vrot.slane %v673, 7
        %v681 = vsel %vm265, %v680, %v672
        %v682 = vrot.slane %v674, 6
        %v683 = vsel %vm268, %v682, %v681
        %v684 = vrot.slane %v675, 5
        %v685 = vsel %vm271, %v684, %v683
        %v686 = vsel %vm277, %v685, 0
        %688 = vmatpush.msra.mxu0 0.0
        %689 = vmatpush.msra.mxu0 0.0
        %690 = vmatpush.msra.mxu0 0.0
        %691 = vmatpush.msra.mxu0 0.0
        %692 = vmatpush.msra.mxu0 0.0
        %693 = vmatpush.msra.mxu0 0.0
        %694 = vmatpush.msra.mxu0 0.0
        %695 = vmatpush.msra.mxu0 0.0
        %696 = vmatpush.msra.mxu0 0.0
        %697 = vmatpush.msra.mxu0 0.0
        %698 = vmatpush.msra.mxu0 0.0
        %699 = vmatpush.msra.mxu0 0.0
        %700 = vmatpush.msra.mxu0 0.0
        %701 = vmatpush.msra.mxu0 0.0
        %702 = vmatpush.msra.mxu0 0.0
        %703 = vmatpush.msra.mxu0 %v686
        %704 = vmatmul.f32.gmra.mxu0 %v275
        %v705 = vpop.f32.mrf.mxu0
        %v706 = vadd.f32 0.0, %v705
        %707 = vdwg.mxu0
        %708 = vmatpush.msra.mxu0 0.0
        %709 = vmatpush.msra.mxu0 0.0
        %710 = vmatpush.msra.mxu0 0.0
        %711 = vmatpush.msra.mxu0 0.0
        %712 = vmatpush.msra.mxu0 0.0
        %713 = vmatpush.msra.mxu0 0.0
        %714 = vmatpush.msra.mxu0 0.0
        %715 = vmatpush.msra.mxu0 0.0
        %716 = vmatpush.msra.mxu0 0.0
        %717 = vmatpush.msra.mxu0 0.0
        %718 = vmatpush.msra.mxu0 0.0
        %719 = vmatpush.msra.mxu0 0.0
        %720 = vmatpush.msra.mxu0 0.0
        %721 = vmatpush.msra.mxu0 0.0
        %722 = vmatpush.msra.mxu0 0.0
        %723 = vmatpush.msra.mxu0 %v686
        %724 = vmatmul.f32.gmra.mxu0 %v301
        %v725 = vpop.f32.mrf.mxu0
        %v726 = vadd.f32 0.0, %v725
        %727 = vdwg.mxu0
        %728 = vmatpush.msra.mxu0 0.0
        %729 = vmatpush.msra.mxu0 0.0
        %730 = vmatpush.msra.mxu0 0.0
        %731 = vmatpush.msra.mxu0 0.0
        %732 = vmatpush.msra.mxu0 0.0
        %733 = vmatpush.msra.mxu0 0.0
        %734 = vmatpush.msra.mxu0 0.0
        %735 = vmatpush.msra.mxu0 0.0
        %736 = vmatpush.msra.mxu0 0.0
        %737 = vmatpush.msra.mxu0 0.0
        %738 = vmatpush.msra.mxu0 0.0
        %739 = vmatpush.msra.mxu0 0.0
        %740 = vmatpush.msra.mxu0 0.0
        %741 = vmatpush.msra.mxu0 0.0
        %742 = vmatpush.msra.mxu0 0.0
        %743 = vmatpush.msra.mxu0 %v686
        %744 = vmatmul.f32.gmra.mxu0 %v324
        %v745 = vpop.f32.mrf.mxu0
        %v746 = vadd.f32 0.0, %v745
        %747 = vdwg.mxu0
        %748 = vmatpush.msra.mxu0 0.0
        %749 = vmatpush.msra.mxu0 0.0
        %750 = vmatpush.msra.mxu0 0.0
        %751 = vmatpush.msra.mxu0 0.0
        %752 = vmatpush.msra.mxu0 0.0
        %753 = vmatpush.msra.mxu0 0.0
        %754 = vmatpush.msra.mxu0 0.0
        %755 = vmatpush.msra.mxu0 0.0
        %756 = vmatpush.msra.mxu0 0.0
        %757 = vmatpush.msra.mxu0 0.0
        %758 = vmatpush.msra.mxu0 0.0
        %759 = vmatpush.msra.mxu0 0.0
        %760 = vmatpush.msra.mxu0 0.0
        %761 = vmatpush.msra.mxu0 0.0
        %762 = vmatpush.msra.mxu0 0.0
        %763 = vmatpush.msra.mxu0 %v686
        %764 = vmatmul.f32.gmra.mxu0 %v347
        %v765 = vpop.f32.mrf.mxu0
        %v766 = vadd.f32 0.0, %v765
        %767 = vdwg.mxu0
        %v769 = vsel %vm369, %v726, 0
        %771 = vmatpush.msra.mxu0 0.0
        %772 = vmatpush.msra.mxu0 0.0
        %773 = vmatpush.msra.mxu0 0.0
        %774 = vmatpush.msra.mxu0 0.0
        %775 = vmatpush.msra.mxu0 0.0
        %776 = vmatpush.msra.mxu0 0.0
        %777 = vmatpush.msra.mxu0 0.0
        %778 = vmatpush.msra.mxu0 0.0
        %779 = vmatpush.msra.mxu0 0.0
        %780 = vmatpush.msra.mxu0 0.0
        %781 = vmatpush.msra.mxu0 0.0
        %782 = vmatpush.msra.mxu0 0.0
        %783 = vmatpush.msra.mxu0 0.0
        %784 = vmatpush.msra.mxu0 0.0
        %785 = vmatpush.msra.mxu0 %v248
        %786 = vmatpush.msra.mxu0 %v247
        %787 = vmatmul.f32.gmra.mxu0 %v769
        %v788 = vpop.f32.mrf.mxu0
        %v789 = vadd.f32 0.0, %v788
        %790 = vdwg.mxu0
        %v792 = vsel %vm369, %v706, 0
        %794 = vmatpush.msra.mxu0 0.0
        %795 = vmatpush.msra.mxu0 0.0
        %796 = vmatpush.msra.mxu0 0.0
        %797 = vmatpush.msra.mxu0 0.0
        %798 = vmatpush.msra.mxu0 0.0
        %799 = vmatpush.msra.mxu0 0.0
        %800 = vmatpush.msra.mxu0 0.0
        %801 = vmatpush.msra.mxu0 0.0
        %802 = vmatpush.msra.mxu0 0.0
        %803 = vmatpush.msra.mxu0 0.0
        %804 = vmatpush.msra.mxu0 0.0
        %805 = vmatpush.msra.mxu0 0.0
        %806 = vmatpush.msra.mxu0 0.0
        %807 = vmatpush.msra.mxu0 0.0
        %808 = vmatpush.msra.mxu0 %v245
        %809 = vmatpush.msra.mxu0 %v244
        %810 = vmatmul.f32.gmra.mxu0 %v792
        %v811 = vpop.f32.mrf.mxu0
        %v812 = vadd.f32 %v789, %v811
        %813 = vdwg.mxu0
        %v815 = vsel %vm369, %v766, 0
        %817 = vmatpush.msra.mxu0 0.0
        %818 = vmatpush.msra.mxu0 0.0
        %819 = vmatpush.msra.mxu0 0.0
        %820 = vmatpush.msra.mxu0 0.0
        %821 = vmatpush.msra.mxu0 0.0
        %822 = vmatpush.msra.mxu0 0.0
        %823 = vmatpush.msra.mxu0 0.0
        %824 = vmatpush.msra.mxu0 0.0
        %825 = vmatpush.msra.mxu0 0.0
        %826 = vmatpush.msra.mxu0 0.0
        %827 = vmatpush.msra.mxu0 0.0
        %828 = vmatpush.msra.mxu0 0.0
        %829 = vmatpush.msra.mxu0 0.0
        %830 = vmatpush.msra.mxu0 0.0
        %831 = vmatpush.msra.mxu0 %v248
        %832 = vmatpush.msra.mxu0 %v247
        %833 = vmatmul.f32.gmra.mxu0 %v815
        %v834 = vpop.f32.mrf.mxu0
        %v835 = vadd.f32 0.0, %v834
        %836 = vdwg.mxu0
        %v838 = vsel %vm369, %v746, 0
        %840 = vmatpush.msra.mxu0 0.0
        %841 = vmatpush.msra.mxu0 0.0
        %842 = vmatpush.msra.mxu0 0.0
        %843 = vmatpush.msra.mxu0 0.0
        %844 = vmatpush.msra.mxu0 0.0
        %845 = vmatpush.msra.mxu0 0.0
        %846 = vmatpush.msra.mxu0 0.0
        %847 = vmatpush.msra.mxu0 0.0
        %848 = vmatpush.msra.mxu0 0.0
        %849 = vmatpush.msra.mxu0 0.0
        %850 = vmatpush.msra.mxu0 0.0
        %851 = vmatpush.msra.mxu0 0.0
        %852 = vmatpush.msra.mxu0 0.0
        %853 = vmatpush.msra.mxu0 0.0
        %854 = vmatpush.msra.mxu0 %v245
        %855 = vmatpush.msra.mxu0 %v244
        %856 = vmatmul.f32.gmra.mxu0 %v838
        %v857 = vpop.f32.mrf.mxu0
        %v858 = vadd.f32 %v835, %v857
        %859 = vdwg.mxu0
        %861 = vrot.lane.b32.xlu0 %v858, 32
        %v862 = vpop.permute.xlu0 %861
        %v864 = vsel %vm466, %v812, %v862
        %v866 = vrot.slane %v864, 1
        %868 = vst.msk [vmem:[%s241 + $0x2] sm:$0x1] %vm471, %v864
        %869 = vst.msk [vmem:[%s241 + $0x12] sm:$0x1] %vm471, %v866
        %v870 = vld [vmem:[%s208 + $0x3] sm:$0x1]
        %v871 = vld [vmem:[%s208 + $0x13] sm:$0x1]
        %v872 = vld [vmem:[%s208 + $0x23] sm:$0x1]
        %v873 = vld [vmem:[%s208 + $0x33] sm:$0x1]
        %v878 = vrot.slane %v871, 7
        %v879 = vsel %vm265, %v878, %v870
        %v880 = vrot.slane %v872, 6
        %v881 = vsel %vm268, %v880, %v879
        %v882 = vrot.slane %v873, 5
        %v883 = vsel %vm271, %v882, %v881
        %v884 = vsel %vm277, %v883, 0
        %886 = vmatpush.msra.mxu0 0.0
        %887 = vmatpush.msra.mxu0 0.0
        %888 = vmatpush.msra.mxu0 0.0
        %889 = vmatpush.msra.mxu0 0.0
        %890 = vmatpush.msra.mxu0 0.0
        %891 = vmatpush.msra.mxu0 0.0
        %892 = vmatpush.msra.mxu0 0.0
        %893 = vmatpush.msra.mxu0 0.0
        %894 = vmatpush.msra.mxu0 0.0
        %895 = vmatpush.msra.mxu0 0.0
        %896 = vmatpush.msra.mxu0 0.0
        %897 = vmatpush.msra.mxu0 0.0
        %898 = vmatpush.msra.mxu0 0.0
        %899 = vmatpush.msra.mxu0 0.0
        %900 = vmatpush.msra.mxu0 0.0
        %901 = vmatpush.msra.mxu0 %v884
        %902 = vmatmul.f32.gmra.mxu0 %v275
        %v903 = vpop.f32.mrf.mxu0
        %v904 = vadd.f32 0.0, %v903
        %905 = vdwg.mxu0
        %906 = vmatpush.msra.mxu0 0.0
        %907 = vmatpush.msra.mxu0 0.0
        %908 = vmatpush.msra.mxu0 0.0
        %909 = vmatpush.msra.mxu0 0.0
        %910 = vmatpush.msra.mxu0 0.0
        %911 = vmatpush.msra.mxu0 0.0
        %912 = vmatpush.msra.mxu0 0.0
        %913 = vmatpush.msra.mxu0 0.0
        %914 = vmatpush.msra.mxu0 0.0
        %915 = vmatpush.msra.mxu0 0.0
        %916 = vmatpush.msra.mxu0 0.0
        %917 = vmatpush.msra.mxu0 0.0
        %918 = vmatpush.msra.mxu0 0.0
        %919 = vmatpush.msra.mxu0 0.0
        %920 = vmatpush.msra.mxu0 0.0
        %921 = vmatpush.msra.mxu0 %v884
        %922 = vmatmul.f32.gmra.mxu0 %v301
        %v923 = vpop.f32.mrf.mxu0
        %v924 = vadd.f32 0.0, %v923
        %925 = vdwg.mxu0
        %926 = vmatpush.msra.mxu0 0.0
        %927 = vmatpush.msra.mxu0 0.0
        %928 = vmatpush.msra.mxu0 0.0
        %929 = vmatpush.msra.mxu0 0.0
        %930 = vmatpush.msra.mxu0 0.0
        %931 = vmatpush.msra.mxu0 0.0
        %932 = vmatpush.msra.mxu0 0.0
        %933 = vmatpush.msra.mxu0 0.0
        %934 = vmatpush.msra.mxu0 0.0
        %935 = vmatpush.msra.mxu0 0.0
        %936 = vmatpush.msra.mxu0 0.0
        %937 = vmatpush.msra.mxu0 0.0
        %938 = vmatpush.msra.mxu0 0.0
        %939 = vmatpush.msra.mxu0 0.0
        %940 = vmatpush.msra.mxu0 0.0
        %941 = vmatpush.msra.mxu0 %v884
        %942 = vmatmul.f32.gmra.mxu0 %v324
        %v943 = vpop.f32.mrf.mxu0
        %v944 = vadd.f32 0.0, %v943
        %945 = vdwg.mxu0
        %946 = vmatpush.msra.mxu0 0.0
        %947 = vmatpush.msra.mxu0 0.0
        %948 = vmatpush.msra.mxu0 0.0
        %949 = vmatpush.msra.mxu0 0.0
        %950 = vmatpush.msra.mxu0 0.0
        %951 = vmatpush.msra.mxu0 0.0
        %952 = vmatpush.msra.mxu0 0.0
        %953 = vmatpush.msra.mxu0 0.0
        %954 = vmatpush.msra.mxu0 0.0
        %955 = vmatpush.msra.mxu0 0.0
        %956 = vmatpush.msra.mxu0 0.0
        %957 = vmatpush.msra.mxu0 0.0
        %958 = vmatpush.msra.mxu0 0.0
        %959 = vmatpush.msra.mxu0 0.0
        %960 = vmatpush.msra.mxu0 0.0
        %961 = vmatpush.msra.mxu0 %v884
        %962 = vmatmul.f32.gmra.mxu0 %v347
        %v963 = vpop.f32.mrf.mxu0
        %v964 = vadd.f32 0.0, %v963
        %965 = vdwg.mxu0
        %v967 = vsel %vm369, %v924, 0
        %969 = vmatpush.msra.mxu0 0.0
        %970 = vmatpush.msra.mxu0 0.0
        %971 = vmatpush.msra.mxu0 0.0
        %972 = vmatpush.msra.mxu0 0.0
        %973 = vmatpush.msra.mxu0 0.0
        %974 = vmatpush.msra.mxu0 0.0
        %975 = vmatpush.msra.mxu0 0.0
        %976 = vmatpush.msra.mxu0 0.0
        %977 = vmatpush.msra.mxu0 0.0
        %978 = vmatpush.msra.mxu0 0.0
        %979 = vmatpush.msra.mxu0 0.0
        %980 = vmatpush.msra.mxu0 0.0
        %981 = vmatpush.msra.mxu0 0.0
        %982 = vmatpush.msra.mxu0 0.0
        %983 = vmatpush.msra.mxu0 %v248
        %984 = vmatpush.msra.mxu0 %v247
        %985 = vmatmul.f32.gmra.mxu0 %v967
        %v986 = vpop.f32.mrf.mxu0
        %v987 = vadd.f32 0.0, %v986
        %988 = vdwg.mxu0
        %v990 = vsel %vm369, %v904, 0
        %992 = vmatpush.msra.mxu0 0.0
        %993 = vmatpush.msra.mxu0 0.0
        %994 = vmatpush.msra.mxu0 0.0
        %995 = vmatpush.msra.mxu0 0.0
        %996 = vmatpush.msra.mxu0 0.0
        %997 = vmatpush.msra.mxu0 0.0
        %998 = vmatpush.msra.mxu0 0.0
        %999 = vmatpush.msra.mxu0 0.0
        %1000 = vmatpush.msra.mxu0 0.0
        %1001 = vmatpush.msra.mxu0 0.0
        %1002 = vmatpush.msra.mxu0 0.0
        %1003 = vmatpush.msra.mxu0 0.0
        %1004 = vmatpush.msra.mxu0 0.0
        %1005 = vmatpush.msra.mxu0 0.0
        %1006 = vmatpush.msra.mxu0 %v245
        %1007 = vmatpush.msra.mxu0 %v244
        %1008 = vmatmul.f32.gmra.mxu0 %v990
        %v1009 = vpop.f32.mrf.mxu0
        %v1010 = vadd.f32 %v987, %v1009
        %1011 = vdwg.mxu0
        %v1013 = vsel %vm369, %v964, 0
        %1015 = vmatpush.msra.mxu0 0.0
        %1016 = vmatpush.msra.mxu0 0.0
        %1017 = vmatpush.msra.mxu0 0.0
        %1018 = vmatpush.msra.mxu0 0.0
        %1019 = vmatpush.msra.mxu0 0.0
        %1020 = vmatpush.msra.mxu0 0.0
        %1021 = vmatpush.msra.mxu0 0.0
        %1022 = vmatpush.msra.mxu0 0.0
        %1023 = vmatpush.msra.mxu0 0.0
        %1024 = vmatpush.msra.mxu0 0.0
        %1025 = vmatpush.msra.mxu0 0.0
        %1026 = vmatpush.msra.mxu0 0.0
        %1027 = vmatpush.msra.mxu0 0.0
        %1028 = vmatpush.msra.mxu0 0.0
        %1029 = vmatpush.msra.mxu0 %v248
        %1030 = vmatpush.msra.mxu0 %v247
        %1031 = vmatmul.f32.gmra.mxu0 %v1013
        %v1032 = vpop.f32.mrf.mxu0
        %v1033 = vadd.f32 0.0, %v1032
        %1034 = vdwg.mxu0
        %v1036 = vsel %vm369, %v944, 0
        %1038 = vmatpush.msra.mxu0 0.0
        %1039 = vmatpush.msra.mxu0 0.0
        %1040 = vmatpush.msra.mxu0 0.0
        %1041 = vmatpush.msra.mxu0 0.0
        %1042 = vmatpush.msra.mxu0 0.0
        %1043 = vmatpush.msra.mxu0 0.0
        %1044 = vmatpush.msra.mxu0 0.0
        %1045 = vmatpush.msra.mxu0 0.0
        %1046 = vmatpush.msra.mxu0 0.0
        %1047 = vmatpush.msra.mxu0 0.0
        %1048 = vmatpush.msra.mxu0 0.0
        %1049 = vmatpush.msra.mxu0 0.0
        %1050 = vmatpush.msra.mxu0 0.0
        %1051 = vmatpush.msra.mxu0 0.0
        %1052 = vmatpush.msra.mxu0 %v245
        %1053 = vmatpush.msra.mxu0 %v244
        %1054 = vmatmul.f32.gmra.mxu0 %v1036
        %v1055 = vpop.f32.mrf.mxu0
        %v1056 = vadd.f32 %v1033, %v1055
        %1057 = vdwg.mxu0
        %1059 = vrot.lane.b32.xlu0 %v1056, 32
        %v1060 = vpop.permute.xlu0 %1059
        %v1062 = vsel %vm466, %v1010, %v1060
        %v1064 = vrot.slane %v1062, 1
        %1066 = vst.msk [vmem:[%s241 + $0x3] sm:$0x1] %vm471, %v1062
        %1067 = vst.msk [vmem:[%s241 + $0x13] sm:$0x1] %vm471, %v1064
        %v1068 = vld [vmem:[%s208 + $0x4] sm:$0x1]
        %v1069 = vld [vmem:[%s208 + $0x14] sm:$0x1]
        %v1070 = vld [vmem:[%s208 + $0x24] sm:$0x1]
        %v1071 = vld [vmem:[%s208 + $0x34] sm:$0x1]
        %v1076 = vrot.slane %v1069, 7
        %v1077 = vsel %vm265, %v1076, %v1068
        %v1078 = vrot.slane %v1070, 6
        %v1079 = vsel %vm268, %v1078, %v1077
        %v1080 = vrot.slane %v1071, 5
        %v1081 = vsel %vm271, %v1080, %v1079
        %v1082 = vsel %vm277, %v1081, 0
        %1084 = vmatpush.msra.mxu0 0.0
        %1085 = vmatpush.msra.mxu0 0.0
        %1086 = vmatpush.msra.mxu0 0.0
        %1087 = vmatpush.msra.mxu0 0.0
        %1088 = vmatpush.msra.mxu0 0.0
        %1089 = vmatpush.msra.mxu0 0.0
        %1090 = vmatpush.msra.mxu0 0.0
        %1091 = vmatpush.msra.mxu0 0.0
        %1092 = vmatpush.msra.mxu0 0.0
        %1093 = vmatpush.msra.mxu0 0.0
        %1094 = vmatpush.msra.mxu0 0.0
        %1095 = vmatpush.msra.mxu0 0.0
        %1096 = vmatpush.msra.mxu0 0.0
        %1097 = vmatpush.msra.mxu0 0.0
        %1098 = vmatpush.msra.mxu0 0.0
        %1099 = vmatpush.msra.mxu0 %v1082
        %1100 = vmatmul.f32.gmra.mxu0 %v275
        %v1101 = vpop.f32.mrf.mxu0
        %v1102 = vadd.f32 0.0, %v1101
        %1103 = vdwg.mxu0
        %1104 = vmatpush.msra.mxu0 0.0
        %1105 = vmatpush.msra.mxu0 0.0
        %1106 = vmatpush.msra.mxu0 0.0
        %1107 = vmatpush.msra.mxu0 0.0
        %1108 = vmatpush.msra.mxu0 0.0
        %1109 = vmatpush.msra.mxu0 0.0
        %1110 = vmatpush.msra.mxu0 0.0
        %1111 = vmatpush.msra.mxu0 0.0
        %1112 = vmatpush.msra.mxu0 0.0
        %1113 = vmatpush.msra.mxu0 0.0
        %1114 = vmatpush.msra.mxu0 0.0
        %1115 = vmatpush.msra.mxu0 0.0
        %1116 = vmatpush.msra.mxu0 0.0
        %1117 = vmatpush.msra.mxu0 0.0
        %1118 = vmatpush.msra.mxu0 0.0
        %1119 = vmatpush.msra.mxu0 %v1082
        %1120 = vmatmul.f32.gmra.mxu0 %v301
        %v1121 = vpop.f32.mrf.mxu0
        %v1122 = vadd.f32 0.0, %v1121
        %1123 = vdwg.mxu0
        %1124 = vmatpush.msra.mxu0 0.0
        %1125 = vmatpush.msra.mxu0 0.0
        %1126 = vmatpush.msra.mxu0 0.0
        %1127 = vmatpush.msra.mxu0 0.0
        %1128 = vmatpush.msra.mxu0 0.0
        %1129 = vmatpush.msra.mxu0 0.0
        %1130 = vmatpush.msra.mxu0 0.0
        %1131 = vmatpush.msra.mxu0 0.0
        %1132 = vmatpush.msra.mxu0 0.0
        %1133 = vmatpush.msra.mxu0 0.0
        %1134 = vmatpush.msra.mxu0 0.0
        %1135 = vmatpush.msra.mxu0 0.0
        %1136 = vmatpush.msra.mxu0 0.0
        %1137 = vmatpush.msra.mxu0 0.0
        %1138 = vmatpush.msra.mxu0 0.0
        %1139 = vmatpush.msra.mxu0 %v1082
        %1140 = vmatmul.f32.gmra.mxu0 %v324
        %v1141 = vpop.f32.mrf.mxu0
        %v1142 = vadd.f32 0.0, %v1141
        %1143 = vdwg.mxu0
        %1144 = vmatpush.msra.mxu0 0.0
        %1145 = vmatpush.msra.mxu0 0.0
        %1146 = vmatpush.msra.mxu0 0.0
        %1147 = vmatpush.msra.mxu0 0.0
        %1148 = vmatpush.msra.mxu0 0.0
        %1149 = vmatpush.msra.mxu0 0.0
        %1150 = vmatpush.msra.mxu0 0.0
        %1151 = vmatpush.msra.mxu0 0.0
        %1152 = vmatpush.msra.mxu0 0.0
        %1153 = vmatpush.msra.mxu0 0.0
        %1154 = vmatpush.msra.mxu0 0.0
        %1155 = vmatpush.msra.mxu0 0.0
        %1156 = vmatpush.msra.mxu0 0.0
        %1157 = vmatpush.msra.mxu0 0.0
        %1158 = vmatpush.msra.mxu0 0.0
        %1159 = vmatpush.msra.mxu0 %v1082
        %1160 = vmatmul.f32.gmra.mxu0 %v347
        %v1161 = vpop.f32.mrf.mxu0
        %v1162 = vadd.f32 0.0, %v1161
        %1163 = vdwg.mxu0
        %v1165 = vsel %vm369, %v1122, 0
        %1167 = vmatpush.msra.mxu0 0.0
        %1168 = vmatpush.msra.mxu0 0.0
        %1169 = vmatpush.msra.mxu0 0.0
        %1170 = vmatpush.msra.mxu0 0.0
        %1171 = vmatpush.msra.mxu0 0.0
        %1172 = vmatpush.msra.mxu0 0.0
        %1173 = vmatpush.msra.mxu0 0.0
        %1174 = vmatpush.msra.mxu0 0.0
        %1175 = vmatpush.msra.mxu0 0.0
        %1176 = vmatpush.msra.mxu0 0.0
        %1177 = vmatpush.msra.mxu0 0.0
        %1178 = vmatpush.msra.mxu0 0.0
        %1179 = vmatpush.msra.mxu0 0.0
        %1180 = vmatpush.msra.mxu0 0.0
        %1181 = vmatpush.msra.mxu0 %v248
        %1182 = vmatpush.msra.mxu0 %v247
        %1183 = vmatmul.f32.gmra.mxu0 %v1165
        %v1184 = vpop.f32.mrf.mxu0
        %v1185 = vadd.f32 0.0, %v1184
        %1186 = vdwg.mxu0
        %v1188 = vsel %vm369, %v1102, 0
        %1190 = vmatpush.msra.mxu0 0.0
        %1191 = vmatpush.msra.mxu0 0.0
        %1192 = vmatpush.msra.mxu0 0.0
        %1193 = vmatpush.msra.mxu0 0.0
        %1194 = vmatpush.msra.mxu0 0.0
        %1195 = vmatpush.msra.mxu0 0.0
        %1196 = vmatpush.msra.mxu0 0.0
        %1197 = vmatpush.msra.mxu0 0.0
        %1198 = vmatpush.msra.mxu0 0.0
        %1199 = vmatpush.msra.mxu0 0.0
        %1200 = vmatpush.msra.mxu0 0.0
        %1201 = vmatpush.msra.mxu0 0.0
        %1202 = vmatpush.msra.mxu0 0.0
        %1203 = vmatpush.msra.mxu0 0.0
        %1204 = vmatpush.msra.mxu0 %v245
        %1205 = vmatpush.msra.mxu0 %v244
        %1206 = vmatmul.f32.gmra.mxu0 %v1188
        %v1207 = vpop.f32.mrf.mxu0
        %v1208 = vadd.f32 %v1185, %v1207
        %1209 = vdwg.mxu0
        %v1211 = vsel %vm369, %v1162, 0
        %1213 = vmatpush.msra.mxu0 0.0
        %1214 = vmatpush.msra.mxu0 0.0
        %1215 = vmatpush.msra.mxu0 0.0
        %1216 = vmatpush.msra.mxu0 0.0
        %1217 = vmatpush.msra.mxu0 0.0
        %1218 = vmatpush.msra.mxu0 0.0
        %1219 = vmatpush.msra.mxu0 0.0
        %1220 = vmatpush.msra.mxu0 0.0
        %1221 = vmatpush.msra.mxu0 0.0
        %1222 = vmatpush.msra.mxu0 0.0
        %1223 = vmatpush.msra.mxu0 0.0
        %1224 = vmatpush.msra.mxu0 0.0
        %1225 = vmatpush.msra.mxu0 0.0
        %1226 = vmatpush.msra.mxu0 0.0
        %1227 = vmatpush.msra.mxu0 %v248
        %1228 = vmatpush.msra.mxu0 %v247
        %1229 = vmatmul.f32.gmra.mxu0 %v1211
        %v1230 = vpop.f32.mrf.mxu0
        %v1231 = vadd.f32 0.0, %v1230
        %1232 = vdwg.mxu0
        %v1234 = vsel %vm369, %v1142, 0
        %1236 = vmatpush.msra.mxu0 0.0
        %1237 = vmatpush.msra.mxu0 0.0
        %1238 = vmatpush.msra.mxu0 0.0
        %1239 = vmatpush.msra.mxu0 0.0
        %1240 = vmatpush.msra.mxu0 0.0
        %1241 = vmatpush.msra.mxu0 0.0
        %1242 = vmatpush.msra.mxu0 0.0
        %1243 = vmatpush.msra.mxu0 0.0
        %1244 = vmatpush.msra.mxu0 0.0
        %1245 = vmatpush.msra.mxu0 0.0
        %1246 = vmatpush.msra.mxu0 0.0
        %1247 = vmatpush.msra.mxu0 0.0
        %1248 = vmatpush.msra.mxu0 0.0
        %1249 = vmatpush.msra.mxu0 0.0
        %1250 = vmatpush.msra.mxu0 %v245
        %1251 = vmatpush.msra.mxu0 %v244
        %1252 = vmatmul.f32.gmra.mxu0 %v1234
        %v1253 = vpop.f32.mrf.mxu0
        %v1254 = vadd.f32 %v1231, %v1253
        %1255 = vdwg.mxu0
        %1257 = vrot.lane.b32.xlu0 %v1254, 32
        %v1258 = vpop.permute.xlu0 %1257
        %v1260 = vsel %vm466, %v1208, %v1258
        %v1262 = vrot.slane %v1260, 1
        %1264 = vst.msk [vmem:[%s241 + $0x4] sm:$0x1] %vm471, %v1260
        %1265 = vst.msk [vmem:[%s241 + $0x14] sm:$0x1] %vm471, %v1262
        %v1266 = vld [vmem:[%s208 + $0x5] sm:$0x1]
        %v1267 = vld [vmem:[%s208 + $0x15] sm:$0x1]
        %v1268 = vld [vmem:[%s208 + $0x25] sm:$0x1]
        %v1269 = vld [vmem:[%s208 + $0x35] sm:$0x1]
        %v1274 = vrot.slane %v1267, 7
        %v1275 = vsel %vm265, %v1274, %v1266
        %v1276 = vrot.slane %v1268, 6
        %v1277 = vsel %vm268, %v1276, %v1275
        %v1278 = vrot.slane %v1269, 5
        %v1279 = vsel %vm271, %v1278, %v1277
        %v1280 = vsel %vm277, %v1279, 0
        %1282 = vmatpush.msra.mxu0 0.0
        %1283 = vmatpush.msra.mxu0 0.0
        %1284 = vmatpush.msra.mxu0 0.0
        %1285 = vmatpush.msra.mxu0 0.0
        %1286 = vmatpush.msra.mxu0 0.0
        %1287 = vmatpush.msra.mxu0 0.0
        %1288 = vmatpush.msra.mxu0 0.0
        %1289 = vmatpush.msra.mxu0 0.0
        %1290 = vmatpush.msra.mxu0 0.0
        %1291 = vmatpush.msra.mxu0 0.0
        %1292 = vmatpush.msra.mxu0 0.0
        %1293 = vmatpush.msra.mxu0 0.0
        %1294 = vmatpush.msra.mxu0 0.0
        %1295 = vmatpush.msra.mxu0 0.0
        %1296 = vmatpush.msra.mxu0 0.0
        %1297 = vmatpush.msra.mxu0 %v1280
        %1298 = vmatmul.f32.gmra.mxu0 %v275
        %v1299 = vpop.f32.mrf.mxu0
        %v1300 = vadd.f32 0.0, %v1299
        %1301 = vdwg.mxu0
        %1302 = vmatpush.msra.mxu0 0.0
        %1303 = vmatpush.msra.mxu0 0.0
        %1304 = vmatpush.msra.mxu0 0.0
        %1305 = vmatpush.msra.mxu0 0.0
        %1306 = vmatpush.msra.mxu0 0.0
        %1307 = vmatpush.msra.mxu0 0.0
        %1308 = vmatpush.msra.mxu0 0.0
        %1309 = vmatpush.msra.mxu0 0.0
        %1310 = vmatpush.msra.mxu0 0.0
        %1311 = vmatpush.msra.mxu0 0.0
        %1312 = vmatpush.msra.mxu0 0.0
        %1313 = vmatpush.msra.mxu0 0.0
        %1314 = vmatpush.msra.mxu0 0.0
        %1315 = vmatpush.msra.mxu0 0.0
        %1316 = vmatpush.msra.mxu0 0.0
        %1317 = vmatpush.msra.mxu0 %v1280
        %1318 = vmatmul.f32.gmra.mxu0 %v301
        %v1319 = vpop.f32.mrf.mxu0
        %v1320 = vadd.f32 0.0, %v1319
        %1321 = vdwg.mxu0
        %1322 = vmatpush.msra.mxu0 0.0
        %1323 = vmatpush.msra.mxu0 0.0
        %1324 = vmatpush.msra.mxu0 0.0
        %1325 = vmatpush.msra.mxu0 0.0
        %1326 = vmatpush.msra.mxu0 0.0
        %1327 = vmatpush.msra.mxu0 0.0
        %1328 = vmatpush.msra.mxu0 0.0
        %1329 = vmatpush.msra.mxu0 0.0
        %1330 = vmatpush.msra.mxu0 0.0
        %1331 = vmatpush.msra.mxu0 0.0
        %1332 = vmatpush.msra.mxu0 0.0
        %1333 = vmatpush.msra.mxu0 0.0
        %1334 = vmatpush.msra.mxu0 0.0
        %1335 = vmatpush.msra.mxu0 0.0
        %1336 = vmatpush.msra.mxu0 0.0
        %1337 = vmatpush.msra.mxu0 %v1280
        %1338 = vmatmul.f32.gmra.mxu0 %v324
        %v1339 = vpop.f32.mrf.mxu0
        %v1340 = vadd.f32 0.0, %v1339
        %1341 = vdwg.mxu0
        %1342 = vmatpush.msra.mxu0 0.0
        %1343 = vmatpush.msra.mxu0 0.0
        %1344 = vmatpush.msra.mxu0 0.0
        %1345 = vmatpush.msra.mxu0 0.0
        %1346 = vmatpush.msra.mxu0 0.0
        %1347 = vmatpush.msra.mxu0 0.0
        %1348 = vmatpush.msra.mxu0 0.0
        %1349 = vmatpush.msra.mxu0 0.0
        %1350 = vmatpush.msra.mxu0 0.0
        %1351 = vmatpush.msra.mxu0 0.0
        %1352 = vmatpush.msra.mxu0 0.0
        %1353 = vmatpush.msra.mxu0 0.0
        %1354 = vmatpush.msra.mxu0 0.0
        %1355 = vmatpush.msra.mxu0 0.0
        %1356 = vmatpush.msra.mxu0 0.0
        %1357 = vmatpush.msra.mxu0 %v1280
        %1358 = vmatmul.f32.gmra.mxu0 %v347
        %v1359 = vpop.f32.mrf.mxu0
        %v1360 = vadd.f32 0.0, %v1359
        %1361 = vdwg.mxu0
        %v1363 = vsel %vm369, %v1320, 0
        %1365 = vmatpush.msra.mxu0 0.0
        %1366 = vmatpush.msra.mxu0 0.0
        %1367 = vmatpush.msra.mxu0 0.0
        %1368 = vmatpush.msra.mxu0 0.0
        %1369 = vmatpush.msra.mxu0 0.0
        %1370 = vmatpush.msra.mxu0 0.0
        %1371 = vmatpush.msra.mxu0 0.0
        %1372 = vmatpush.msra.mxu0 0.0
        %1373 = vmatpush.msra.mxu0 0.0
        %1374 = vmatpush.msra.mxu0 0.0
        %1375 = vmatpush.msra.mxu0 0.0
        %1376 = vmatpush.msra.mxu0 0.0
        %1377 = vmatpush.msra.mxu0 0.0
        %1378 = vmatpush.msra.mxu0 0.0
        %1379 = vmatpush.msra.mxu0 %v248
        %1380 = vmatpush.msra.mxu0 %v247
        %1381 = vmatmul.f32.gmra.mxu0 %v1363
        %v1382 = vpop.f32.mrf.mxu0
        %v1383 = vadd.f32 0.0, %v1382
        %1384 = vdwg.mxu0
        %v1386 = vsel %vm369, %v1300, 0
        %1388 = vmatpush.msra.mxu0 0.0
        %1389 = vmatpush.msra.mxu0 0.0
        %1390 = vmatpush.msra.mxu0 0.0
        %1391 = vmatpush.msra.mxu0 0.0
        %1392 = vmatpush.msra.mxu0 0.0
        %1393 = vmatpush.msra.mxu0 0.0
        %1394 = vmatpush.msra.mxu0 0.0
        %1395 = vmatpush.msra.mxu0 0.0
        %1396 = vmatpush.msra.mxu0 0.0
        %1397 = vmatpush.msra.mxu0 0.0
        %1398 = vmatpush.msra.mxu0 0.0
        %1399 = vmatpush.msra.mxu0 0.0
        %1400 = vmatpush.msra.mxu0 0.0
        %1401 = vmatpush.msra.mxu0 0.0
        %1402 = vmatpush.msra.mxu0 %v245
        %1403 = vmatpush.msra.mxu0 %v244
        %1404 = vmatmul.f32.gmra.mxu0 %v1386
        %v1405 = vpop.f32.mrf.mxu0
        %v1406 = vadd.f32 %v1383, %v1405
        %1407 = vdwg.mxu0
        %v1409 = vsel %vm369, %v1360, 0
        %1411 = vmatpush.msra.mxu0 0.0
        %1412 = vmatpush.msra.mxu0 0.0
        %1413 = vmatpush.msra.mxu0 0.0
        %1414 = vmatpush.msra.mxu0 0.0
        %1415 = vmatpush.msra.mxu0 0.0
        %1416 = vmatpush.msra.mxu0 0.0
        %1417 = vmatpush.msra.mxu0 0.0
        %1418 = vmatpush.msra.mxu0 0.0
        %1419 = vmatpush.msra.mxu0 0.0
        %1420 = vmatpush.msra.mxu0 0.0
        %1421 = vmatpush.msra.mxu0 0.0
        %1422 = vmatpush.msra.mxu0 0.0
        %1423 = vmatpush.msra.mxu0 0.0
        %1424 = vmatpush.msra.mxu0 0.0
        %1425 = vmatpush.msra.mxu0 %v248
        %1426 = vmatpush.msra.mxu0 %v247
        %1427 = vmatmul.f32.gmra.mxu0 %v1409
        %v1428 = vpop.f32.mrf.mxu0
        %v1429 = vadd.f32 0.0, %v1428
        %1430 = vdwg.mxu0
        %v1432 = vsel %vm369, %v1340, 0
        %1434 = vmatpush.msra.mxu0 0.0
        %1435 = vmatpush.msra.mxu0 0.0
        %1436 = vmatpush.msra.mxu0 0.0
        %1437 = vmatpush.msra.mxu0 0.0
        %1438 = vmatpush.msra.mxu0 0.0
        %1439 = vmatpush.msra.mxu0 0.0
        %1440 = vmatpush.msra.mxu0 0.0
        %1441 = vmatpush.msra.mxu0 0.0
        %1442 = vmatpush.msra.mxu0 0.0
        %1443 = vmatpush.msra.mxu0 0.0
        %1444 = vmatpush.msra.mxu0 0.0
        %1445 = vmatpush.msra.mxu0 0.0
        %1446 = vmatpush.msra.mxu0 0.0
        %1447 = vmatpush.msra.mxu0 0.0
        %1448 = vmatpush.msra.mxu0 %v245
        %1449 = vmatpush.msra.mxu0 %v244
        %1450 = vmatmul.f32.gmra.mxu0 %v1432
        %v1451 = vpop.f32.mrf.mxu0
        %v1452 = vadd.f32 %v1429, %v1451
        %1453 = vdwg.mxu0
        %1455 = vrot.lane.b32.xlu0 %v1452, 32
        %v1456 = vpop.permute.xlu0 %1455
        %v1458 = vsel %vm466, %v1406, %v1456
        %v1460 = vrot.slane %v1458, 1
        %1462 = vst.msk [vmem:[%s241 + $0x5] sm:$0x1] %vm471, %v1458
        %1463 = vst.msk [vmem:[%s241 + $0x15] sm:$0x1] %vm471, %v1460
        %v1464 = vld [vmem:[%s208 + $0x6] sm:$0x1]
        %v1465 = vld [vmem:[%s208 + $0x16] sm:$0x1]
        %v1466 = vld [vmem:[%s208 + $0x26] sm:$0x1]
        %v1467 = vld [vmem:[%s208 + $0x36] sm:$0x1]
        %v1472 = vrot.slane %v1465, 7
        %v1473 = vsel %vm265, %v1472, %v1464
        %v1474 = vrot.slane %v1466, 6
        %v1475 = vsel %vm268, %v1474, %v1473
        %v1476 = vrot.slane %v1467, 5
        %v1477 = vsel %vm271, %v1476, %v1475
        %v1478 = vsel %vm277, %v1477, 0
        %1480 = vmatpush.msra.mxu0 0.0
        %1481 = vmatpush.msra.mxu0 0.0
        %1482 = vmatpush.msra.mxu0 0.0
        %1483 = vmatpush.msra.mxu0 0.0
        %1484 = vmatpush.msra.mxu0 0.0
        %1485 = vmatpush.msra.mxu0 0.0
        %1486 = vmatpush.msra.mxu0 0.0
        %1487 = vmatpush.msra.mxu0 0.0
        %1488 = vmatpush.msra.mxu0 0.0
        %1489 = vmatpush.msra.mxu0 0.0
        %1490 = vmatpush.msra.mxu0 0.0
        %1491 = vmatpush.msra.mxu0 0.0
        %1492 = vmatpush.msra.mxu0 0.0
        %1493 = vmatpush.msra.mxu0 0.0
        %1494 = vmatpush.msra.mxu0 0.0
        %1495 = vmatpush.msra.mxu0 %v1478
        %1496 = vmatmul.f32.gmra.mxu0 %v275
        %v1497 = vpop.f32.mrf.mxu0
        %v1498 = vadd.f32 0.0, %v1497
        %1499 = vdwg.mxu0
        %1500 = vmatpush.msra.mxu0 0.0
        %1501 = vmatpush.msra.mxu0 0.0
        %1502 = vmatpush.msra.mxu0 0.0
        %1503 = vmatpush.msra.mxu0 0.0
        %1504 = vmatpush.msra.mxu0 0.0
        %1505 = vmatpush.msra.mxu0 0.0
        %1506 = vmatpush.msra.mxu0 0.0
        %1507 = vmatpush.msra.mxu0 0.0
        %1508 = vmatpush.msra.mxu0 0.0
        %1509 = vmatpush.msra.mxu0 0.0
        %1510 = vmatpush.msra.mxu0 0.0
        %1511 = vmatpush.msra.mxu0 0.0
        %1512 = vmatpush.msra.mxu0 0.0
        %1513 = vmatpush.msra.mxu0 0.0
        %1514 = vmatpush.msra.mxu0 0.0
        %1515 = vmatpush.msra.mxu0 %v1478
        %1516 = vmatmul.f32.gmra.mxu0 %v301
        %v1517 = vpop.f32.mrf.mxu0
        %v1518 = vadd.f32 0.0, %v1517
        %1519 = vdwg.mxu0
        %1520 = vmatpush.msra.mxu0 0.0
        %1521 = vmatpush.msra.mxu0 0.0
        %1522 = vmatpush.msra.mxu0 0.0
        %1523 = vmatpush.msra.mxu0 0.0
        %1524 = vmatpush.msra.mxu0 0.0
        %1525 = vmatpush.msra.mxu0 0.0
        %1526 = vmatpush.msra.mxu0 0.0
        %1527 = vmatpush.msra.mxu0 0.0
        %1528 = vmatpush.msra.mxu0 0.0
        %1529 = vmatpush.msra.mxu0 0.0
        %1530 = vmatpush.msra.mxu0 0.0
        %1531 = vmatpush.msra.mxu0 0.0
        %1532 = vmatpush.msra.mxu0 0.0
        %1533 = vmatpush.msra.mxu0 0.0
        %1534 = vmatpush.msra.mxu0 0.0
        %1535 = vmatpush.msra.mxu0 %v1478
        %1536 = vmatmul.f32.gmra.mxu0 %v324
        %v1537 = vpop.f32.mrf.mxu0
        %v1538 = vadd.f32 0.0, %v1537
        %1539 = vdwg.mxu0
        %1540 = vmatpush.msra.mxu0 0.0
        %1541 = vmatpush.msra.mxu0 0.0
        %1542 = vmatpush.msra.mxu0 0.0
        %1543 = vmatpush.msra.mxu0 0.0
        %1544 = vmatpush.msra.mxu0 0.0
        %1545 = vmatpush.msra.mxu0 0.0
        %1546 = vmatpush.msra.mxu0 0.0
        %1547 = vmatpush.msra.mxu0 0.0
        %1548 = vmatpush.msra.mxu0 0.0
        %1549 = vmatpush.msra.mxu0 0.0
        %1550 = vmatpush.msra.mxu0 0.0
        %1551 = vmatpush.msra.mxu0 0.0
        %1552 = vmatpush.msra.mxu0 0.0
        %1553 = vmatpush.msra.mxu0 0.0
        %1554 = vmatpush.msra.mxu0 0.0
        %1555 = vmatpush.msra.mxu0 %v1478
        %1556 = vmatmul.f32.gmra.mxu0 %v347
        %v1557 = vpop.f32.mrf.mxu0
        %v1558 = vadd.f32 0.0, %v1557
        %1559 = vdwg.mxu0
        %v1561 = vsel %vm369, %v1518, 0
        %1563 = vmatpush.msra.mxu0 0.0
        %1564 = vmatpush.msra.mxu0 0.0
        %1565 = vmatpush.msra.mxu0 0.0
        %1566 = vmatpush.msra.mxu0 0.0
        %1567 = vmatpush.msra.mxu0 0.0
        %1568 = vmatpush.msra.mxu0 0.0
        %1569 = vmatpush.msra.mxu0 0.0
        %1570 = vmatpush.msra.mxu0 0.0
        %1571 = vmatpush.msra.mxu0 0.0
        %1572 = vmatpush.msra.mxu0 0.0
        %1573 = vmatpush.msra.mxu0 0.0
        %1574 = vmatpush.msra.mxu0 0.0
        %1575 = vmatpush.msra.mxu0 0.0
        %1576 = vmatpush.msra.mxu0 0.0
        %1577 = vmatpush.msra.mxu0 %v248
        %1578 = vmatpush.msra.mxu0 %v247
        %1579 = vmatmul.f32.gmra.mxu0 %v1561
        %v1580 = vpop.f32.mrf.mxu0
        %v1581 = vadd.f32 0.0, %v1580
        %1582 = vdwg.mxu0
        %v1584 = vsel %vm369, %v1498, 0
        %1586 = vmatpush.msra.mxu0 0.0
        %1587 = vmatpush.msra.mxu0 0.0
        %1588 = vmatpush.msra.mxu0 0.0
        %1589 = vmatpush.msra.mxu0 0.0
        %1590 = vmatpush.msra.mxu0 0.0
        %1591 = vmatpush.msra.mxu0 0.0
        %1592 = vmatpush.msra.mxu0 0.0
        %1593 = vmatpush.msra.mxu0 0.0
        %1594 = vmatpush.msra.mxu0 0.0
        %1595 = vmatpush.msra.mxu0 0.0
        %1596 = vmatpush.msra.mxu0 0.0
        %1597 = vmatpush.msra.mxu0 0.0
        %1598 = vmatpush.msra.mxu0 0.0
        %1599 = vmatpush.msra.mxu0 0.0
        %1600 = vmatpush.msra.mxu0 %v245
        %1601 = vmatpush.msra.mxu0 %v244
        %1602 = vmatmul.f32.gmra.mxu0 %v1584
        %v1603 = vpop.f32.mrf.mxu0
        %v1604 = vadd.f32 %v1581, %v1603
        %1605 = vdwg.mxu0
        %v1607 = vsel %vm369, %v1558, 0
        %1609 = vmatpush.msra.mxu0 0.0
        %1610 = vmatpush.msra.mxu0 0.0
        %1611 = vmatpush.msra.mxu0 0.0
        %1612 = vmatpush.msra.mxu0 0.0
        %1613 = vmatpush.msra.mxu0 0.0
        %1614 = vmatpush.msra.mxu0 0.0
        %1615 = vmatpush.msra.mxu0 0.0
        %1616 = vmatpush.msra.mxu0 0.0
        %1617 = vmatpush.msra.mxu0 0.0
        %1618 = vmatpush.msra.mxu0 0.0
        %1619 = vmatpush.msra.mxu0 0.0
        %1620 = vmatpush.msra.mxu0 0.0
        %1621 = vmatpush.msra.mxu0 0.0
        %1622 = vmatpush.msra.mxu0 0.0
        %1623 = vmatpush.msra.mxu0 %v248
        %1624 = vmatpush.msra.mxu0 %v247
        %1625 = vmatmul.f32.gmra.mxu0 %v1607
        %v1626 = vpop.f32.mrf.mxu0
        %v1627 = vadd.f32 0.0, %v1626
        %1628 = vdwg.mxu0
        %v1630 = vsel %vm369, %v1538, 0
        %1632 = vmatpush.msra.mxu0 0.0
        %1633 = vmatpush.msra.mxu0 0.0
        %1634 = vmatpush.msra.mxu0 0.0
        %1635 = vmatpush.msra.mxu0 0.0
        %1636 = vmatpush.msra.mxu0 0.0
        %1637 = vmatpush.msra.mxu0 0.0
        %1638 = vmatpush.msra.mxu0 0.0
        %1639 = vmatpush.msra.mxu0 0.0
        %1640 = vmatpush.msra.mxu0 0.0
        %1641 = vmatpush.msra.mxu0 0.0
        %1642 = vmatpush.msra.mxu0 0.0
        %1643 = vmatpush.msra.mxu0 0.0
        %1644 = vmatpush.msra.mxu0 0.0
        %1645 = vmatpush.msra.mxu0 0.0
        %1646 = vmatpush.msra.mxu0 %v245
        %1647 = vmatpush.msra.mxu0 %v244
        %1648 = vmatmul.f32.gmra.mxu0 %v1630
        %v1649 = vpop.f32.mrf.mxu0
        %v1650 = vadd.f32 %v1627, %v1649
        %1651 = vdwg.mxu0
        %1653 = vrot.lane.b32.xlu0 %v1650, 32
        %v1654 = vpop.permute.xlu0 %1653
        %v1656 = vsel %vm466, %v1604, %v1654
        %v1658 = vrot.slane %v1656, 1
        %1660 = vst.msk [vmem:[%s241 + $0x6] sm:$0x1] %vm471, %v1656
        %1661 = vst.msk [vmem:[%s241 + $0x16] sm:$0x1] %vm471, %v1658
        %v1662 = vld [vmem:[%s208 + $0x7] sm:$0x1]
        %v1663 = vld [vmem:[%s208 + $0x17] sm:$0x1]
        %v1664 = vld [vmem:[%s208 + $0x27] sm:$0x1]
        %v1665 = vld [vmem:[%s208 + $0x37] sm:$0x1]
        %v1670 = vrot.slane %v1663, 7
        %v1671 = vsel %vm265, %v1670, %v1662
        %v1672 = vrot.slane %v1664, 6
        %v1673 = vsel %vm268, %v1672, %v1671
        %v1674 = vrot.slane %v1665, 5
        %v1675 = vsel %vm271, %v1674, %v1673
        %v1676 = vsel %vm277, %v1675, 0
        %1678 = vmatpush.msra.mxu0 0.0
        %1679 = vmatpush.msra.mxu0 0.0
        %1680 = vmatpush.msra.mxu0 0.0
        %1681 = vmatpush.msra.mxu0 0.0
        %1682 = vmatpush.msra.mxu0 0.0
        %1683 = vmatpush.msra.mxu0 0.0
        %1684 = vmatpush.msra.mxu0 0.0
        %1685 = vmatpush.msra.mxu0 0.0
        %1686 = vmatpush.msra.mxu0 0.0
        %1687 = vmatpush.msra.mxu0 0.0
        %1688 = vmatpush.msra.mxu0 0.0
        %1689 = vmatpush.msra.mxu0 0.0
        %1690 = vmatpush.msra.mxu0 0.0
        %1691 = vmatpush.msra.mxu0 0.0
        %1692 = vmatpush.msra.mxu0 0.0
        %1693 = vmatpush.msra.mxu0 %v1676
        %1694 = vmatmul.f32.gmra.mxu0 %v275
        %v1695 = vpop.f32.mrf.mxu0
        %v1696 = vadd.f32 0.0, %v1695
        %1697 = vdwg.mxu0
        %1698 = vmatpush.msra.mxu0 0.0
        %1699 = vmatpush.msra.mxu0 0.0
        %1700 = vmatpush.msra.mxu0 0.0
        %1701 = vmatpush.msra.mxu0 0.0
        %1702 = vmatpush.msra.mxu0 0.0
        %1703 = vmatpush.msra.mxu0 0.0
        %1704 = vmatpush.msra.mxu0 0.0
        %1705 = vmatpush.msra.mxu0 0.0
        %1706 = vmatpush.msra.mxu0 0.0
        %1707 = vmatpush.msra.mxu0 0.0
        %1708 = vmatpush.msra.mxu0 0.0
        %1709 = vmatpush.msra.mxu0 0.0
        %1710 = vmatpush.msra.mxu0 0.0
        %1711 = vmatpush.msra.mxu0 0.0
        %1712 = vmatpush.msra.mxu0 0.0
        %1713 = vmatpush.msra.mxu0 %v1676
        %1714 = vmatmul.f32.gmra.mxu0 %v301
        %v1715 = vpop.f32.mrf.mxu0
        %v1716 = vadd.f32 0.0, %v1715
        %1717 = vdwg.mxu0
        %1718 = vmatpush.msra.mxu0 0.0
        %1719 = vmatpush.msra.mxu0 0.0
        %1720 = vmatpush.msra.mxu0 0.0
        %1721 = vmatpush.msra.mxu0 0.0
        %1722 = vmatpush.msra.mxu0 0.0
        %1723 = vmatpush.msra.mxu0 0.0
        %1724 = vmatpush.msra.mxu0 0.0
        %1725 = vmatpush.msra.mxu0 0.0
        %1726 = vmatpush.msra.mxu0 0.0
        %1727 = vmatpush.msra.mxu0 0.0
        %1728 = vmatpush.msra.mxu0 0.0
        %1729 = vmatpush.msra.mxu0 0.0
        %1730 = vmatpush.msra.mxu0 0.0
        %1731 = vmatpush.msra.mxu0 0.0
        %1732 = vmatpush.msra.mxu0 0.0
        %1733 = vmatpush.msra.mxu0 %v1676
        %1734 = vmatmul.f32.gmra.mxu0 %v324
        %v1735 = vpop.f32.mrf.mxu0
        %v1736 = vadd.f32 0.0, %v1735
        %1737 = vdwg.mxu0
        %1738 = vmatpush.msra.mxu0 0.0
        %1739 = vmatpush.msra.mxu0 0.0
        %1740 = vmatpush.msra.mxu0 0.0
        %1741 = vmatpush.msra.mxu0 0.0
        %1742 = vmatpush.msra.mxu0 0.0
        %1743 = vmatpush.msra.mxu0 0.0
        %1744 = vmatpush.msra.mxu0 0.0
        %1745 = vmatpush.msra.mxu0 0.0
        %1746 = vmatpush.msra.mxu0 0.0
        %1747 = vmatpush.msra.mxu0 0.0
        %1748 = vmatpush.msra.mxu0 0.0
        %1749 = vmatpush.msra.mxu0 0.0
        %1750 = vmatpush.msra.mxu0 0.0
        %1751 = vmatpush.msra.mxu0 0.0
        %1752 = vmatpush.msra.mxu0 0.0
        %1753 = vmatpush.msra.mxu0 %v1676
        %1754 = vmatmul.f32.gmra.mxu0 %v347
        %v1755 = vpop.f32.mrf.mxu0
        %v1756 = vadd.f32 0.0, %v1755
        %1757 = vdwg.mxu0
        %v1759 = vsel %vm369, %v1716, 0
        %1761 = vmatpush.msra.mxu0 0.0
        %1762 = vmatpush.msra.mxu0 0.0
        %1763 = vmatpush.msra.mxu0 0.0
        %1764 = vmatpush.msra.mxu0 0.0
        %1765 = vmatpush.msra.mxu0 0.0
        %1766 = vmatpush.msra.mxu0 0.0
        %1767 = vmatpush.msra.mxu0 0.0
        %1768 = vmatpush.msra.mxu0 0.0
        %1769 = vmatpush.msra.mxu0 0.0
        %1770 = vmatpush.msra.mxu0 0.0
        %1771 = vmatpush.msra.mxu0 0.0
        %1772 = vmatpush.msra.mxu0 0.0
        %1773 = vmatpush.msra.mxu0 0.0
        %1774 = vmatpush.msra.mxu0 0.0
        %1775 = vmatpush.msra.mxu0 %v248
        %1776 = vmatpush.msra.mxu0 %v247
        %1777 = vmatmul.f32.gmra.mxu0 %v1759
        %v1778 = vpop.f32.mrf.mxu0
        %v1779 = vadd.f32 0.0, %v1778
        %1780 = vdwg.mxu0
        %v1782 = vsel %vm369, %v1696, 0
        %1784 = vmatpush.msra.mxu0 0.0
        %1785 = vmatpush.msra.mxu0 0.0
        %1786 = vmatpush.msra.mxu0 0.0
        %1787 = vmatpush.msra.mxu0 0.0
        %1788 = vmatpush.msra.mxu0 0.0
        %1789 = vmatpush.msra.mxu0 0.0
        %1790 = vmatpush.msra.mxu0 0.0
        %1791 = vmatpush.msra.mxu0 0.0
        %1792 = vmatpush.msra.mxu0 0.0
        %1793 = vmatpush.msra.mxu0 0.0
        %1794 = vmatpush.msra.mxu0 0.0
        %1795 = vmatpush.msra.mxu0 0.0
        %1796 = vmatpush.msra.mxu0 0.0
        %1797 = vmatpush.msra.mxu0 0.0
        %1798 = vmatpush.msra.mxu0 %v245
        %1799 = vmatpush.msra.mxu0 %v244
        %1800 = vmatmul.f32.gmra.mxu0 %v1782
        %v1801 = vpop.f32.mrf.mxu0
        %v1802 = vadd.f32 %v1779, %v1801
        %1803 = vdwg.mxu0
        %v1805 = vsel %vm369, %v1756, 0
        %1807 = vmatpush.msra.mxu0 0.0
        %1808 = vmatpush.msra.mxu0 0.0
        %1809 = vmatpush.msra.mxu0 0.0
        %1810 = vmatpush.msra.mxu0 0.0
        %1811 = vmatpush.msra.mxu0 0.0
        %1812 = vmatpush.msra.mxu0 0.0
        %1813 = vmatpush.msra.mxu0 0.0
        %1814 = vmatpush.msra.mxu0 0.0
        %1815 = vmatpush.msra.mxu0 0.0
        %1816 = vmatpush.msra.mxu0 0.0
        %1817 = vmatpush.msra.mxu0 0.0
        %1818 = vmatpush.msra.mxu0 0.0
        %1819 = vmatpush.msra.mxu0 0.0
        %1820 = vmatpush.msra.mxu0 0.0
        %1821 = vmatpush.msra.mxu0 %v248
        %1822 = vmatpush.msra.mxu0 %v247
        %1823 = vmatmul.f32.gmra.mxu0 %v1805
        %v1824 = vpop.f32.mrf.mxu0
        %v1825 = vadd.f32 0.0, %v1824
        %1826 = vdwg.mxu0
        %v1828 = vsel %vm369, %v1736, 0
        %1830 = vmatpush.msra.mxu0 0.0
        %1831 = vmatpush.msra.mxu0 0.0
        %1832 = vmatpush.msra.mxu0 0.0
        %1833 = vmatpush.msra.mxu0 0.0
        %1834 = vmatpush.msra.mxu0 0.0
        %1835 = vmatpush.msra.mxu0 0.0
        %1836 = vmatpush.msra.mxu0 0.0
        %1837 = vmatpush.msra.mxu0 0.0
        %1838 = vmatpush.msra.mxu0 0.0
        %1839 = vmatpush.msra.mxu0 0.0
        %1840 = vmatpush.msra.mxu0 0.0
        %1841 = vmatpush.msra.mxu0 0.0
        %1842 = vmatpush.msra.mxu0 0.0
        %1843 = vmatpush.msra.mxu0 0.0
        %1844 = vmatpush.msra.mxu0 %v245
        %1845 = vmatpush.msra.mxu0 %v244
        %1846 = vmatmul.f32.gmra.mxu0 %v1828
        %v1847 = vpop.f32.mrf.mxu0
        %v1848 = vadd.f32 %v1825, %v1847
        %1849 = vdwg.mxu0
        %1851 = vrot.lane.b32.xlu0 %v1848, 32
        %v1852 = vpop.permute.xlu0 %1851
        %v1854 = vsel %vm466, %v1802, %v1852
        %v1856 = vrot.slane %v1854, 1
        %1858 = vst.msk [vmem:[%s241 + $0x7] sm:$0x1] %vm471, %v1854
        %1859 = vst.msk [vmem:[%s241 + $0x17] sm:$0x1] %vm471, %v1856
        %v1860 = vld [vmem:[%s208 + $0x8] sm:$0x1]
        %v1861 = vld [vmem:[%s208 + $0x18] sm:$0x1]
        %v1862 = vld [vmem:[%s208 + $0x28] sm:$0x1]
        %v1863 = vld [vmem:[%s208 + $0x38] sm:$0x1]
        %v1868 = vrot.slane %v1861, 7
        %v1869 = vsel %vm265, %v1868, %v1860
        %v1870 = vrot.slane %v1862, 6
        %v1871 = vsel %vm268, %v1870, %v1869
        %v1872 = vrot.slane %v1863, 5
        %v1873 = vsel %vm271, %v1872, %v1871
        %v1874 = vsel %vm277, %v1873, 0
        %1876 = vmatpush.msra.mxu0 0.0
        %1877 = vmatpush.msra.mxu0 0.0
        %1878 = vmatpush.msra.mxu0 0.0
        %1879 = vmatpush.msra.mxu0 0.0
        %1880 = vmatpush.msra.mxu0 0.0
        %1881 = vmatpush.msra.mxu0 0.0
        %1882 = vmatpush.msra.mxu0 0.0
        %1883 = vmatpush.msra.mxu0 0.0
        %1884 = vmatpush.msra.mxu0 0.0
        %1885 = vmatpush.msra.mxu0 0.0
        %1886 = vmatpush.msra.mxu0 0.0
        %1887 = vmatpush.msra.mxu0 0.0
        %1888 = vmatpush.msra.mxu0 0.0
        %1889 = vmatpush.msra.mxu0 0.0
        %1890 = vmatpush.msra.mxu0 0.0
        %1891 = vmatpush.msra.mxu0 %v1874
        %1892 = vmatmul.f32.gmra.mxu0 %v275
        %v1893 = vpop.f32.mrf.mxu0
        %v1894 = vadd.f32 0.0, %v1893
        %1895 = vdwg.mxu0
        %1896 = vmatpush.msra.mxu0 0.0
        %1897 = vmatpush.msra.mxu0 0.0
        %1898 = vmatpush.msra.mxu0 0.0
        %1899 = vmatpush.msra.mxu0 0.0
        %1900 = vmatpush.msra.mxu0 0.0
        %1901 = vmatpush.msra.mxu0 0.0
        %1902 = vmatpush.msra.mxu0 0.0
        %1903 = vmatpush.msra.mxu0 0.0
        %1904 = vmatpush.msra.mxu0 0.0
        %1905 = vmatpush.msra.mxu0 0.0
        %1906 = vmatpush.msra.mxu0 0.0
        %1907 = vmatpush.msra.mxu0 0.0
        %1908 = vmatpush.msra.mxu0 0.0
        %1909 = vmatpush.msra.mxu0 0.0
        %1910 = vmatpush.msra.mxu0 0.0
        %1911 = vmatpush.msra.mxu0 %v1874
        %1912 = vmatmul.f32.gmra.mxu0 %v301
        %v1913 = vpop.f32.mrf.mxu0
        %v1914 = vadd.f32 0.0, %v1913
        %1915 = vdwg.mxu0
        %1916 = vmatpush.msra.mxu0 0.0
        %1917 = vmatpush.msra.mxu0 0.0
        %1918 = vmatpush.msra.mxu0 0.0
        %1919 = vmatpush.msra.mxu0 0.0
        %1920 = vmatpush.msra.mxu0 0.0
        %1921 = vmatpush.msra.mxu0 0.0
        %1922 = vmatpush.msra.mxu0 0.0
        %1923 = vmatpush.msra.mxu0 0.0
        %1924 = vmatpush.msra.mxu0 0.0
        %1925 = vmatpush.msra.mxu0 0.0
        %1926 = vmatpush.msra.mxu0 0.0
        %1927 = vmatpush.msra.mxu0 0.0
        %1928 = vmatpush.msra.mxu0 0.0
        %1929 = vmatpush.msra.mxu0 0.0
        %1930 = vmatpush.msra.mxu0 0.0
        %1931 = vmatpush.msra.mxu0 %v1874
        %1932 = vmatmul.f32.gmra.mxu0 %v324
        %v1933 = vpop.f32.mrf.mxu0
        %v1934 = vadd.f32 0.0, %v1933
        %1935 = vdwg.mxu0
        %1936 = vmatpush.msra.mxu0 0.0
        %1937 = vmatpush.msra.mxu0 0.0
        %1938 = vmatpush.msra.mxu0 0.0
        %1939 = vmatpush.msra.mxu0 0.0
        %1940 = vmatpush.msra.mxu0 0.0
        %1941 = vmatpush.msra.mxu0 0.0
        %1942 = vmatpush.msra.mxu0 0.0
        %1943 = vmatpush.msra.mxu0 0.0
        %1944 = vmatpush.msra.mxu0 0.0
        %1945 = vmatpush.msra.mxu0 0.0
        %1946 = vmatpush.msra.mxu0 0.0
        %1947 = vmatpush.msra.mxu0 0.0
        %1948 = vmatpush.msra.mxu0 0.0
        %1949 = vmatpush.msra.mxu0 0.0
        %1950 = vmatpush.msra.mxu0 0.0
        %1951 = vmatpush.msra.mxu0 %v1874
        %1952 = vmatmul.f32.gmra.mxu0 %v347
        %v1953 = vpop.f32.mrf.mxu0
        %v1954 = vadd.f32 0.0, %v1953
        %1955 = vdwg.mxu0
        %v1957 = vsel %vm369, %v1914, 0
        %1959 = vmatpush.msra.mxu0 0.0
        %1960 = vmatpush.msra.mxu0 0.0
        %1961 = vmatpush.msra.mxu0 0.0
        %1962 = vmatpush.msra.mxu0 0.0
        %1963 = vmatpush.msra.mxu0 0.0
        %1964 = vmatpush.msra.mxu0 0.0
        %1965 = vmatpush.msra.mxu0 0.0
        %1966 = vmatpush.msra.mxu0 0.0
        %1967 = vmatpush.msra.mxu0 0.0
        %1968 = vmatpush.msra.mxu0 0.0
        %1969 = vmatpush.msra.mxu0 0.0
        %1970 = vmatpush.msra.mxu0 0.0
        %1971 = vmatpush.msra.mxu0 0.0
        %1972 = vmatpush.msra.mxu0 0.0
        %1973 = vmatpush.msra.mxu0 %v248
        %1974 = vmatpush.msra.mxu0 %v247
        %1975 = vmatmul.f32.gmra.mxu0 %v1957
        %v1976 = vpop.f32.mrf.mxu0
        %v1977 = vadd.f32 0.0, %v1976
        %1978 = vdwg.mxu0
        %v1980 = vsel %vm369, %v1894, 0
        %1982 = vmatpush.msra.mxu0 0.0
        %1983 = vmatpush.msra.mxu0 0.0
        %1984 = vmatpush.msra.mxu0 0.0
        %1985 = vmatpush.msra.mxu0 0.0
        %1986 = vmatpush.msra.mxu0 0.0
        %1987 = vmatpush.msra.mxu0 0.0
        %1988 = vmatpush.msra.mxu0 0.0
        %1989 = vmatpush.msra.mxu0 0.0
        %1990 = vmatpush.msra.mxu0 0.0
        %1991 = vmatpush.msra.mxu0 0.0
        %1992 = vmatpush.msra.mxu0 0.0
        %1993 = vmatpush.msra.mxu0 0.0
        %1994 = vmatpush.msra.mxu0 0.0
        %1995 = vmatpush.msra.mxu0 0.0
        %1996 = vmatpush.msra.mxu0 %v245
        %1997 = vmatpush.msra.mxu0 %v244
        %1998 = vmatmul.f32.gmra.mxu0 %v1980
        %v1999 = vpop.f32.mrf.mxu0
        %v2000 = vadd.f32 %v1977, %v1999
        %2001 = vdwg.mxu0
        %v2003 = vsel %vm369, %v1954, 0
        %2005 = vmatpush.msra.mxu0 0.0
        %2006 = vmatpush.msra.mxu0 0.0
        %2007 = vmatpush.msra.mxu0 0.0
        %2008 = vmatpush.msra.mxu0 0.0
        %2009 = vmatpush.msra.mxu0 0.0
        %2010 = vmatpush.msra.mxu0 0.0
        %2011 = vmatpush.msra.mxu0 0.0
        %2012 = vmatpush.msra.mxu0 0.0
        %2013 = vmatpush.msra.mxu0 0.0
        %2014 = vmatpush.msra.mxu0 0.0
        %2015 = vmatpush.msra.mxu0 0.0
        %2016 = vmatpush.msra.mxu0 0.0
        %2017 = vmatpush.msra.mxu0 0.0
        %2018 = vmatpush.msra.mxu0 0.0
        %2019 = vmatpush.msra.mxu0 %v248
        %2020 = vmatpush.msra.mxu0 %v247
        %2021 = vmatmul.f32.gmra.mxu0 %v2003
        %v2022 = vpop.f32.mrf.mxu0
        %v2023 = vadd.f32 0.0, %v2022
        %2024 = vdwg.mxu0
        %v2026 = vsel %vm369, %v1934, 0
        %2028 = vmatpush.msra.mxu0 0.0
        %2029 = vmatpush.msra.mxu0 0.0
        %2030 = vmatpush.msra.mxu0 0.0
        %2031 = vmatpush.msra.mxu0 0.0
        %2032 = vmatpush.msra.mxu0 0.0
        %2033 = vmatpush.msra.mxu0 0.0
        %2034 = vmatpush.msra.mxu0 0.0
        %2035 = vmatpush.msra.mxu0 0.0
        %2036 = vmatpush.msra.mxu0 0.0
        %2037 = vmatpush.msra.mxu0 0.0
        %2038 = vmatpush.msra.mxu0 0.0
        %2039 = vmatpush.msra.mxu0 0.0
        %2040 = vmatpush.msra.mxu0 0.0
        %2041 = vmatpush.msra.mxu0 0.0
        %2042 = vmatpush.msra.mxu0 %v245
        %2043 = vmatpush.msra.mxu0 %v244
        %2044 = vmatmul.f32.gmra.mxu0 %v2026
        %v2045 = vpop.f32.mrf.mxu0
        %v2046 = vadd.f32 %v2023, %v2045
        %2047 = vdwg.mxu0
        %2049 = vrot.lane.b32.xlu0 %v2046, 32
        %v2050 = vpop.permute.xlu0 %2049
        %v2052 = vsel %vm466, %v2000, %v2050
        %v2054 = vrot.slane %v2052, 1
        %2056 = vst.msk [vmem:[%s241 + $0x8] sm:$0x1] %vm471, %v2052
        %2057 = vst.msk [vmem:[%s241 + $0x18] sm:$0x1] %vm471, %v2054
        %v2058 = vld [vmem:[%s208 + $0x9] sm:$0x1]
        %v2059 = vld [vmem:[%s208 + $0x19] sm:$0x1]
        %v2060 = vld [vmem:[%s208 + $0x29] sm:$0x1]
        %v2061 = vld [vmem:[%s208 + $0x39] sm:$0x1]
        %v2066 = vrot.slane %v2059, 7
        %v2067 = vsel %vm265, %v2066, %v2058
        %v2068 = vrot.slane %v2060, 6
        %v2069 = vsel %vm268, %v2068, %v2067
        %v2070 = vrot.slane %v2061, 5
        %v2071 = vsel %vm271, %v2070, %v2069
        %v2072 = vsel %vm277, %v2071, 0
        %2074 = vmatpush.msra.mxu0 0.0
        %2075 = vmatpush.msra.mxu0 0.0
        %2076 = vmatpush.msra.mxu0 0.0
        %2077 = vmatpush.msra.mxu0 0.0
        %2078 = vmatpush.msra.mxu0 0.0
        %2079 = vmatpush.msra.mxu0 0.0
        %2080 = vmatpush.msra.mxu0 0.0
        %2081 = vmatpush.msra.mxu0 0.0
        %2082 = vmatpush.msra.mxu0 0.0
        %2083 = vmatpush.msra.mxu0 0.0
        %2084 = vmatpush.msra.mxu0 0.0
        %2085 = vmatpush.msra.mxu0 0.0
        %2086 = vmatpush.msra.mxu0 0.0
        %2087 = vmatpush.msra.mxu0 0.0
        %2088 = vmatpush.msra.mxu0 0.0
        %2089 = vmatpush.msra.mxu0 %v2072
        %2090 = vmatmul.f32.gmra.mxu0 %v275
        %v2091 = vpop.f32.mrf.mxu0
        %v2092 = vadd.f32 0.0, %v2091
        %2093 = vdwg.mxu0
        %2094 = vmatpush.msra.mxu0 0.0
        %2095 = vmatpush.msra.mxu0 0.0
        %2096 = vmatpush.msra.mxu0 0.0
        %2097 = vmatpush.msra.mxu0 0.0
        %2098 = vmatpush.msra.mxu0 0.0
        %2099 = vmatpush.msra.mxu0 0.0
        %2100 = vmatpush.msra.mxu0 0.0
        %2101 = vmatpush.msra.mxu0 0.0
        %2102 = vmatpush.msra.mxu0 0.0
        %2103 = vmatpush.msra.mxu0 0.0
        %2104 = vmatpush.msra.mxu0 0.0
        %2105 = vmatpush.msra.mxu0 0.0
        %2106 = vmatpush.msra.mxu0 0.0
        %2107 = vmatpush.msra.mxu0 0.0
        %2108 = vmatpush.msra.mxu0 0.0
        %2109 = vmatpush.msra.mxu0 %v2072
        %2110 = vmatmul.f32.gmra.mxu0 %v301
        %v2111 = vpop.f32.mrf.mxu0
        %v2112 = vadd.f32 0.0, %v2111
        %2113 = vdwg.mxu0
        %2114 = vmatpush.msra.mxu0 0.0
        %2115 = vmatpush.msra.mxu0 0.0
        %2116 = vmatpush.msra.mxu0 0.0
        %2117 = vmatpush.msra.mxu0 0.0
        %2118 = vmatpush.msra.mxu0 0.0
        %2119 = vmatpush.msra.mxu0 0.0
        %2120 = vmatpush.msra.mxu0 0.0
        %2121 = vmatpush.msra.mxu0 0.0
        %2122 = vmatpush.msra.mxu0 0.0
        %2123 = vmatpush.msra.mxu0 0.0
        %2124 = vmatpush.msra.mxu0 0.0
        %2125 = vmatpush.msra.mxu0 0.0
        %2126 = vmatpush.msra.mxu0 0.0
        %2127 = vmatpush.msra.mxu0 0.0
        %2128 = vmatpush.msra.mxu0 0.0
        %2129 = vmatpush.msra.mxu0 %v2072
        %2130 = vmatmul.f32.gmra.mxu0 %v324
        %v2131 = vpop.f32.mrf.mxu0
        %v2132 = vadd.f32 0.0, %v2131
        %2133 = vdwg.mxu0
        %2134 = vmatpush.msra.mxu0 0.0
        %2135 = vmatpush.msra.mxu0 0.0
        %2136 = vmatpush.msra.mxu0 0.0
        %2137 = vmatpush.msra.mxu0 0.0
        %2138 = vmatpush.msra.mxu0 0.0
        %2139 = vmatpush.msra.mxu0 0.0
        %2140 = vmatpush.msra.mxu0 0.0
        %2141 = vmatpush.msra.mxu0 0.0
        %2142 = vmatpush.msra.mxu0 0.0
        %2143 = vmatpush.msra.mxu0 0.0
        %2144 = vmatpush.msra.mxu0 0.0
        %2145 = vmatpush.msra.mxu0 0.0
        %2146 = vmatpush.msra.mxu0 0.0
        %2147 = vmatpush.msra.mxu0 0.0
        %2148 = vmatpush.msra.mxu0 0.0
        %2149 = vmatpush.msra.mxu0 %v2072
        %2150 = vmatmul.f32.gmra.mxu0 %v347
        %v2151 = vpop.f32.mrf.mxu0
        %v2152 = vadd.f32 0.0, %v2151
        %2153 = vdwg.mxu0
        %v2155 = vsel %vm369, %v2112, 0
        %2157 = vmatpush.msra.mxu0 0.0
        %2158 = vmatpush.msra.mxu0 0.0
        %2159 = vmatpush.msra.mxu0 0.0
        %2160 = vmatpush.msra.mxu0 0.0
        %2161 = vmatpush.msra.mxu0 0.0
        %2162 = vmatpush.msra.mxu0 0.0
        %2163 = vmatpush.msra.mxu0 0.0
        %2164 = vmatpush.msra.mxu0 0.0
        %2165 = vmatpush.msra.mxu0 0.0
        %2166 = vmatpush.msra.mxu0 0.0
        %2167 = vmatpush.msra.mxu0 0.0
        %2168 = vmatpush.msra.mxu0 0.0
        %2169 = vmatpush.msra.mxu0 0.0
        %2170 = vmatpush.msra.mxu0 0.0
        %2171 = vmatpush.msra.mxu0 %v248
        %2172 = vmatpush.msra.mxu0 %v247
        %2173 = vmatmul.f32.gmra.mxu0 %v2155
        %v2174 = vpop.f32.mrf.mxu0
        %v2175 = vadd.f32 0.0, %v2174
        %2176 = vdwg.mxu0
        %v2178 = vsel %vm369, %v2092, 0
        %2180 = vmatpush.msra.mxu0 0.0
        %2181 = vmatpush.msra.mxu0 0.0
        %2182 = vmatpush.msra.mxu0 0.0
        %2183 = vmatpush.msra.mxu0 0.0
        %2184 = vmatpush.msra.mxu0 0.0
        %2185 = vmatpush.msra.mxu0 0.0
        %2186 = vmatpush.msra.mxu0 0.0
        %2187 = vmatpush.msra.mxu0 0.0
        %2188 = vmatpush.msra.mxu0 0.0
        %2189 = vmatpush.msra.mxu0 0.0
        %2190 = vmatpush.msra.mxu0 0.0
        %2191 = vmatpush.msra.mxu0 0.0
        %2192 = vmatpush.msra.mxu0 0.0
        %2193 = vmatpush.msra.mxu0 0.0
        %2194 = vmatpush.msra.mxu0 %v245
        %2195 = vmatpush.msra.mxu0 %v244
        %2196 = vmatmul.f32.gmra.mxu0 %v2178
        %v2197 = vpop.f32.mrf.mxu0
        %v2198 = vadd.f32 %v2175, %v2197
        %2199 = vdwg.mxu0
        %v2201 = vsel %vm369, %v2152, 0
        %2203 = vmatpush.msra.mxu0 0.0
        %2204 = vmatpush.msra.mxu0 0.0
        %2205 = vmatpush.msra.mxu0 0.0
        %2206 = vmatpush.msra.mxu0 0.0
        %2207 = vmatpush.msra.mxu0 0.0
        %2208 = vmatpush.msra.mxu0 0.0
        %2209 = vmatpush.msra.mxu0 0.0
        %2210 = vmatpush.msra.mxu0 0.0
        %2211 = vmatpush.msra.mxu0 0.0
        %2212 = vmatpush.msra.mxu0 0.0
        %2213 = vmatpush.msra.mxu0 0.0
        %2214 = vmatpush.msra.mxu0 0.0
        %2215 = vmatpush.msra.mxu0 0.0
        %2216 = vmatpush.msra.mxu0 0.0
        %2217 = vmatpush.msra.mxu0 %v248
        %2218 = vmatpush.msra.mxu0 %v247
        %2219 = vmatmul.f32.gmra.mxu0 %v2201
        %v2220 = vpop.f32.mrf.mxu0
        %v2221 = vadd.f32 0.0, %v2220
        %2222 = vdwg.mxu0
        %v2224 = vsel %vm369, %v2132, 0
        %2226 = vmatpush.msra.mxu0 0.0
        %2227 = vmatpush.msra.mxu0 0.0
        %2228 = vmatpush.msra.mxu0 0.0
        %2229 = vmatpush.msra.mxu0 0.0
        %2230 = vmatpush.msra.mxu0 0.0
        %2231 = vmatpush.msra.mxu0 0.0
        %2232 = vmatpush.msra.mxu0 0.0
        %2233 = vmatpush.msra.mxu0 0.0
        %2234 = vmatpush.msra.mxu0 0.0
        %2235 = vmatpush.msra.mxu0 0.0
        %2236 = vmatpush.msra.mxu0 0.0
        %2237 = vmatpush.msra.mxu0 0.0
        %2238 = vmatpush.msra.mxu0 0.0
        %2239 = vmatpush.msra.mxu0 0.0
        %2240 = vmatpush.msra.mxu0 %v245
        %2241 = vmatpush.msra.mxu0 %v244
        %2242 = vmatmul.f32.gmra.mxu0 %v2224
        %v2243 = vpop.f32.mrf.mxu0
        %v2244 = vadd.f32 %v2221, %v2243
        %2245 = vdwg.mxu0
        %2247 = vrot.lane.b32.xlu0 %v2244, 32
        %v2248 = vpop.permute.xlu0 %2247
        %v2250 = vsel %vm466, %v2198, %v2248
        %v2252 = vrot.slane %v2250, 1
        %2254 = vst.msk [vmem:[%s241 + $0x9] sm:$0x1] %vm471, %v2250
        %2255 = vst.msk [vmem:[%s241 + $0x19] sm:$0x1] %vm471, %v2252
        %v2256 = vld [vmem:[%s208 + $0xa] sm:$0x1]
        %v2257 = vld [vmem:[%s208 + $0x1a] sm:$0x1]
        %v2258 = vld [vmem:[%s208 + $0x2a] sm:$0x1]
        %v2259 = vld [vmem:[%s208 + $0x3a] sm:$0x1]
        %v2264 = vrot.slane %v2257, 7
        %v2265 = vsel %vm265, %v2264, %v2256
        %v2266 = vrot.slane %v2258, 6
        %v2267 = vsel %vm268, %v2266, %v2265
        %v2268 = vrot.slane %v2259, 5
        %v2269 = vsel %vm271, %v2268, %v2267
        %v2270 = vsel %vm277, %v2269, 0
        %2272 = vmatpush.msra.mxu0 0.0
        %2273 = vmatpush.msra.mxu0 0.0
        %2274 = vmatpush.msra.mxu0 0.0
        %2275 = vmatpush.msra.mxu0 0.0
        %2276 = vmatpush.msra.mxu0 0.0
        %2277 = vmatpush.msra.mxu0 0.0
        %2278 = vmatpush.msra.mxu0 0.0
        %2279 = vmatpush.msra.mxu0 0.0
        %2280 = vmatpush.msra.mxu0 0.0
        %2281 = vmatpush.msra.mxu0 0.0
        %2282 = vmatpush.msra.mxu0 0.0
        %2283 = vmatpush.msra.mxu0 0.0
        %2284 = vmatpush.msra.mxu0 0.0
        %2285 = vmatpush.msra.mxu0 0.0
        %2286 = vmatpush.msra.mxu0 0.0
        %2287 = vmatpush.msra.mxu0 %v2270
        %2288 = vmatmul.f32.gmra.mxu0 %v275
        %v2289 = vpop.f32.mrf.mxu0
        %v2290 = vadd.f32 0.0, %v2289
        %2291 = vdwg.mxu0
        %2292 = vmatpush.msra.mxu0 0.0
        %2293 = vmatpush.msra.mxu0 0.0
        %2294 = vmatpush.msra.mxu0 0.0
        %2295 = vmatpush.msra.mxu0 0.0
        %2296 = vmatpush.msra.mxu0 0.0
        %2297 = vmatpush.msra.mxu0 0.0
        %2298 = vmatpush.msra.mxu0 0.0
        %2299 = vmatpush.msra.mxu0 0.0
        %2300 = vmatpush.msra.mxu0 0.0
        %2301 = vmatpush.msra.mxu0 0.0
        %2302 = vmatpush.msra.mxu0 0.0
        %2303 = vmatpush.msra.mxu0 0.0
        %2304 = vmatpush.msra.mxu0 0.0
        %2305 = vmatpush.msra.mxu0 0.0
        %2306 = vmatpush.msra.mxu0 0.0
        %2307 = vmatpush.msra.mxu0 %v2270
        %2308 = vmatmul.f32.gmra.mxu0 %v301
        %v2309 = vpop.f32.mrf.mxu0
        %v2310 = vadd.f32 0.0, %v2309
        %2311 = vdwg.mxu0
        %2312 = vmatpush.msra.mxu0 0.0
        %2313 = vmatpush.msra.mxu0 0.0
        %2314 = vmatpush.msra.mxu0 0.0
        %2315 = vmatpush.msra.mxu0 0.0
        %2316 = vmatpush.msra.mxu0 0.0
        %2317 = vmatpush.msra.mxu0 0.0
        %2318 = vmatpush.msra.mxu0 0.0
        %2319 = vmatpush.msra.mxu0 0.0
        %2320 = vmatpush.msra.mxu0 0.0
        %2321 = vmatpush.msra.mxu0 0.0
        %2322 = vmatpush.msra.mxu0 0.0
        %2323 = vmatpush.msra.mxu0 0.0
        %2324 = vmatpush.msra.mxu0 0.0
        %2325 = vmatpush.msra.mxu0 0.0
        %2326 = vmatpush.msra.mxu0 0.0
        %2327 = vmatpush.msra.mxu0 %v2270
        %2328 = vmatmul.f32.gmra.mxu0 %v324
        %v2329 = vpop.f32.mrf.mxu0
        %v2330 = vadd.f32 0.0, %v2329
        %2331 = vdwg.mxu0
        %2332 = vmatpush.msra.mxu0 0.0
        %2333 = vmatpush.msra.mxu0 0.0
        %2334 = vmatpush.msra.mxu0 0.0
        %2335 = vmatpush.msra.mxu0 0.0
        %2336 = vmatpush.msra.mxu0 0.0
        %2337 = vmatpush.msra.mxu0 0.0
        %2338 = vmatpush.msra.mxu0 0.0
        %2339 = vmatpush.msra.mxu0 0.0
        %2340 = vmatpush.msra.mxu0 0.0
        %2341 = vmatpush.msra.mxu0 0.0
        %2342 = vmatpush.msra.mxu0 0.0
        %2343 = vmatpush.msra.mxu0 0.0
        %2344 = vmatpush.msra.mxu0 0.0
        %2345 = vmatpush.msra.mxu0 0.0
        %2346 = vmatpush.msra.mxu0 0.0
        %2347 = vmatpush.msra.mxu0 %v2270
        %2348 = vmatmul.f32.gmra.mxu0 %v347
        %v2349 = vpop.f32.mrf.mxu0
        %v2350 = vadd.f32 0.0, %v2349
        %2351 = vdwg.mxu0
        %v2353 = vsel %vm369, %v2310, 0
        %2355 = vmatpush.msra.mxu0 0.0
        %2356 = vmatpush.msra.mxu0 0.0
        %2357 = vmatpush.msra.mxu0 0.0
        %2358 = vmatpush.msra.mxu0 0.0
        %2359 = vmatpush.msra.mxu0 0.0
        %2360 = vmatpush.msra.mxu0 0.0
        %2361 = vmatpush.msra.mxu0 0.0
        %2362 = vmatpush.msra.mxu0 0.0
        %2363 = vmatpush.msra.mxu0 0.0
        %2364 = vmatpush.msra.mxu0 0.0
        %2365 = vmatpush.msra.mxu0 0.0
        %2366 = vmatpush.msra.mxu0 0.0
        %2367 = vmatpush.msra.mxu0 0.0
        %2368 = vmatpush.msra.mxu0 0.0
        %2369 = vmatpush.msra.mxu0 %v248
        %2370 = vmatpush.msra.mxu0 %v247
        %2371 = vmatmul.f32.gmra.mxu0 %v2353
        %v2372 = vpop.f32.mrf.mxu0
        %v2373 = vadd.f32 0.0, %v2372
        %2374 = vdwg.mxu0
        %v2376 = vsel %vm369, %v2290, 0
        %2378 = vmatpush.msra.mxu0 0.0
        %2379 = vmatpush.msra.mxu0 0.0
        %2380 = vmatpush.msra.mxu0 0.0
        %2381 = vmatpush.msra.mxu0 0.0
        %2382 = vmatpush.msra.mxu0 0.0
        %2383 = vmatpush.msra.mxu0 0.0
        %2384 = vmatpush.msra.mxu0 0.0
        %2385 = vmatpush.msra.mxu0 0.0
        %2386 = vmatpush.msra.mxu0 0.0
        %2387 = vmatpush.msra.mxu0 0.0
        %2388 = vmatpush.msra.mxu0 0.0
        %2389 = vmatpush.msra.mxu0 0.0
        %2390 = vmatpush.msra.mxu0 0.0
        %2391 = vmatpush.msra.mxu0 0.0
        %2392 = vmatpush.msra.mxu0 %v245
        %2393 = vmatpush.msra.mxu0 %v244
        %2394 = vmatmul.f32.gmra.mxu0 %v2376
        %v2395 = vpop.f32.mrf.mxu0
        %v2396 = vadd.f32 %v2373, %v2395
        %2397 = vdwg.mxu0
        %v2399 = vsel %vm369, %v2350, 0
        %2401 = vmatpush.msra.mxu0 0.0
        %2402 = vmatpush.msra.mxu0 0.0
        %2403 = vmatpush.msra.mxu0 0.0
        %2404 = vmatpush.msra.mxu0 0.0
        %2405 = vmatpush.msra.mxu0 0.0
        %2406 = vmatpush.msra.mxu0 0.0
        %2407 = vmatpush.msra.mxu0 0.0
        %2408 = vmatpush.msra.mxu0 0.0
        %2409 = vmatpush.msra.mxu0 0.0
        %2410 = vmatpush.msra.mxu0 0.0
        %2411 = vmatpush.msra.mxu0 0.0
        %2412 = vmatpush.msra.mxu0 0.0
        %2413 = vmatpush.msra.mxu0 0.0
        %2414 = vmatpush.msra.mxu0 0.0
        %2415 = vmatpush.msra.mxu0 %v248
        %2416 = vmatpush.msra.mxu0 %v247
        %2417 = vmatmul.f32.gmra.mxu0 %v2399
        %v2418 = vpop.f32.mrf.mxu0
        %v2419 = vadd.f32 0.0, %v2418
        %2420 = vdwg.mxu0
        %v2422 = vsel %vm369, %v2330, 0
        %2424 = vmatpush.msra.mxu0 0.0
        %2425 = vmatpush.msra.mxu0 0.0
        %2426 = vmatpush.msra.mxu0 0.0
        %2427 = vmatpush.msra.mxu0 0.0
        %2428 = vmatpush.msra.mxu0 0.0
        %2429 = vmatpush.msra.mxu0 0.0
        %2430 = vmatpush.msra.mxu0 0.0
        %2431 = vmatpush.msra.mxu0 0.0
        %2432 = vmatpush.msra.mxu0 0.0
        %2433 = vmatpush.msra.mxu0 0.0
        %2434 = vmatpush.msra.mxu0 0.0
        %2435 = vmatpush.msra.mxu0 0.0
        %2436 = vmatpush.msra.mxu0 0.0
        %2437 = vmatpush.msra.mxu0 0.0
        %2438 = vmatpush.msra.mxu0 %v245
        %2439 = vmatpush.msra.mxu0 %v244
        %2440 = vmatmul.f32.gmra.mxu0 %v2422
        %v2441 = vpop.f32.mrf.mxu0
        %v2442 = vadd.f32 %v2419, %v2441
        %2443 = vdwg.mxu0
        %2445 = vrot.lane.b32.xlu0 %v2442, 32
        %v2446 = vpop.permute.xlu0 %2445
        %v2448 = vsel %vm466, %v2396, %v2446
        %v2450 = vrot.slane %v2448, 1
        %2452 = vst.msk [vmem:[%s241 + $0xa] sm:$0x1] %vm471, %v2448
        %2453 = vst.msk [vmem:[%s241 + $0x1a] sm:$0x1] %vm471, %v2450
        %v2454 = vld [vmem:[%s208 + $0xb] sm:$0x1]
        %v2455 = vld [vmem:[%s208 + $0x1b] sm:$0x1]
        %v2456 = vld [vmem:[%s208 + $0x2b] sm:$0x1]
        %v2457 = vld [vmem:[%s208 + $0x3b] sm:$0x1]
        %v2462 = vrot.slane %v2455, 7
        %v2463 = vsel %vm265, %v2462, %v2454
        %v2464 = vrot.slane %v2456, 6
        %v2465 = vsel %vm268, %v2464, %v2463
        %v2466 = vrot.slane %v2457, 5
        %v2467 = vsel %vm271, %v2466, %v2465
        %v2468 = vsel %vm277, %v2467, 0
        %2470 = vmatpush.msra.mxu0 0.0
        %2471 = vmatpush.msra.mxu0 0.0
        %2472 = vmatpush.msra.mxu0 0.0
        %2473 = vmatpush.msra.mxu0 0.0
        %2474 = vmatpush.msra.mxu0 0.0
        %2475 = vmatpush.msra.mxu0 0.0
        %2476 = vmatpush.msra.mxu0 0.0
        %2477 = vmatpush.msra.mxu0 0.0
        %2478 = vmatpush.msra.mxu0 0.0
        %2479 = vmatpush.msra.mxu0 0.0
        %2480 = vmatpush.msra.mxu0 0.0
        %2481 = vmatpush.msra.mxu0 0.0
        %2482 = vmatpush.msra.mxu0 0.0
        %2483 = vmatpush.msra.mxu0 0.0
        %2484 = vmatpush.msra.mxu0 0.0
        %2485 = vmatpush.msra.mxu0 %v2468
        %2486 = vmatmul.f32.gmra.mxu0 %v275
        %v2487 = vpop.f32.mrf.mxu0
        %v2488 = vadd.f32 0.0, %v2487
        %2489 = vdwg.mxu0
        %2490 = vmatpush.msra.mxu0 0.0
        %2491 = vmatpush.msra.mxu0 0.0
        %2492 = vmatpush.msra.mxu0 0.0
        %2493 = vmatpush.msra.mxu0 0.0
        %2494 = vmatpush.msra.mxu0 0.0
        %2495 = vmatpush.msra.mxu0 0.0
        %2496 = vmatpush.msra.mxu0 0.0
        %2497 = vmatpush.msra.mxu0 0.0
        %2498 = vmatpush.msra.mxu0 0.0
        %2499 = vmatpush.msra.mxu0 0.0
        %2500 = vmatpush.msra.mxu0 0.0
        %2501 = vmatpush.msra.mxu0 0.0
        %2502 = vmatpush.msra.mxu0 0.0
        %2503 = vmatpush.msra.mxu0 0.0
        %2504 = vmatpush.msra.mxu0 0.0
        %2505 = vmatpush.msra.mxu0 %v2468
        %2506 = vmatmul.f32.gmra.mxu0 %v301
        %v2507 = vpop.f32.mrf.mxu0
        %v2508 = vadd.f32 0.0, %v2507
        %2509 = vdwg.mxu0
        %2510 = vmatpush.msra.mxu0 0.0
        %2511 = vmatpush.msra.mxu0 0.0
        %2512 = vmatpush.msra.mxu0 0.0
        %2513 = vmatpush.msra.mxu0 0.0
        %2514 = vmatpush.msra.mxu0 0.0
        %2515 = vmatpush.msra.mxu0 0.0
        %2516 = vmatpush.msra.mxu0 0.0
        %2517 = vmatpush.msra.mxu0 0.0
        %2518 = vmatpush.msra.mxu0 0.0
        %2519 = vmatpush.msra.mxu0 0.0
        %2520 = vmatpush.msra.mxu0 0.0
        %2521 = vmatpush.msra.mxu0 0.0
        %2522 = vmatpush.msra.mxu0 0.0
        %2523 = vmatpush.msra.mxu0 0.0
        %2524 = vmatpush.msra.mxu0 0.0
        %2525 = vmatpush.msra.mxu0 %v2468
        %2526 = vmatmul.f32.gmra.mxu0 %v324
        %v2527 = vpop.f32.mrf.mxu0
        %v2528 = vadd.f32 0.0, %v2527
        %2529 = vdwg.mxu0
        %2530 = vmatpush.msra.mxu0 0.0
        %2531 = vmatpush.msra.mxu0 0.0
        %2532 = vmatpush.msra.mxu0 0.0
        %2533 = vmatpush.msra.mxu0 0.0
        %2534 = vmatpush.msra.mxu0 0.0
        %2535 = vmatpush.msra.mxu0 0.0
        %2536 = vmatpush.msra.mxu0 0.0
        %2537 = vmatpush.msra.mxu0 0.0
        %2538 = vmatpush.msra.mxu0 0.0
        %2539 = vmatpush.msra.mxu0 0.0
        %2540 = vmatpush.msra.mxu0 0.0
        %2541 = vmatpush.msra.mxu0 0.0
        %2542 = vmatpush.msra.mxu0 0.0
        %2543 = vmatpush.msra.mxu0 0.0
        %2544 = vmatpush.msra.mxu0 0.0
        %2545 = vmatpush.msra.mxu0 %v2468
        %2546 = vmatmul.f32.gmra.mxu0 %v347
        %v2547 = vpop.f32.mrf.mxu0
        %v2548 = vadd.f32 0.0, %v2547
        %2549 = vdwg.mxu0
        %v2551 = vsel %vm369, %v2508, 0
        %2553 = vmatpush.msra.mxu0 0.0
        %2554 = vmatpush.msra.mxu0 0.0
        %2555 = vmatpush.msra.mxu0 0.0
        %2556 = vmatpush.msra.mxu0 0.0
        %2557 = vmatpush.msra.mxu0 0.0
        %2558 = vmatpush.msra.mxu0 0.0
        %2559 = vmatpush.msra.mxu0 0.0
        %2560 = vmatpush.msra.mxu0 0.0
        %2561 = vmatpush.msra.mxu0 0.0
        %2562 = vmatpush.msra.mxu0 0.0
        %2563 = vmatpush.msra.mxu0 0.0
        %2564 = vmatpush.msra.mxu0 0.0
        %2565 = vmatpush.msra.mxu0 0.0
        %2566 = vmatpush.msra.mxu0 0.0
        %2567 = vmatpush.msra.mxu0 %v248
        %2568 = vmatpush.msra.mxu0 %v247
        %2569 = vmatmul.f32.gmra.mxu0 %v2551
        %v2570 = vpop.f32.mrf.mxu0
        %v2571 = vadd.f32 0.0, %v2570
        %2572 = vdwg.mxu0
        %v2574 = vsel %vm369, %v2488, 0
        %2576 = vmatpush.msra.mxu0 0.0
        %2577 = vmatpush.msra.mxu0 0.0
        %2578 = vmatpush.msra.mxu0 0.0
        %2579 = vmatpush.msra.mxu0 0.0
        %2580 = vmatpush.msra.mxu0 0.0
        %2581 = vmatpush.msra.mxu0 0.0
        %2582 = vmatpush.msra.mxu0 0.0
        %2583 = vmatpush.msra.mxu0 0.0
        %2584 = vmatpush.msra.mxu0 0.0
        %2585 = vmatpush.msra.mxu0 0.0
        %2586 = vmatpush.msra.mxu0 0.0
        %2587 = vmatpush.msra.mxu0 0.0
        %2588 = vmatpush.msra.mxu0 0.0
        %2589 = vmatpush.msra.mxu0 0.0
        %2590 = vmatpush.msra.mxu0 %v245
        %2591 = vmatpush.msra.mxu0 %v244
        %2592 = vmatmul.f32.gmra.mxu0 %v2574
        %v2593 = vpop.f32.mrf.mxu0
        %v2594 = vadd.f32 %v2571, %v2593
        %2595 = vdwg.mxu0
        %v2597 = vsel %vm369, %v2548, 0
        %2599 = vmatpush.msra.mxu0 0.0
        %2600 = vmatpush.msra.mxu0 0.0
        %2601 = vmatpush.msra.mxu0 0.0
        %2602 = vmatpush.msra.mxu0 0.0
        %2603 = vmatpush.msra.mxu0 0.0
        %2604 = vmatpush.msra.mxu0 0.0
        %2605 = vmatpush.msra.mxu0 0.0
        %2606 = vmatpush.msra.mxu0 0.0
        %2607 = vmatpush.msra.mxu0 0.0
        %2608 = vmatpush.msra.mxu0 0.0
        %2609 = vmatpush.msra.mxu0 0.0
        %2610 = vmatpush.msra.mxu0 0.0
        %2611 = vmatpush.msra.mxu0 0.0
        %2612 = vmatpush.msra.mxu0 0.0
        %2613 = vmatpush.msra.mxu0 %v248
        %2614 = vmatpush.msra.mxu0 %v247
        %2615 = vmatmul.f32.gmra.mxu0 %v2597
        %v2616 = vpop.f32.mrf.mxu0
        %v2617 = vadd.f32 0.0, %v2616
        %2618 = vdwg.mxu0
        %v2620 = vsel %vm369, %v2528, 0
        %2622 = vmatpush.msra.mxu0 0.0
        %2623 = vmatpush.msra.mxu0 0.0
        %2624 = vmatpush.msra.mxu0 0.0
        %2625 = vmatpush.msra.mxu0 0.0
        %2626 = vmatpush.msra.mxu0 0.0
        %2627 = vmatpush.msra.mxu0 0.0
        %2628 = vmatpush.msra.mxu0 0.0
        %2629 = vmatpush.msra.mxu0 0.0
        %2630 = vmatpush.msra.mxu0 0.0
        %2631 = vmatpush.msra.mxu0 0.0
        %2632 = vmatpush.msra.mxu0 0.0
        %2633 = vmatpush.msra.mxu0 0.0
        %2634 = vmatpush.msra.mxu0 0.0
        %2635 = vmatpush.msra.mxu0 0.0
        %2636 = vmatpush.msra.mxu0 %v245
        %2637 = vmatpush.msra.mxu0 %v244
        %2638 = vmatmul.f32.gmra.mxu0 %v2620
        %v2639 = vpop.f32.mrf.mxu0
        %v2640 = vadd.f32 %v2617, %v2639
        %2641 = vdwg.mxu0
        %2643 = vrot.lane.b32.xlu0 %v2640, 32
        %v2644 = vpop.permute.xlu0 %2643
        %v2646 = vsel %vm466, %v2594, %v2644
        %v2648 = vrot.slane %v2646, 1
        %2650 = vst.msk [vmem:[%s241 + $0xb] sm:$0x1] %vm471, %v2646
        %2651 = vst.msk [vmem:[%s241 + $0x1b] sm:$0x1] %vm471, %v2648
        %v2652 = vld [vmem:[%s208 + $0xc] sm:$0x1]
        %v2653 = vld [vmem:[%s208 + $0x1c] sm:$0x1]
        %v2654 = vld [vmem:[%s208 + $0x2c] sm:$0x1]
        %v2655 = vld [vmem:[%s208 + $0x3c] sm:$0x1]
        %v2660 = vrot.slane %v2653, 7
        %v2661 = vsel %vm265, %v2660, %v2652
        %v2662 = vrot.slane %v2654, 6
        %v2663 = vsel %vm268, %v2662, %v2661
        %v2664 = vrot.slane %v2655, 5
        %v2665 = vsel %vm271, %v2664, %v2663
        %v2666 = vsel %vm277, %v2665, 0
        %2668 = vmatpush.msra.mxu0 0.0
        %2669 = vmatpush.msra.mxu0 0.0
        %2670 = vmatpush.msra.mxu0 0.0
        %2671 = vmatpush.msra.mxu0 0.0
        %2672 = vmatpush.msra.mxu0 0.0
        %2673 = vmatpush.msra.mxu0 0.0
        %2674 = vmatpush.msra.mxu0 0.0
        %2675 = vmatpush.msra.mxu0 0.0
        %2676 = vmatpush.msra.mxu0 0.0
        %2677 = vmatpush.msra.mxu0 0.0
        %2678 = vmatpush.msra.mxu0 0.0
        %2679 = vmatpush.msra.mxu0 0.0
        %2680 = vmatpush.msra.mxu0 0.0
        %2681 = vmatpush.msra.mxu0 0.0
        %2682 = vmatpush.msra.mxu0 0.0
        %2683 = vmatpush.msra.mxu0 %v2666
        %2684 = vmatmul.f32.gmra.mxu0 %v275
        %v2685 = vpop.f32.mrf.mxu0
        %v2686 = vadd.f32 0.0, %v2685
        %2687 = vdwg.mxu0
        %2688 = vmatpush.msra.mxu0 0.0
        %2689 = vmatpush.msra.mxu0 0.0
        %2690 = vmatpush.msra.mxu0 0.0
        %2691 = vmatpush.msra.mxu0 0.0
        %2692 = vmatpush.msra.mxu0 0.0
        %2693 = vmatpush.msra.mxu0 0.0
        %2694 = vmatpush.msra.mxu0 0.0
        %2695 = vmatpush.msra.mxu0 0.0
        %2696 = vmatpush.msra.mxu0 0.0
        %2697 = vmatpush.msra.mxu0 0.0
        %2698 = vmatpush.msra.mxu0 0.0
        %2699 = vmatpush.msra.mxu0 0.0
        %2700 = vmatpush.msra.mxu0 0.0
        %2701 = vmatpush.msra.mxu0 0.0
        %2702 = vmatpush.msra.mxu0 0.0
        %2703 = vmatpush.msra.mxu0 %v2666
        %2704 = vmatmul.f32.gmra.mxu0 %v301
        %v2705 = vpop.f32.mrf.mxu0
        %v2706 = vadd.f32 0.0, %v2705
        %2707 = vdwg.mxu0
        %2708 = vmatpush.msra.mxu0 0.0
        %2709 = vmatpush.msra.mxu0 0.0
        %2710 = vmatpush.msra.mxu0 0.0
        %2711 = vmatpush.msra.mxu0 0.0
        %2712 = vmatpush.msra.mxu0 0.0
        %2713 = vmatpush.msra.mxu0 0.0
        %2714 = vmatpush.msra.mxu0 0.0
        %2715 = vmatpush.msra.mxu0 0.0
        %2716 = vmatpush.msra.mxu0 0.0
        %2717 = vmatpush.msra.mxu0 0.0
        %2718 = vmatpush.msra.mxu0 0.0
        %2719 = vmatpush.msra.mxu0 0.0
        %2720 = vmatpush.msra.mxu0 0.0
        %2721 = vmatpush.msra.mxu0 0.0
        %2722 = vmatpush.msra.mxu0 0.0
        %2723 = vmatpush.msra.mxu0 %v2666
        %2724 = vmatmul.f32.gmra.mxu0 %v324
        %v2725 = vpop.f32.mrf.mxu0
        %v2726 = vadd.f32 0.0, %v2725
        %2727 = vdwg.mxu0
        %2728 = vmatpush.msra.mxu0 0.0
        %2729 = vmatpush.msra.mxu0 0.0
        %2730 = vmatpush.msra.mxu0 0.0
        %2731 = vmatpush.msra.mxu0 0.0
        %2732 = vmatpush.msra.mxu0 0.0
        %2733 = vmatpush.msra.mxu0 0.0
        %2734 = vmatpush.msra.mxu0 0.0
        %2735 = vmatpush.msra.mxu0 0.0
        %2736 = vmatpush.msra.mxu0 0.0
        %2737 = vmatpush.msra.mxu0 0.0
        %2738 = vmatpush.msra.mxu0 0.0
        %2739 = vmatpush.msra.mxu0 0.0
        %2740 = vmatpush.msra.mxu0 0.0
        %2741 = vmatpush.msra.mxu0 0.0
        %2742 = vmatpush.msra.mxu0 0.0
        %2743 = vmatpush.msra.mxu0 %v2666
        %2744 = vmatmul.f32.gmra.mxu0 %v347
        %v2745 = vpop.f32.mrf.mxu0
        %v2746 = vadd.f32 0.0, %v2745
        %2747 = vdwg.mxu0
        %v2749 = vsel %vm369, %v2706, 0
        %2751 = vmatpush.msra.mxu0 0.0
        %2752 = vmatpush.msra.mxu0 0.0
        %2753 = vmatpush.msra.mxu0 0.0
        %2754 = vmatpush.msra.mxu0 0.0
        %2755 = vmatpush.msra.mxu0 0.0
        %2756 = vmatpush.msra.mxu0 0.0
        %2757 = vmatpush.msra.mxu0 0.0
        %2758 = vmatpush.msra.mxu0 0.0
        %2759 = vmatpush.msra.mxu0 0.0
        %2760 = vmatpush.msra.mxu0 0.0
        %2761 = vmatpush.msra.mxu0 0.0
        %2762 = vmatpush.msra.mxu0 0.0
        %2763 = vmatpush.msra.mxu0 0.0
        %2764 = vmatpush.msra.mxu0 0.0
        %2765 = vmatpush.msra.mxu0 %v248
        %2766 = vmatpush.msra.mxu0 %v247
        %2767 = vmatmul.f32.gmra.mxu0 %v2749
        %v2768 = vpop.f32.mrf.mxu0
        %v2769 = vadd.f32 0.0, %v2768
        %2770 = vdwg.mxu0
        %v2772 = vsel %vm369, %v2686, 0
        %2774 = vmatpush.msra.mxu0 0.0
        %2775 = vmatpush.msra.mxu0 0.0
        %2776 = vmatpush.msra.mxu0 0.0
        %2777 = vmatpush.msra.mxu0 0.0
        %2778 = vmatpush.msra.mxu0 0.0
        %2779 = vmatpush.msra.mxu0 0.0
        %2780 = vmatpush.msra.mxu0 0.0
        %2781 = vmatpush.msra.mxu0 0.0
        %2782 = vmatpush.msra.mxu0 0.0
        %2783 = vmatpush.msra.mxu0 0.0
        %2784 = vmatpush.msra.mxu0 0.0
        %2785 = vmatpush.msra.mxu0 0.0
        %2786 = vmatpush.msra.mxu0 0.0
        %2787 = vmatpush.msra.mxu0 0.0
        %2788 = vmatpush.msra.mxu0 %v245
        %2789 = vmatpush.msra.mxu0 %v244
        %2790 = vmatmul.f32.gmra.mxu0 %v2772
        %v2791 = vpop.f32.mrf.mxu0
        %v2792 = vadd.f32 %v2769, %v2791
        %2793 = vdwg.mxu0
        %v2795 = vsel %vm369, %v2746, 0
        %2797 = vmatpush.msra.mxu0 0.0
        %2798 = vmatpush.msra.mxu0 0.0
        %2799 = vmatpush.msra.mxu0 0.0
        %2800 = vmatpush.msra.mxu0 0.0
        %2801 = vmatpush.msra.mxu0 0.0
        %2802 = vmatpush.msra.mxu0 0.0
        %2803 = vmatpush.msra.mxu0 0.0
        %2804 = vmatpush.msra.mxu0 0.0
        %2805 = vmatpush.msra.mxu0 0.0
        %2806 = vmatpush.msra.mxu0 0.0
        %2807 = vmatpush.msra.mxu0 0.0
        %2808 = vmatpush.msra.mxu0 0.0
        %2809 = vmatpush.msra.mxu0 0.0
        %2810 = vmatpush.msra.mxu0 0.0
        %2811 = vmatpush.msra.mxu0 %v248
        %2812 = vmatpush.msra.mxu0 %v247
        %2813 = vmatmul.f32.gmra.mxu0 %v2795
        %v2814 = vpop.f32.mrf.mxu0
        %v2815 = vadd.f32 0.0, %v2814
        %2816 = vdwg.mxu0
        %v2818 = vsel %vm369, %v2726, 0
        %2820 = vmatpush.msra.mxu0 0.0
        %2821 = vmatpush.msra.mxu0 0.0
        %2822 = vmatpush.msra.mxu0 0.0
        %2823 = vmatpush.msra.mxu0 0.0
        %2824 = vmatpush.msra.mxu0 0.0
        %2825 = vmatpush.msra.mxu0 0.0
        %2826 = vmatpush.msra.mxu0 0.0
        %2827 = vmatpush.msra.mxu0 0.0
        %2828 = vmatpush.msra.mxu0 0.0
        %2829 = vmatpush.msra.mxu0 0.0
        %2830 = vmatpush.msra.mxu0 0.0
        %2831 = vmatpush.msra.mxu0 0.0
        %2832 = vmatpush.msra.mxu0 0.0
        %2833 = vmatpush.msra.mxu0 0.0
        %2834 = vmatpush.msra.mxu0 %v245
        %2835 = vmatpush.msra.mxu0 %v244
        %2836 = vmatmul.f32.gmra.mxu0 %v2818
        %v2837 = vpop.f32.mrf.mxu0
        %v2838 = vadd.f32 %v2815, %v2837
        %2839 = vdwg.mxu0
        %2841 = vrot.lane.b32.xlu0 %v2838, 32
        %v2842 = vpop.permute.xlu0 %2841
        %v2844 = vsel %vm466, %v2792, %v2842
        %v2846 = vrot.slane %v2844, 1
        %2848 = vst.msk [vmem:[%s241 + $0xc] sm:$0x1] %vm471, %v2844
        %2849 = vst.msk [vmem:[%s241 + $0x1c] sm:$0x1] %vm471, %v2846
        %v2850 = vld [vmem:[%s208 + $0xd] sm:$0x1]
        %v2851 = vld [vmem:[%s208 + $0x1d] sm:$0x1]
        %v2852 = vld [vmem:[%s208 + $0x2d] sm:$0x1]
        %v2853 = vld [vmem:[%s208 + $0x3d] sm:$0x1]
        %v2858 = vrot.slane %v2851, 7
        %v2859 = vsel %vm265, %v2858, %v2850
        %v2860 = vrot.slane %v2852, 6
        %v2861 = vsel %vm268, %v2860, %v2859
        %v2862 = vrot.slane %v2853, 5
        %v2863 = vsel %vm271, %v2862, %v2861
        %v2864 = vsel %vm277, %v2863, 0
        %2866 = vmatpush.msra.mxu0 0.0
        %2867 = vmatpush.msra.mxu0 0.0
        %2868 = vmatpush.msra.mxu0 0.0
        %2869 = vmatpush.msra.mxu0 0.0
        %2870 = vmatpush.msra.mxu0 0.0
        %2871 = vmatpush.msra.mxu0 0.0
        %2872 = vmatpush.msra.mxu0 0.0
        %2873 = vmatpush.msra.mxu0 0.0
        %2874 = vmatpush.msra.mxu0 0.0
        %2875 = vmatpush.msra.mxu0 0.0
        %2876 = vmatpush.msra.mxu0 0.0
        %2877 = vmatpush.msra.mxu0 0.0
        %2878 = vmatpush.msra.mxu0 0.0
        %2879 = vmatpush.msra.mxu0 0.0
        %2880 = vmatpush.msra.mxu0 0.0
        %2881 = vmatpush.msra.mxu0 %v2864
        %2882 = vmatmul.f32.gmra.mxu0 %v275
        %v2883 = vpop.f32.mrf.mxu0
        %v2884 = vadd.f32 0.0, %v2883
        %2885 = vdwg.mxu0
        %2886 = vmatpush.msra.mxu0 0.0
        %2887 = vmatpush.msra.mxu0 0.0
        %2888 = vmatpush.msra.mxu0 0.0
        %2889 = vmatpush.msra.mxu0 0.0
        %2890 = vmatpush.msra.mxu0 0.0
        %2891 = vmatpush.msra.mxu0 0.0
        %2892 = vmatpush.msra.mxu0 0.0
        %2893 = vmatpush.msra.mxu0 0.0
        %2894 = vmatpush.msra.mxu0 0.0
        %2895 = vmatpush.msra.mxu0 0.0
        %2896 = vmatpush.msra.mxu0 0.0
        %2897 = vmatpush.msra.mxu0 0.0
        %2898 = vmatpush.msra.mxu0 0.0
        %2899 = vmatpush.msra.mxu0 0.0
        %2900 = vmatpush.msra.mxu0 0.0
        %2901 = vmatpush.msra.mxu0 %v2864
        %2902 = vmatmul.f32.gmra.mxu0 %v301
        %v2903 = vpop.f32.mrf.mxu0
        %v2904 = vadd.f32 0.0, %v2903
        %2905 = vdwg.mxu0
        %2906 = vmatpush.msra.mxu0 0.0
        %2907 = vmatpush.msra.mxu0 0.0
        %2908 = vmatpush.msra.mxu0 0.0
        %2909 = vmatpush.msra.mxu0 0.0
        %2910 = vmatpush.msra.mxu0 0.0
        %2911 = vmatpush.msra.mxu0 0.0
        %2912 = vmatpush.msra.mxu0 0.0
        %2913 = vmatpush.msra.mxu0 0.0
        %2914 = vmatpush.msra.mxu0 0.0
        %2915 = vmatpush.msra.mxu0 0.0
        %2916 = vmatpush.msra.mxu0 0.0
        %2917 = vmatpush.msra.mxu0 0.0
        %2918 = vmatpush.msra.mxu0 0.0
        %2919 = vmatpush.msra.mxu0 0.0
        %2920 = vmatpush.msra.mxu0 0.0
        %2921 = vmatpush.msra.mxu0 %v2864
        %2922 = vmatmul.f32.gmra.mxu0 %v324
        %v2923 = vpop.f32.mrf.mxu0
        %v2924 = vadd.f32 0.0, %v2923
        %2925 = vdwg.mxu0
        %2926 = vmatpush.msra.mxu0 0.0
        %2927 = vmatpush.msra.mxu0 0.0
        %2928 = vmatpush.msra.mxu0 0.0
        %2929 = vmatpush.msra.mxu0 0.0
        %2930 = vmatpush.msra.mxu0 0.0
        %2931 = vmatpush.msra.mxu0 0.0
        %2932 = vmatpush.msra.mxu0 0.0
        %2933 = vmatpush.msra.mxu0 0.0
        %2934 = vmatpush.msra.mxu0 0.0
        %2935 = vmatpush.msra.mxu0 0.0
        %2936 = vmatpush.msra.mxu0 0.0
        %2937 = vmatpush.msra.mxu0 0.0
        %2938 = vmatpush.msra.mxu0 0.0
        %2939 = vmatpush.msra.mxu0 0.0
        %2940 = vmatpush.msra.mxu0 0.0
        %2941 = vmatpush.msra.mxu0 %v2864
        %2942 = vmatmul.f32.gmra.mxu0 %v347
        %v2943 = vpop.f32.mrf.mxu0
        %v2944 = vadd.f32 0.0, %v2943
        %2945 = vdwg.mxu0
        %v2947 = vsel %vm369, %v2904, 0
        %2949 = vmatpush.msra.mxu0 0.0
        %2950 = vmatpush.msra.mxu0 0.0
        %2951 = vmatpush.msra.mxu0 0.0
        %2952 = vmatpush.msra.mxu0 0.0
        %2953 = vmatpush.msra.mxu0 0.0
        %2954 = vmatpush.msra.mxu0 0.0
        %2955 = vmatpush.msra.mxu0 0.0
        %2956 = vmatpush.msra.mxu0 0.0
        %2957 = vmatpush.msra.mxu0 0.0
        %2958 = vmatpush.msra.mxu0 0.0
        %2959 = vmatpush.msra.mxu0 0.0
        %2960 = vmatpush.msra.mxu0 0.0
        %2961 = vmatpush.msra.mxu0 0.0
        %2962 = vmatpush.msra.mxu0 0.0
        %2963 = vmatpush.msra.mxu0 %v248
        %2964 = vmatpush.msra.mxu0 %v247
        %2965 = vmatmul.f32.gmra.mxu0 %v2947
        %v2966 = vpop.f32.mrf.mxu0
        %v2967 = vadd.f32 0.0, %v2966
        %2968 = vdwg.mxu0
        %v2970 = vsel %vm369, %v2884, 0
        %2972 = vmatpush.msra.mxu0 0.0
        %2973 = vmatpush.msra.mxu0 0.0
        %2974 = vmatpush.msra.mxu0 0.0
        %2975 = vmatpush.msra.mxu0 0.0
        %2976 = vmatpush.msra.mxu0 0.0
        %2977 = vmatpush.msra.mxu0 0.0
        %2978 = vmatpush.msra.mxu0 0.0
        %2979 = vmatpush.msra.mxu0 0.0
        %2980 = vmatpush.msra.mxu0 0.0
        %2981 = vmatpush.msra.mxu0 0.0
        %2982 = vmatpush.msra.mxu0 0.0
        %2983 = vmatpush.msra.mxu0 0.0
        %2984 = vmatpush.msra.mxu0 0.0
        %2985 = vmatpush.msra.mxu0 0.0
        %2986 = vmatpush.msra.mxu0 %v245
        %2987 = vmatpush.msra.mxu0 %v244
        %2988 = vmatmul.f32.gmra.mxu0 %v2970
        %v2989 = vpop.f32.mrf.mxu0
        %v2990 = vadd.f32 %v2967, %v2989
        %2991 = vdwg.mxu0
        %v2993 = vsel %vm369, %v2944, 0
        %2995 = vmatpush.msra.mxu0 0.0
        %2996 = vmatpush.msra.mxu0 0.0
        %2997 = vmatpush.msra.mxu0 0.0
        %2998 = vmatpush.msra.mxu0 0.0
        %2999 = vmatpush.msra.mxu0 0.0
        %3000 = vmatpush.msra.mxu0 0.0
        %3001 = vmatpush.msra.mxu0 0.0
        %3002 = vmatpush.msra.mxu0 0.0
        %3003 = vmatpush.msra.mxu0 0.0
        %3004 = vmatpush.msra.mxu0 0.0
        %3005 = vmatpush.msra.mxu0 0.0
        %3006 = vmatpush.msra.mxu0 0.0
        %3007 = vmatpush.msra.mxu0 0.0
        %3008 = vmatpush.msra.mxu0 0.0
        %3009 = vmatpush.msra.mxu0 %v248
        %3010 = vmatpush.msra.mxu0 %v247
        %3011 = vmatmul.f32.gmra.mxu0 %v2993
        %v3012 = vpop.f32.mrf.mxu0
        %v3013 = vadd.f32 0.0, %v3012
        %3014 = vdwg.mxu0
        %v3016 = vsel %vm369, %v2924, 0
        %3018 = vmatpush.msra.mxu0 0.0
        %3019 = vmatpush.msra.mxu0 0.0
        %3020 = vmatpush.msra.mxu0 0.0
        %3021 = vmatpush.msra.mxu0 0.0
        %3022 = vmatpush.msra.mxu0 0.0
        %3023 = vmatpush.msra.mxu0 0.0
        %3024 = vmatpush.msra.mxu0 0.0
        %3025 = vmatpush.msra.mxu0 0.0
        %3026 = vmatpush.msra.mxu0 0.0
        %3027 = vmatpush.msra.mxu0 0.0
        %3028 = vmatpush.msra.mxu0 0.0
        %3029 = vmatpush.msra.mxu0 0.0
        %3030 = vmatpush.msra.mxu0 0.0
        %3031 = vmatpush.msra.mxu0 0.0
        %3032 = vmatpush.msra.mxu0 %v245
        %3033 = vmatpush.msra.mxu0 %v244
        %3034 = vmatmul.f32.gmra.mxu0 %v3016
        %v3035 = vpop.f32.mrf.mxu0
        %v3036 = vadd.f32 %v3013, %v3035
        %3037 = vdwg.mxu0
        %3039 = vrot.lane.b32.xlu0 %v3036, 32
        %v3040 = vpop.permute.xlu0 %3039
        %v3042 = vsel %vm466, %v2990, %v3040
        %v3044 = vrot.slane %v3042, 1
        %3046 = vst.msk [vmem:[%s241 + $0xd] sm:$0x1] %vm471, %v3042
        %3047 = vst.msk [vmem:[%s241 + $0x1d] sm:$0x1] %vm471, %v3044
        %v3048 = vld [vmem:[%s208 + $0xe] sm:$0x1]
        %v3049 = vld [vmem:[%s208 + $0x1e] sm:$0x1]
        %v3050 = vld [vmem:[%s208 + $0x2e] sm:$0x1]
        %v3051 = vld [vmem:[%s208 + $0x3e] sm:$0x1]
        %v3056 = vrot.slane %v3049, 7
        %v3057 = vsel %vm265, %v3056, %v3048
        %v3058 = vrot.slane %v3050, 6
        %v3059 = vsel %vm268, %v3058, %v3057
        %v3060 = vrot.slane %v3051, 5
        %v3061 = vsel %vm271, %v3060, %v3059
        %v3062 = vsel %vm277, %v3061, 0
        %3064 = vmatpush.msra.mxu0 0.0
        %3065 = vmatpush.msra.mxu0 0.0
        %3066 = vmatpush.msra.mxu0 0.0
        %3067 = vmatpush.msra.mxu0 0.0
        %3068 = vmatpush.msra.mxu0 0.0
        %3069 = vmatpush.msra.mxu0 0.0
        %3070 = vmatpush.msra.mxu0 0.0
        %3071 = vmatpush.msra.mxu0 0.0
        %3072 = vmatpush.msra.mxu0 0.0
        %3073 = vmatpush.msra.mxu0 0.0
        %3074 = vmatpush.msra.mxu0 0.0
        %3075 = vmatpush.msra.mxu0 0.0
        %3076 = vmatpush.msra.mxu0 0.0
        %3077 = vmatpush.msra.mxu0 0.0
        %3078 = vmatpush.msra.mxu0 0.0
        %3079 = vmatpush.msra.mxu0 %v3062
        %3080 = vmatmul.f32.gmra.mxu0 %v275
        %v3081 = vpop.f32.mrf.mxu0
        %v3082 = vadd.f32 0.0, %v3081
        %3083 = vdwg.mxu0
        %3084 = vmatpush.msra.mxu0 0.0
        %3085 = vmatpush.msra.mxu0 0.0
        %3086 = vmatpush.msra.mxu0 0.0
        %3087 = vmatpush.msra.mxu0 0.0
        %3088 = vmatpush.msra.mxu0 0.0
        %3089 = vmatpush.msra.mxu0 0.0
        %3090 = vmatpush.msra.mxu0 0.0
        %3091 = vmatpush.msra.mxu0 0.0
        %3092 = vmatpush.msra.mxu0 0.0
        %3093 = vmatpush.msra.mxu0 0.0
        %3094 = vmatpush.msra.mxu0 0.0
        %3095 = vmatpush.msra.mxu0 0.0
        %3096 = vmatpush.msra.mxu0 0.0
        %3097 = vmatpush.msra.mxu0 0.0
        %3098 = vmatpush.msra.mxu0 0.0
        %3099 = vmatpush.msra.mxu0 %v3062
        %3100 = vmatmul.f32.gmra.mxu0 %v301
        %v3101 = vpop.f32.mrf.mxu0
        %v3102 = vadd.f32 0.0, %v3101
        %3103 = vdwg.mxu0
        %3104 = vmatpush.msra.mxu0 0.0
        %3105 = vmatpush.msra.mxu0 0.0
        %3106 = vmatpush.msra.mxu0 0.0
        %3107 = vmatpush.msra.mxu0 0.0
        %3108 = vmatpush.msra.mxu0 0.0
        %3109 = vmatpush.msra.mxu0 0.0
        %3110 = vmatpush.msra.mxu0 0.0
        %3111 = vmatpush.msra.mxu0 0.0
        %3112 = vmatpush.msra.mxu0 0.0
        %3113 = vmatpush.msra.mxu0 0.0
        %3114 = vmatpush.msra.mxu0 0.0
        %3115 = vmatpush.msra.mxu0 0.0
        %3116 = vmatpush.msra.mxu0 0.0
        %3117 = vmatpush.msra.mxu0 0.0
        %3118 = vmatpush.msra.mxu0 0.0
        %3119 = vmatpush.msra.mxu0 %v3062
        %3120 = vmatmul.f32.gmra.mxu0 %v324
        %v3121 = vpop.f32.mrf.mxu0
        %v3122 = vadd.f32 0.0, %v3121
        %3123 = vdwg.mxu0
        %3124 = vmatpush.msra.mxu0 0.0
        %3125 = vmatpush.msra.mxu0 0.0
        %3126 = vmatpush.msra.mxu0 0.0
        %3127 = vmatpush.msra.mxu0 0.0
        %3128 = vmatpush.msra.mxu0 0.0
        %3129 = vmatpush.msra.mxu0 0.0
        %3130 = vmatpush.msra.mxu0 0.0
        %3131 = vmatpush.msra.mxu0 0.0
        %3132 = vmatpush.msra.mxu0 0.0
        %3133 = vmatpush.msra.mxu0 0.0
        %3134 = vmatpush.msra.mxu0 0.0
        %3135 = vmatpush.msra.mxu0 0.0
        %3136 = vmatpush.msra.mxu0 0.0
        %3137 = vmatpush.msra.mxu0 0.0
        %3138 = vmatpush.msra.mxu0 0.0
        %3139 = vmatpush.msra.mxu0 %v3062
        %3140 = vmatmul.f32.gmra.mxu0 %v347
        %v3141 = vpop.f32.mrf.mxu0
        %v3142 = vadd.f32 0.0, %v3141
        %3143 = vdwg.mxu0
        %v3145 = vsel %vm369, %v3102, 0
        %3147 = vmatpush.msra.mxu0 0.0
        %3148 = vmatpush.msra.mxu0 0.0
        %3149 = vmatpush.msra.mxu0 0.0
        %3150 = vmatpush.msra.mxu0 0.0
        %3151 = vmatpush.msra.mxu0 0.0
        %3152 = vmatpush.msra.mxu0 0.0
        %3153 = vmatpush.msra.mxu0 0.0
        %3154 = vmatpush.msra.mxu0 0.0
        %3155 = vmatpush.msra.mxu0 0.0
        %3156 = vmatpush.msra.mxu0 0.0
        %3157 = vmatpush.msra.mxu0 0.0
        %3158 = vmatpush.msra.mxu0 0.0
        %3159 = vmatpush.msra.mxu0 0.0
        %3160 = vmatpush.msra.mxu0 0.0
        %3161 = vmatpush.msra.mxu0 %v248
        %3162 = vmatpush.msra.mxu0 %v247
        %3163 = vmatmul.f32.gmra.mxu0 %v3145
        %v3164 = vpop.f32.mrf.mxu0
        %v3165 = vadd.f32 0.0, %v3164
        %3166 = vdwg.mxu0
        %v3168 = vsel %vm369, %v3082, 0
        %3170 = vmatpush.msra.mxu0 0.0
        %3171 = vmatpush.msra.mxu0 0.0
        %3172 = vmatpush.msra.mxu0 0.0
        %3173 = vmatpush.msra.mxu0 0.0
        %3174 = vmatpush.msra.mxu0 0.0
        %3175 = vmatpush.msra.mxu0 0.0
        %3176 = vmatpush.msra.mxu0 0.0
        %3177 = vmatpush.msra.mxu0 0.0
        %3178 = vmatpush.msra.mxu0 0.0
        %3179 = vmatpush.msra.mxu0 0.0
        %3180 = vmatpush.msra.mxu0 0.0
        %3181 = vmatpush.msra.mxu0 0.0
        %3182 = vmatpush.msra.mxu0 0.0
        %3183 = vmatpush.msra.mxu0 0.0
        %3184 = vmatpush.msra.mxu0 %v245
        %3185 = vmatpush.msra.mxu0 %v244
        %3186 = vmatmul.f32.gmra.mxu0 %v3168
        %v3187 = vpop.f32.mrf.mxu0
        %v3188 = vadd.f32 %v3165, %v3187
        %3189 = vdwg.mxu0
        %v3191 = vsel %vm369, %v3142, 0
        %3193 = vmatpush.msra.mxu0 0.0
        %3194 = vmatpush.msra.mxu0 0.0
        %3195 = vmatpush.msra.mxu0 0.0
        %3196 = vmatpush.msra.mxu0 0.0
        %3197 = vmatpush.msra.mxu0 0.0
        %3198 = vmatpush.msra.mxu0 0.0
        %3199 = vmatpush.msra.mxu0 0.0
        %3200 = vmatpush.msra.mxu0 0.0
        %3201 = vmatpush.msra.mxu0 0.0
        %3202 = vmatpush.msra.mxu0 0.0
        %3203 = vmatpush.msra.mxu0 0.0
        %3204 = vmatpush.msra.mxu0 0.0
        %3205 = vmatpush.msra.mxu0 0.0
        %3206 = vmatpush.msra.mxu0 0.0
        %3207 = vmatpush.msra.mxu0 %v248
        %3208 = vmatpush.msra.mxu0 %v247
        %3209 = vmatmul.f32.gmra.mxu0 %v3191
        %v3210 = vpop.f32.mrf.mxu0
        %v3211 = vadd.f32 0.0, %v3210
        %3212 = vdwg.mxu0
        %v3214 = vsel %vm369, %v3122, 0
        %3216 = vmatpush.msra.mxu0 0.0
        %3217 = vmatpush.msra.mxu0 0.0
        %3218 = vmatpush.msra.mxu0 0.0
        %3219 = vmatpush.msra.mxu0 0.0
        %3220 = vmatpush.msra.mxu0 0.0
        %3221 = vmatpush.msra.mxu0 0.0
        %3222 = vmatpush.msra.mxu0 0.0
        %3223 = vmatpush.msra.mxu0 0.0
        %3224 = vmatpush.msra.mxu0 0.0
        %3225 = vmatpush.msra.mxu0 0.0
        %3226 = vmatpush.msra.mxu0 0.0
        %3227 = vmatpush.msra.mxu0 0.0
        %3228 = vmatpush.msra.mxu0 0.0
        %3229 = vmatpush.msra.mxu0 0.0
        %3230 = vmatpush.msra.mxu0 %v245
        %3231 = vmatpush.msra.mxu0 %v244
        %3232 = vmatmul.f32.gmra.mxu0 %v3214
        %v3233 = vpop.f32.mrf.mxu0
        %v3234 = vadd.f32 %v3211, %v3233
        %3235 = vdwg.mxu0
        %3237 = vrot.lane.b32.xlu0 %v3234, 32
        %v3238 = vpop.permute.xlu0 %3237
        %v3240 = vsel %vm466, %v3188, %v3238
        %v3242 = vrot.slane %v3240, 1
        %3244 = vst.msk [vmem:[%s241 + $0xe] sm:$0x1] %vm471, %v3240
        %3245 = vst.msk [vmem:[%s241 + $0x1e] sm:$0x1] %vm471, %v3242
        %v3246 = vld [vmem:[%s208 + $0xf] sm:$0x1]
        %v3247 = vld [vmem:[%s208 + $0x1f] sm:$0x1]
        %v3248 = vld [vmem:[%s208 + $0x2f] sm:$0x1]
        %v3249 = vld [vmem:[%s208 + $0x3f] sm:$0x1]
        %v3254 = vrot.slane %v3247, 7
        %v3255 = vsel %vm265, %v3254, %v3246
        %v3256 = vrot.slane %v3248, 6
        %v3257 = vsel %vm268, %v3256, %v3255
        %v3258 = vrot.slane %v3249, 5
        %v3259 = vsel %vm271, %v3258, %v3257
        %v3260 = vsel %vm277, %v3259, 0
        %3262 = vmatpush.msra.mxu0 0.0
        %3263 = vmatpush.msra.mxu0 0.0
        %3264 = vmatpush.msra.mxu0 0.0
        %3265 = vmatpush.msra.mxu0 0.0
        %3266 = vmatpush.msra.mxu0 0.0
        %3267 = vmatpush.msra.mxu0 0.0
        %3268 = vmatpush.msra.mxu0 0.0
        %3269 = vmatpush.msra.mxu0 0.0
        %3270 = vmatpush.msra.mxu0 0.0
        %3271 = vmatpush.msra.mxu0 0.0
        %3272 = vmatpush.msra.mxu0 0.0
        %3273 = vmatpush.msra.mxu0 0.0
        %3274 = vmatpush.msra.mxu0 0.0
        %3275 = vmatpush.msra.mxu0 0.0
        %3276 = vmatpush.msra.mxu0 0.0
        %3277 = vmatpush.msra.mxu0 %v3260
        %3278 = vmatmul.f32.gmra.mxu0 %v275
        %v3279 = vpop.f32.mrf.mxu0
        %v3280 = vadd.f32 0.0, %v3279
        %3281 = vdwg.mxu0
        %3282 = vmatpush.msra.mxu0 0.0
        %3283 = vmatpush.msra.mxu0 0.0
        %3284 = vmatpush.msra.mxu0 0.0
        %3285 = vmatpush.msra.mxu0 0.0
        %3286 = vmatpush.msra.mxu0 0.0
        %3287 = vmatpush.msra.mxu0 0.0
        %3288 = vmatpush.msra.mxu0 0.0
        %3289 = vmatpush.msra.mxu0 0.0
        %3290 = vmatpush.msra.mxu0 0.0
        %3291 = vmatpush.msra.mxu0 0.0
        %3292 = vmatpush.msra.mxu0 0.0
        %3293 = vmatpush.msra.mxu0 0.0
        %3294 = vmatpush.msra.mxu0 0.0
        %3295 = vmatpush.msra.mxu0 0.0
        %3296 = vmatpush.msra.mxu0 0.0
        %3297 = vmatpush.msra.mxu0 %v3260
        %3298 = vmatmul.f32.gmra.mxu0 %v301
        %v3299 = vpop.f32.mrf.mxu0
        %v3300 = vadd.f32 0.0, %v3299
        %3301 = vdwg.mxu0
        %3302 = vmatpush.msra.mxu0 0.0
        %3303 = vmatpush.msra.mxu0 0.0
        %3304 = vmatpush.msra.mxu0 0.0
        %3305 = vmatpush.msra.mxu0 0.0
        %3306 = vmatpush.msra.mxu0 0.0
        %3307 = vmatpush.msra.mxu0 0.0
        %3308 = vmatpush.msra.mxu0 0.0
        %3309 = vmatpush.msra.mxu0 0.0
        %3310 = vmatpush.msra.mxu0 0.0
        %3311 = vmatpush.msra.mxu0 0.0
        %3312 = vmatpush.msra.mxu0 0.0
        %3313 = vmatpush.msra.mxu0 0.0
        %3314 = vmatpush.msra.mxu0 0.0
        %3315 = vmatpush.msra.mxu0 0.0
        %3316 = vmatpush.msra.mxu0 0.0
        %3317 = vmatpush.msra.mxu0 %v3260
        %3318 = vmatmul.f32.gmra.mxu0 %v324
        %v3319 = vpop.f32.mrf.mxu0
        %v3320 = vadd.f32 0.0, %v3319
        %3321 = vdwg.mxu0
        %3322 = vmatpush.msra.mxu0 0.0
        %3323 = vmatpush.msra.mxu0 0.0
        %3324 = vmatpush.msra.mxu0 0.0
        %3325 = vmatpush.msra.mxu0 0.0
        %3326 = vmatpush.msra.mxu0 0.0
        %3327 = vmatpush.msra.mxu0 0.0
        %3328 = vmatpush.msra.mxu0 0.0
        %3329 = vmatpush.msra.mxu0 0.0
        %3330 = vmatpush.msra.mxu0 0.0
        %3331 = vmatpush.msra.mxu0 0.0
        %3332 = vmatpush.msra.mxu0 0.0
        %3333 = vmatpush.msra.mxu0 0.0
        %3334 = vmatpush.msra.mxu0 0.0
        %3335 = vmatpush.msra.mxu0 0.0
        %3336 = vmatpush.msra.mxu0 0.0
        %3337 = vmatpush.msra.mxu0 %v3260
        %3338 = vmatmul.f32.gmra.mxu0 %v347
        %v3339 = vpop.f32.mrf.mxu0
        %v3340 = vadd.f32 0.0, %v3339
        %3341 = vdwg.mxu0
        %v3343 = vsel %vm369, %v3300, 0
        %3345 = vmatpush.msra.mxu0 0.0
        %3346 = vmatpush.msra.mxu0 0.0
        %3347 = vmatpush.msra.mxu0 0.0
        %3348 = vmatpush.msra.mxu0 0.0
        %3349 = vmatpush.msra.mxu0 0.0
        %3350 = vmatpush.msra.mxu0 0.0
        %3351 = vmatpush.msra.mxu0 0.0
        %3352 = vmatpush.msra.mxu0 0.0
        %3353 = vmatpush.msra.mxu0 0.0
        %3354 = vmatpush.msra.mxu0 0.0
        %3355 = vmatpush.msra.mxu0 0.0
        %3356 = vmatpush.msra.mxu0 0.0
        %3357 = vmatpush.msra.mxu0 0.0
        %3358 = vmatpush.msra.mxu0 0.0
        %3359 = vmatpush.msra.mxu0 %v248
        %3360 = vmatpush.msra.mxu0 %v247
        %3361 = vmatmul.f32.gmra.mxu0 %v3343
        %v3362 = vpop.f32.mrf.mxu0
        %v3363 = vadd.f32 0.0, %v3362
        %3364 = vdwg.mxu0
        %v3366 = vsel %vm369, %v3280, 0
        %3368 = vmatpush.msra.mxu0 0.0
        %3369 = vmatpush.msra.mxu0 0.0
        %3370 = vmatpush.msra.mxu0 0.0
        %3371 = vmatpush.msra.mxu0 0.0
        %3372 = vmatpush.msra.mxu0 0.0
        %3373 = vmatpush.msra.mxu0 0.0
        %3374 = vmatpush.msra.mxu0 0.0
        %3375 = vmatpush.msra.mxu0 0.0
        %3376 = vmatpush.msra.mxu0 0.0
        %3377 = vmatpush.msra.mxu0 0.0
        %3378 = vmatpush.msra.mxu0 0.0
        %3379 = vmatpush.msra.mxu0 0.0
        %3380 = vmatpush.msra.mxu0 0.0
        %3381 = vmatpush.msra.mxu0 0.0
        %3382 = vmatpush.msra.mxu0 %v245
        %3383 = vmatpush.msra.mxu0 %v244
        %3384 = vmatmul.f32.gmra.mxu0 %v3366
        %v3385 = vpop.f32.mrf.mxu0
        %v3386 = vadd.f32 %v3363, %v3385
        %3387 = vdwg.mxu0
        %v3389 = vsel %vm369, %v3340, 0
        %3391 = vmatpush.msra.mxu0 0.0
        %3392 = vmatpush.msra.mxu0 0.0
        %3393 = vmatpush.msra.mxu0 0.0
        %3394 = vmatpush.msra.mxu0 0.0
        %3395 = vmatpush.msra.mxu0 0.0
        %3396 = vmatpush.msra.mxu0 0.0
        %3397 = vmatpush.msra.mxu0 0.0
        %3398 = vmatpush.msra.mxu0 0.0
        %3399 = vmatpush.msra.mxu0 0.0
        %3400 = vmatpush.msra.mxu0 0.0
        %3401 = vmatpush.msra.mxu0 0.0
        %3402 = vmatpush.msra.mxu0 0.0
        %3403 = vmatpush.msra.mxu0 0.0
        %3404 = vmatpush.msra.mxu0 0.0
        %3405 = vmatpush.msra.mxu0 %v248
        %3406 = vmatpush.msra.mxu0 %v247
        %3407 = vmatmul.f32.gmra.mxu0 %v3389
        %v3408 = vpop.f32.mrf.mxu0
        %v3409 = vadd.f32 0.0, %v3408
        %3410 = vdwg.mxu0
        %v3412 = vsel %vm369, %v3320, 0
        %3414 = vmatpush.msra.mxu0 0.0
        %3415 = vmatpush.msra.mxu0 0.0
        %3416 = vmatpush.msra.mxu0 0.0
        %3417 = vmatpush.msra.mxu0 0.0
        %3418 = vmatpush.msra.mxu0 0.0
        %3419 = vmatpush.msra.mxu0 0.0
        %3420 = vmatpush.msra.mxu0 0.0
        %3421 = vmatpush.msra.mxu0 0.0
        %3422 = vmatpush.msra.mxu0 0.0
        %3423 = vmatpush.msra.mxu0 0.0
        %3424 = vmatpush.msra.mxu0 0.0
        %3425 = vmatpush.msra.mxu0 0.0
        %3426 = vmatpush.msra.mxu0 0.0
        %3427 = vmatpush.msra.mxu0 0.0
        %3428 = vmatpush.msra.mxu0 %v245
        %3429 = vmatpush.msra.mxu0 %v244
        %3430 = vmatmul.f32.gmra.mxu0 %v3412
        %v3431 = vpop.f32.mrf.mxu0
        %v3432 = vadd.f32 %v3409, %v3431
        %3433 = vdwg.mxu0
        %3435 = vrot.lane.b32.xlu0 %v3432, 32
        %v3436 = vpop.permute.xlu0 %3435
        %v3438 = vsel %vm466, %v3386, %v3436
        %v3440 = vrot.slane %v3438, 1
        %3442 = vst.msk [vmem:[%s241 + $0xf] sm:$0x1] %vm471, %v3438
        %3443 = vst.msk [vmem:[%s241 + $0x1f] sm:$0x1] %vm471, %v3440
        %s3444 = sand.u32 %s113, 1
        %s3445 = scalar_lea.sflag [#allocation4], %s3444
        %s3446 = sand.u32 %s113, 1
        %s3447 = smul.addr %s3446, 32
        %s3448 = scalar_lea.vmem [#allocation8], %s3447
        // Predicated region
        $region45: #{tpu_custom_call.1} parent=31 // pred_check
          %p3449 = pneg %p123
        $region46: #{tpu_custom_call.1} parent=31 // pred_check_branch
          %3451 = sbr.rel (%p3449) target = $region48
        $region47: #{tpu_custom_call.1} parent=31 // pred_region
          %s3452 = smul.u32 2, %s26
          %3454 = vsyncadd %s3445, 0
          %s3455 = smul.addr %s25, 4
          %s3456 = sadd.s32 %s3452, %s3455
          %s3457 = smul.addr %s3456, 8
          %s3458 = scalar_lea.hbm %s3, %s3457
          %s3459 = sshll.u32 %s3448, 4
          %s3460 = int_to_ptr.vmem [resolvable:$true] %s3459
          %s3461 = sshll.u32 %s3458, 4
          %s3462 = int_to_ptr.hbm [resolvable:$true] %s3461
          %3467 = dma.vmem_to_hbm [thread:$0]  %s3460, 512, %s3462, %s3445, 128, 128, 8
        $region48: #{tpu_custom_call.1} parent=31 // pred_fallthru
          _
      $region32: #{tpu_custom_call.1} parent=5 // pred_fallthru
        _
      %p3468 = scmp.le.s32.totalorder 2, %s16
      // Predicated region
      $region49: #{tpu_custom_call.1} parent=5 // pred_check
        %p3469 = pneg %p3468
      $region50: #{tpu_custom_call.1} parent=5 // pred_check_branch
        %3471 = sbr.rel (%p3469) target = $region52
      $region51: #{tpu_custom_call.1} parent=5 // pred_region
        %s3472 = ssub.s32 %s16, 2
        // Predicated region
        $region53: #{tpu_custom_call.1} parent=51 // pred_check
          %p3473 = pneg %p129
        $region54: #{tpu_custom_call.1} parent=51 // pred_check_branch
          %3475 = sbr.rel (%p3473) target = $region56
        $region55: #{tpu_custom_call.1} parent=51 // pred_region
          %s3476 = sand.u32 %s114, 1
          %s3477 = scalar_lea.sflag [#allocation4], %s3476
          %s3478 = sand.u32 %s114, 1
          %s3479 = smul.addr %s3478, 32
          %s3480 = scalar_lea.vmem [#allocation8], %s3479
          %3482 = dma.done %s3477, 512
        $region56: #{tpu_custom_call.1} parent=51 // pred_fallthru
          _
      $region52: #{tpu_custom_call.1} parent=5 // pred_fallthru
        _
    $region6: #{tpu_custom_call.1} parent=1 // loop_footer
      %s20 = sadd.s32 1, %s16
    $region7: #{tpu_custom_call.1} parent=1 // loop_footer_branch
      %15 = sbr.rel target = $region3
    $region8: #{tpu_custom_call.1} parent=1 // loop_exit
      _
    %3483 = vsyncpa [#allocation3], 1
    %s3484 = scalar_lea.sflag [#allocation3], 1
    %3485 = vsyncpa %s3484, 1
    %3486 = vsyncpa [#allocation6], 1
    %3487 = vsyncpa [#allocation4], 1
    %s3488 = scalar_lea.sflag [#allocation4], 1
    %3489 = vsyncpa %s3488, 1

</llo_original>
